<compile_context>
chip_gen: v5e
topology: v5e:2x2
jax: 0.10.0
libtpu: 0.0.40
codegen_flags: <defaults>
</compile_context>

<pallas_src>
import jax
import jax.numpy as jnp
from jax.experimental import pallas as pl
from jax.experimental.pallas import tpu as pltpu


def _gelu_tanh(x):
    # PyTorch nn.GELU(approximate='tanh'):
    # 0.5 * x * (1 + tanh(sqrt(2/pi) * (x + 0.044715 * x^3)))
    c = 0.7978845608028654  # sqrt(2/pi)
    return 0.5 * x * (1.0 + jnp.tanh(c * (x + 0.044715 * x * x * x)))


# ----------------------------------------------------------------------------
# Kernels
# ----------------------------------------------------------------------------
def _mlp_kernel_ktiled(x_ref, wfc_ref, bfc_ref, wproj_ref, bproj_ref, o_ref,
                       acc_ref):
    # x_ref:     (tm, n_embd)  input dtype (cast to bf16 in-kernel)
    # wfc_ref:   (n_embd, th)  bf16     bfc_ref:   (1, th)      f32
    # wproj_ref: (th, n_embd)  bf16     bproj_ref: (1, n_embd)  f32
    # o_ref:     (tm, n_embd)  out dtype
    # acc_ref:   (tm, n_embd)  f32 scratch accumulator
    k = pl.program_id(1)

    xb = x_ref[...].astype(jnp.bfloat16)
    h = jnp.dot(xb, wfc_ref[...], preferred_element_type=jnp.float32)
    h = h + bfc_ref[...]          # fc bias in f32
    h = _gelu_tanh(h)             # f32 elementwise; tanh uses the EUP slot

    partial = jnp.dot(h.astype(wproj_ref.dtype), wproj_ref[...],
                      preferred_element_type=jnp.float32)

    # First reduction step writes the accumulator directly (no zero-init pass).
    @pl.when(k == 0)
    def _init():
        acc_ref[...] = partial

    @pl.when(k > 0)
    def _accum():
        acc_ref[...] += partial

    @pl.when(k == pl.num_programs(1) - 1)
    def _finalize():
        o_ref[...] = (acc_ref[...] + bproj_ref[...]).astype(o_ref.dtype)


def _make_resident_kernel(hidden, th):
    """Kernel with VMEM-resident weights; hidden is chunked internally."""
    nk = hidden // th

    def kernel(x_ref, wfc_ref, bfc_ref, wproj_ref, bproj_ref, o_ref, acc_ref):
        xb = x_ref[...].astype(jnp.bfloat16)
        for c in range(nk):                      # static unrolled chunk loop
            lo = c * th
            h = jnp.dot(xb, wfc_ref[:, lo:lo + th],
                        preferred_element_type=jnp.float32)
            h = h + bfc_ref[:, lo:lo + th]
            h = _gelu_tanh(h)
            partial = jnp.dot(h.astype(jnp.bfloat16), wproj_ref[lo:lo + th, :],
                              preferred_element_type=jnp.float32)
            if c == 0:
                acc_ref[...] = partial
            else:
                acc_ref[...] += partial
        o_ref[...] = (acc_ref[...] + bproj_ref[...]).astype(o_ref.dtype)

    return kernel


# ----------------------------------------------------------------------------
# pallas_call builders
# ----------------------------------------------------------------------------
def _call_resident(x2, wfc_b, b_fc2, wproj_b, b_proj2, out_dtype,
                   tm, th, num_m, vmem_limit_bytes, single_buffer_weights):
    M, n_embd = x2.shape
    hidden = wfc_b.shape[1]

    if single_buffer_weights:
        # Constant block + single buffer -> weights DMA'd from HBM once total.
        wfc_spec = pl.BlockSpec((n_embd, hidden), lambda i: (0, 0),
                                pipeline_mode=pl.Buffered(1))
        wproj_spec = pl.BlockSpec((hidden, n_embd), lambda i: (0, 0),
                                  pipeline_mode=pl.Buffered(1))
    else:
        wfc_spec = pl.BlockSpec((n_embd, hidden), lambda i: (0, 0))
        wproj_spec = pl.BlockSpec((hidden, n_embd), lambda i: (0, 0))

    return pl.pallas_call(
        _make_resident_kernel(hidden, th),
        out_shape=jax.ShapeDtypeStruct((M, n_embd), out_dtype),
        grid_spec=pltpu.PrefetchScalarGridSpec(
            num_scalar_prefetch=0,
            grid=(num_m,),
            in_specs=[
                pl.BlockSpec((tm, n_embd), lambda i: (i, 0)),   # x tile
                wfc_spec,                                        # Wfc (resident)
                pl.BlockSpec((1, hidden), lambda i: (0, 0)),     # bfc
                wproj_spec,                                      # Wproj (resident)
                pl.BlockSpec((1, n_embd), lambda i: (0, 0)),     # bproj
            ],
            out_specs=pl.BlockSpec((tm, n_embd), lambda i: (i, 0)),
            scratch_shapes=[pltpu.VMEM((tm, n_embd), jnp.float32)],
        ),
        compiler_params=pltpu.CompilerParams(
            dimension_semantics=("parallel",),
            vmem_limit_bytes=vmem_limit_bytes,
        ),
    )(x2, wfc_b, b_fc2, wproj_b, b_proj2)


def _call_ktiled(x2, wfc_b, b_fc2, wproj_b, b_proj2, out_dtype,
                 tm, th, num_m, vmem_limit_bytes):
    M, n_embd = x2.shape
    hidden = wfc_b.shape[1]
    nk = hidden // th

    def serp(i, k):
        # Serpentine hidden-slice order: odd M tiles walk the slices in reverse
        # so the slice resident at the end of tile i is reused first in i+1.
        return jnp.where(i % 2 == 0, k, nk - 1 - k)

    return pl.pallas_call(
        _mlp_kernel_ktiled,
        out_shape=jax.ShapeDtypeStruct((M, n_embd), out_dtype),
        grid_spec=pltpu.PrefetchScalarGridSpec(
            num_scalar_prefetch=0,
            grid=(num_m, nk),
            in_specs=[
                pl.BlockSpec((tm, n_embd), lambda i, k: (i, 0)),        # x tile
                pl.BlockSpec((n_embd, th), lambda i, k: (0, serp(i, k))),   # Wfc slice
                pl.BlockSpec((1, th), lambda i, k: (0, serp(i, k))),        # bfc slice
                pl.BlockSpec((th, n_embd), lambda i, k: (serp(i, k), 0)),   # Wproj slice
                pl.BlockSpec((1, n_embd), lambda i, k: (0, 0)),             # bproj
            ],
            out_specs=pl.BlockSpec((tm, n_embd), lambda i, k: (i, 0)),
            scratch_shapes=[pltpu.VMEM((tm, n_embd), jnp.float32)],
        ),
        compiler_params=pltpu.CompilerParams(
            dimension_semantics=("parallel", "arbitrary"),
            vmem_limit_bytes=vmem_limit_bytes,
        ),
    )(x2, wfc_b, b_fc2, wproj_b, b_proj2)


# ----------------------------------------------------------------------------
# Wrapper
# ----------------------------------------------------------------------------
def _default_vmem_limit():
    # Generation-aware VMEM budget: 64 MiB/TC on v7x vs 128 MiB on v5e/v6e.
    try:
        phys = int(getattr(pltpu.get_tpu_info(), "vmem_capacity_bytes",
                           64 * 1024 * 1024))
    except Exception:
        phys = 64 * 1024 * 1024
    return min(int(phys * 0.85), 100 * 1024 * 1024)


def mlp_pallas(x, w_fc_t, b_fc, w_proj_t, b_proj, *, tm=512, th=512,
               mode="auto", vmem_limit_bytes=None):
    """x: (B, T, n_embd) -> (B, T, n_embd).

    w_fc_t: (n_embd, hidden), b_fc: (hidden,)
    w_proj_t: (hidden, n_embd), b_proj: (n_embd,)
    mode: "auto" | "resident" | "ktiled"
    """
    B, T, n_embd = x.shape
    hidden = w_fc_t.shape[1]
    out_dtype = x.dtype

    assert n_embd % 128 == 0, "n_embd must be a multiple of 128 (lane-dense)"
    if th > hidden or hidden % th != 0 or th % 128 != 0:
        th = hidden  # fall back to a single hidden chunk
    assert th % 128 == 0, "hidden tile must be a multiple of 128"

    if vmem_limit_bytes is None:
        vmem_limit_bytes = _default_vmem_limit()

    M = B * T
    # Row-tile selection: big tm maximizes weight reuse when streaming; clamp
    # for small M and keep >=2 M tiles when there is enough work so both v7x
    # TensorCores get a share of the "parallel" grid axis.
    tm = ((int(tm) + 7) // 8) * 8
    if tm > M:
        tm = max(8, ((M + 7) // 8) * 8)
    if M > 256 and pl.cdiv(M, tm) == 1:
        tm = ((pl.cdiv(M, 2) + 7) // 8) * 8
    num_m = pl.cdiv(M, tm)

    # No wrapper-side pad or cast over activations: Pallas masks the ragged
    # last M block and the kernel casts the x tile to bf16 in VMEM.
    x2 = x.reshape(M, n_embd)

    wfc_b = w_fc_t if w_fc_t.dtype == jnp.bfloat16 else w_fc_t.astype(jnp.bfloat16)
    wproj_b = (w_proj_t if w_proj_t.dtype == jnp.bfloat16
               else w_proj_t.astype(jnp.bfloat16))
    b_fc2 = b_fc.reshape(1, hidden).astype(jnp.float32)
    b_proj2 = b_proj.reshape(1, n_embd).astype(jnp.float32)

    # VMEM estimate for the weights-resident fast path.
    isz = x.dtype.itemsize
    osz = jnp.dtype(out_dtype).itemsize
    weight_bytes = 2 * n_embd * hidden * 2                 # both weights, bf16, 1 buffer
    per_tile_bytes = (2 * tm * n_embd * isz                # double-buffered x tile
                      + 2 * tm * n_embd * osz              # double-buffered out tile
                      + tm * n_embd * 4                    # f32 accumulator
                      + 3 * tm * th * 4)                   # chunk temporaries
    resident_fits = weight_bytes + per_tile_bytes <= int(0.9 * vmem_limit_bytes)
    use_resident = (mode == "resident") or (mode == "auto" and resident_fits)

    def _out(o):
        return o.reshape(B, T, n_embd)

    if use_resident:
        try:
            return _out(_call_resident(x2, wfc_b, b_fc2, wproj_b, b_proj2,
                                       out_dtype, tm, th, num_m,
                                       vmem_limit_bytes, True))
        except Exception:
            try:  # retry with default (double-buffered) weight blocks
                return _out(_call_resident(x2, wfc_b, b_fc2, wproj_b, b_proj2,
                                           out_dtype, tm, th, num_m,
                                           vmem_limit_bytes, False))
            except Exception:
                pass  # fall through to the streamed path

    # Streamed path: shrink th if double-buffered weight slices would crowd VMEM.
    while (th > 128 and hidden % (th // 2) == 0 and (th // 2) % 128 == 0
           and 8 * n_embd * th > vmem_limit_bytes // 2):
        th //= 2
    return _out(_call_ktiled(x2, wfc_b, b_fc2, wproj_b, b_proj2,
                             out_dtype, tm, th, num_m, vmem_limit_bytes))


def mlp_reference(x, w_fc_t, b_fc, w_proj_t, b_proj):
    h = jnp.einsum("btd,dh->bth", x, w_fc_t) + b_fc
    h = _gelu_tanh(h)
    return jnp.einsum("bth,hd->btd", h, w_proj_t) + b_proj


if __name__ == "__main__":
    # Small but lane-dense config: n_embd=128 -> hidden=512.  M = 144 tokens;
    # tile choices below keep the demo on exactly-dividing blocks while still
    # exercising both execution paths (resident weights, serpentine reduction).
    B, T, n_embd = 2, 72, 128
    hidden = 4 * n_embd

    key = jax.random.PRNGKey(0)
    k_x, k_wfc, k_bfc, k_wproj, k_bproj = jax.random.split(key, 5)

    x = jax.random.normal(k_x, (B, T, n_embd), dtype=jnp.float32)

    # PyTorch Linear weight is (out, in); store the transposed (in, out) form.
    w_fc = 0.02 * jax.random.normal(k_wfc, (hidden, n_embd), dtype=jnp.float32)
    b_fc = 0.01 * jax.random.normal(k_bfc, (hidden,), dtype=jnp.float32)
    w_proj = 0.02 * jax.random.normal(k_wproj, (n_embd, hidden), dtype=jnp.float32)
    b_proj = 0.01 * jax.random.normal(k_bproj, (n_embd,), dtype=jnp.float32)

    w_fc_t = w_fc.T        # (n_embd, hidden)
    w_proj_t = w_proj.T    # (hidden, n_embd)

    y_ref = mlp_reference(x, w_fc_t, b_fc, w_proj_t, b_proj)

    # Weights-resident fast path (weights DMA'd once, hidden chunked in-kernel).
    y_res = jax.block_until_ready(
        mlp_pallas(x, w_fc_t, b_fc, w_proj_t, b_proj, tm=512, th=256,
                   mode="resident"))
    # Streamed path: 2 M tiles x 2 hidden slices, serpentine slice order.
    y_kt = jax.block_until_ready(
        mlp_pallas(x, w_fc_t, b_fc, w_proj_t, b_proj, tm=72, th=256,
                   mode="ktiled"))

    for name, y in (("resident", y_res), ("ktiled", y_kt)):
        assert y.shape == (B, T, n_embd)
        err = float(jnp.max(jnp.abs(y - y_ref)))
        # Loose tolerance covers the bf16 MXU-operand rounding in the kernel.
        assert err < 2e-2, f"{name} path mismatch vs reference, max abs err = {err}"

    print("KERNEL_OK")
</pallas_src>

<mosaic_0001>
module attributes {stable_mosaic.version = 11 : i64} {
  func.func @kernel(%arg0: i32, %arg1: memref<144x128xf32, #tpu.memory_space<vmem>>, %arg2: memref<128x512xbf16, #tpu.memory_space<vmem>>, %arg3: memref<1x512xf32, #tpu.memory_space<vmem>>, %arg4: memref<512x128xbf16, #tpu.memory_space<vmem>>, %arg5: memref<1x128xf32, #tpu.memory_space<vmem>>, %arg6: memref<144x128xf32, #tpu.memory_space<vmem>>, %arg7: memref<144x128xf32, #tpu.memory_space<vmem>>) attributes {dimension_semantics = [#tpu.dimension_semantics<parallel>], iteration_bounds = array<i64: 1>, scalar_prefetch = 0 : i64, scratch_operands = 1 : i64, tpu.core_type = #tpu.core_type<tc>, window_params = [{transform_indices = @transform_0, window_bounds = array<i64: 144, 128>}, {pipeline_mode = #tpu.pipeline_mode<synchronous>, transform_indices = @transform_1, window_bounds = array<i64: 128, 512>}, {pipeline_mode = #tpu.pipeline_mode<synchronous>, transform_indices = @transform_2, window_bounds = array<i64: 1, 512>}, {pipeline_mode = #tpu.pipeline_mode<synchronous>, transform_indices = @transform_3, window_bounds = array<i64: 512, 128>}, {pipeline_mode = #tpu.pipeline_mode<synchronous>, transform_indices = @transform_4, window_bounds = array<i64: 1, 128>}, {transform_indices = @transform_5, window_bounds = array<i64: 144, 128>}]} {
    %c0 = arith.constant 0 : index
    %c0_0 = arith.constant 0 : index
    %0 = vector.load %arg1[%c0, %c0_0] : memref<144x128xf32, #tpu.memory_space<vmem>>, vector<144x128xf32>
    %1 = arith.truncf %0 : vector<144x128xf32> to vector<144x128xbf16>
    %c0_1 = arith.constant 0 : index
    %c0_2 = arith.constant 0 : index
    %2 = vector.load %arg2[%c0_1, %c0_2] : memref<128x512xbf16, #tpu.memory_space<vmem>>, vector<128x256xbf16>
    %cst = arith.constant dense<0.000000e+00> : vector<144x256xf32>
    %3 = tpu.matmul %1, %2, %cst {dimension_numbers = #tpu.dot_dimension_numbers<[1], [0], [0], [1], [0, 0, 1, 1], [], []>} : vector<144x128xbf16>, vector<128x256xbf16>, vector<144x256xf32> -> vector<144x256xf32>
    %c0_3 = arith.constant 0 : index
    %c0_4 = arith.constant 0 : index
    %4 = vector.load %arg3[%c0_3, %c0_4] : memref<1x512xf32, #tpu.memory_space<vmem>>, vector<1x256xf32>
    %5 = vector.broadcast %4 : vector<1x256xf32> to vector<144x256xf32>
    %6 = arith.addf %3, %5 : vector<144x256xf32>
    %cst_5 = arith.constant 5.000000e-01 : f32
    %7 = vector.broadcast %cst_5 : f32 to vector<144x256xf32>
    %8 = arith.mulf %7, %6 : vector<144x256xf32>
    %cst_6 = arith.constant 4.471500e-02 : f32
    %9 = vector.broadcast %cst_6 : f32 to vector<144x256xf32>
    %10 = arith.mulf %9, %6 : vector<144x256xf32>
    %11 = arith.mulf %10, %6 : vector<144x256xf32>
    %12 = arith.mulf %11, %6 : vector<144x256xf32>
    %13 = arith.addf %6, %12 : vector<144x256xf32>
    %cst_7 = arith.constant 0.797884583 : f32
    %14 = vector.broadcast %cst_7 : f32 to vector<144x256xf32>
    %15 = arith.mulf %14, %13 : vector<144x256xf32>
    %16 = math.tanh %15 : vector<144x256xf32>
    %cst_8 = arith.constant 1.000000e+00 : f32
    %17 = vector.broadcast %cst_8 : f32 to vector<144x256xf32>
    %18 = arith.addf %17, %16 : vector<144x256xf32>
    %19 = arith.mulf %8, %18 : vector<144x256xf32>
    %20 = arith.truncf %19 : vector<144x256xf32> to vector<144x256xbf16>
    %c0_9 = arith.constant 0 : index
    %c0_10 = arith.constant 0 : index
    %21 = vector.load %arg4[%c0_9, %c0_10] : memref<512x128xbf16, #tpu.memory_space<vmem>>, vector<256x128xbf16>
    %cst_11 = arith.constant dense<0.000000e+00> : vector<144x128xf32>
    %22 = tpu.matmul %20, %21, %cst_11 {dimension_numbers = #tpu.dot_dimension_numbers<[1], [0], [0], [1], [0, 0, 1, 1], [], []>} : vector<144x256xbf16>, vector<256x128xbf16>, vector<144x128xf32> -> vector<144x128xf32>
    %c0_12 = arith.constant 0 : index
    %c0_13 = arith.constant 0 : index
    %23 = vector.load %arg7[%c0_12, %c0_13] : memref<144x128xf32, #tpu.memory_space<vmem>>, vector<144x128xf32>
    tpu.vector_store %arg7[%c0_12, %c0_13], %22 {strides = array<i32>} : memref<144x128xf32, #tpu.memory_space<vmem>>, vector<144x128xf32>,
    %c0_14 = arith.constant 0 : index
    %c256 = arith.constant 256 : index
    %24 = vector.load %arg2[%c0_14, %c256] : memref<128x512xbf16, #tpu.memory_space<vmem>>, vector<128x256xbf16>
    %cst_15 = arith.constant dense<0.000000e+00> : vector<144x256xf32>
    %25 = tpu.matmul %1, %24, %cst_15 {dimension_numbers = #tpu.dot_dimension_numbers<[1], [0], [0], [1], [0, 0, 1, 1], [], []>} : vector<144x128xbf16>, vector<128x256xbf16>, vector<144x256xf32> -> vector<144x256xf32>
    %c0_16 = arith.constant 0 : index
    %c256_17 = arith.constant 256 : index
    %26 = vector.load %arg3[%c0_16, %c256_17] : memref<1x512xf32, #tpu.memory_space<vmem>>, vector<1x256xf32>
    %27 = vector.broadcast %26 : vector<1x256xf32> to vector<144x256xf32>
    %28 = arith.addf %25, %27 : vector<144x256xf32>
    %cst_18 = arith.constant 5.000000e-01 : f32
    %29 = vector.broadcast %cst_18 : f32 to vector<144x256xf32>
    %30 = arith.mulf %29, %28 : vector<144x256xf32>
    %cst_19 = arith.constant 4.471500e-02 : f32
    %31 = vector.broadcast %cst_19 : f32 to vector<144x256xf32>
    %32 = arith.mulf %31, %28 : vector<144x256xf32>
    %33 = arith.mulf %32, %28 : vector<144x256xf32>
    %34 = arith.mulf %33, %28 : vector<144x256xf32>
    %35 = arith.addf %28, %34 : vector<144x256xf32>
    %cst_20 = arith.constant 0.797884583 : f32
    %36 = vector.broadcast %cst_20 : f32 to vector<144x256xf32>
    %37 = arith.mulf %36, %35 : vector<144x256xf32>
    %38 = math.tanh %37 : vector<144x256xf32>
    %cst_21 = arith.constant 1.000000e+00 : f32
    %39 = vector.broadcast %cst_21 : f32 to vector<144x256xf32>
    %40 = arith.addf %39, %38 : vector<144x256xf32>
    %41 = arith.mulf %30, %40 : vector<144x256xf32>
    %42 = arith.truncf %41 : vector<144x256xf32> to vector<144x256xbf16>
    %c256_22 = arith.constant 256 : index
    %c0_23 = arith.constant 0 : index
    %43 = vector.load %arg4[%c256_22, %c0_23] : memref<512x128xbf16, #tpu.memory_space<vmem>>, vector<256x128xbf16>
    %cst_24 = arith.constant dense<0.000000e+00> : vector<144x128xf32>
    %44 = tpu.matmul %42, %43, %cst_24 {dimension_numbers = #tpu.dot_dimension_numbers<[1], [0], [0], [1], [0, 0, 1, 1], [], []>} : vector<144x256xbf16>, vector<256x128xbf16>, vector<144x128xf32> -> vector<144x128xf32>
    %c0_25 = arith.constant 0 : index
    %c0_26 = arith.constant 0 : index
    %45 = vector.load %arg7[%c0_25, %c0_26] : memref<144x128xf32, #tpu.memory_space<vmem>>, vector<144x128xf32>
    %46 = arith.addf %45, %44 : vector<144x128xf32>
    %c0_27 = arith.constant 0 : index
    %c0_28 = arith.constant 0 : index
    %47 = vector.load %arg7[%c0_27, %c0_28] : memref<144x128xf32, #tpu.memory_space<vmem>>, vector<144x128xf32>
    tpu.vector_store %arg7[%c0_27, %c0_28], %46 {strides = array<i32>} : memref<144x128xf32, #tpu.memory_space<vmem>>, vector<144x128xf32>,
    %c0_29 = arith.constant 0 : index
    %c0_30 = arith.constant 0 : index
    %48 = vector.load %arg7[%c0_29, %c0_30] : memref<144x128xf32, #tpu.memory_space<vmem>>, vector<144x128xf32>
    %c0_31 = arith.constant 0 : index
    %c0_32 = arith.constant 0 : index
    %49 = vector.load %arg5[%c0_31, %c0_32] : memref<1x128xf32, #tpu.memory_space<vmem>>, vector<1x128xf32>
    %50 = vector.broadcast %49 : vector<1x128xf32> to vector<144x128xf32>
    %51 = arith.addf %48, %50 : vector<144x128xf32>
    %c0_33 = arith.constant 0 : index
    %c0_34 = arith.constant 0 : index
    %52 = vector.load %arg6[%c0_33, %c0_34] : memref<144x128xf32, #tpu.memory_space<vmem>>, vector<144x128xf32>
    tpu.vector_store %arg6[%c0_33, %c0_34], %51 {strides = array<i32>} : memref<144x128xf32, #tpu.memory_space<vmem>>, vector<144x128xf32>,
    return
  }
  func.func @transform_0(%arg0: i32) -> (i32, i32) {
    %c0_i32 = arith.constant 0 : i32
    %c0_i32_0 = arith.constant 0 : i32
    return %arg0, %c0_i32 : i32, i32
  }
  func.func @transform_1(%arg0: i32) -> (i32, i32) {
    %c0_i32 = arith.constant 0 : i32
    %c0_i32_0 = arith.constant 0 : i32
    %c0_i32_1 = arith.constant 0 : i32
    return %c0_i32, %c0_i32_0 : i32, i32
  }
  func.func @transform_2(%arg0: i32) -> (i32, i32) {
    %c0_i32 = arith.constant 0 : i32
    %c0_i32_0 = arith.constant 0 : i32
    %c0_i32_1 = arith.constant 0 : i32
    return %c0_i32, %c0_i32_0 : i32, i32
  }
  func.func @transform_3(%arg0: i32) -> (i32, i32) {
    %c0_i32 = arith.constant 0 : i32
    %c0_i32_0 = arith.constant 0 : i32
    %c0_i32_1 = arith.constant 0 : i32
    return %c0_i32, %c0_i32_0 : i32, i32
  }
  func.func @transform_4(%arg0: i32) -> (i32, i32) {
    %c0_i32 = arith.constant 0 : i32
    %c0_i32_0 = arith.constant 0 : i32
    %c0_i32_1 = arith.constant 0 : i32
    return %c0_i32, %c0_i32_0 : i32, i32
  }
  func.func @transform_5(%arg0: i32) -> (i32, i32) {
    %c0_i32 = arith.constant 0 : i32
    %c0_i32_0 = arith.constant 0 : i32
    return %arg0, %c0_i32 : i32, i32
  }
}

module attributes {stable_mosaic.version = 11 : i64} {
  func.func @kernel(%arg0: i32, %arg1: memref<144x128xf32, #tpu.memory_space<vmem>>, %arg2: memref<128x512xbf16, #tpu.memory_space<vmem>>, %arg3: memref<1x512xf32, #tpu.memory_space<vmem>>, %arg4: memref<512x128xbf16, #tpu.memory_space<vmem>>, %arg5: memref<1x128xf32, #tpu.memory_space<vmem>>, %arg6: memref<144x128xf32, #tpu.memory_space<vmem>>, %arg7: memref<144x128xf32, #tpu.memory_space<vmem>>) attributes {dimension_semantics = [#tpu.dimension_semantics<parallel>], iteration_bounds = array<i64: 1>, scalar_prefetch = 0 : i64, scratch_operands = 1 : i64, tpu.core_type = #tpu.core_type<tc>, window_params = [{transform_indices = @transform_0, window_bounds = array<i64: 144, 128>}, {pipeline_mode = #tpu.pipeline_mode<synchronous>, transform_indices = @transform_1, window_bounds = array<i64: 128, 512>}, {pipeline_mode = #tpu.pipeline_mode<synchronous>, transform_indices = @transform_2, window_bounds = array<i64: 1, 512>}, {pipeline_mode = #tpu.pipeline_mode<synchronous>, transform_indices = @transform_3, window_bounds = array<i64: 512, 128>}, {pipeline_mode = #tpu.pipeline_mode<synchronous>, transform_indices = @transform_4, window_bounds = array<i64: 1, 128>}, {transform_indices = @transform_5, window_bounds = array<i64: 144, 128>}]} {
    %c0 = arith.constant 0 : index
    %c0_0 = arith.constant 0 : index
    %0 = vector.load %arg1[%c0, %c0_0] : memref<144x128xf32, #tpu.memory_space<vmem>>, vector<144x128xf32>
    %1 = arith.truncf %0 : vector<144x128xf32> to vector<144x128xbf16>
    %c0_1 = arith.constant 0 : index
    %c0_2 = arith.constant 0 : index
    %2 = vector.load %arg2[%c0_1, %c0_2] : memref<128x512xbf16, #tpu.memory_space<vmem>>, vector<128x256xbf16>
    %cst = arith.constant dense<0.000000e+00> : vector<144x256xf32>
    %3 = tpu.matmul %1, %2, %cst {dimension_numbers = #tpu.dot_dimension_numbers<[1], [0], [0], [1], [0, 0, 1, 1], [], []>} : vector<144x128xbf16>, vector<128x256xbf16>, vector<144x256xf32> -> vector<144x256xf32>
    %c0_3 = arith.constant 0 : index
    %c0_4 = arith.constant 0 : index
    %4 = vector.load %arg3[%c0_3, %c0_4] : memref<1x512xf32, #tpu.memory_space<vmem>>, vector<1x256xf32>
    %5 = vector.broadcast %4 : vector<1x256xf32> to vector<144x256xf32>
    %6 = arith.addf %3, %5 : vector<144x256xf32>
    %cst_5 = arith.constant 5.000000e-01 : f32
    %7 = vector.broadcast %cst_5 : f32 to vector<144x256xf32>
    %8 = arith.mulf %7, %6 : vector<144x256xf32>
    %cst_6 = arith.constant 4.471500e-02 : f32
    %9 = vector.broadcast %cst_6 : f32 to vector<144x256xf32>
    %10 = arith.mulf %9, %6 : vector<144x256xf32>
    %11 = arith.mulf %10, %6 : vector<144x256xf32>
    %12 = arith.mulf %11, %6 : vector<144x256xf32>
    %13 = arith.addf %6, %12 : vector<144x256xf32>
    %cst_7 = arith.constant 0.797884583 : f32
    %14 = vector.broadcast %cst_7 : f32 to vector<144x256xf32>
    %15 = arith.mulf %14, %13 : vector<144x256xf32>
    %16 = math.tanh %15 : vector<144x256xf32>
    %cst_8 = arith.constant 1.000000e+00 : f32
    %17 = vector.broadcast %cst_8 : f32 to vector<144x256xf32>
    %18 = arith.addf %17, %16 : vector<144x256xf32>
    %19 = arith.mulf %8, %18 : vector<144x256xf32>
    %20 = arith.truncf %19 : vector<144x256xf32> to vector<144x256xbf16>
    %c0_9 = arith.constant 0 : index
    %c0_10 = arith.constant 0 : index
    %21 = vector.load %arg4[%c0_9, %c0_10] : memref<512x128xbf16, #tpu.memory_space<vmem>>, vector<256x128xbf16>
    %cst_11 = arith.constant dense<0.000000e+00> : vector<144x128xf32>
    %22 = tpu.matmul %20, %21, %cst_11 {dimension_numbers = #tpu.dot_dimension_numbers<[1], [0], [0], [1], [0, 0, 1, 1], [], []>} : vector<144x256xbf16>, vector<256x128xbf16>, vector<144x128xf32> -> vector<144x128xf32>
    %c0_12 = arith.constant 0 : index
    %c0_13 = arith.constant 0 : index
    %23 = vector.load %arg7[%c0_12, %c0_13] : memref<144x128xf32, #tpu.memory_space<vmem>>, vector<144x128xf32>
    tpu.vector_store %arg7[%c0_12, %c0_13], %22 {strides = array<i32>} : memref<144x128xf32, #tpu.memory_space<vmem>>, vector<144x128xf32>,
    %c0_14 = arith.constant 0 : index
    %c256 = arith.constant 256 : index
    %24 = vector.load %arg2[%c0_14, %c256] : memref<128x512xbf16, #tpu.memory_space<vmem>>, vector<128x256xbf16>
    %cst_15 = arith.constant dense<0.000000e+00> : vector<144x256xf32>
    %25 = tpu.matmul %1, %24, %cst_15 {dimension_numbers = #tpu.dot_dimension_numbers<[1], [0], [0], [1], [0, 0, 1, 1], [], []>} : vector<144x128xbf16>, vector<128x256xbf16>, vector<144x256xf32> -> vector<144x256xf32>
    %c0_16 = arith.constant 0 : index
    %c256_17 = arith.constant 256 : index
    %26 = vector.load %arg3[%c0_16, %c256_17] : memref<1x512xf32, #tpu.memory_space<vmem>>, vector<1x256xf32>
    %27 = vector.broadcast %26 : vector<1x256xf32> to vector<144x256xf32>
    %28 = arith.addf %25, %27 : vector<144x256xf32>
    %cst_18 = arith.constant 5.000000e-01 : f32
    %29 = vector.broadcast %cst_18 : f32 to vector<144x256xf32>
    %30 = arith.mulf %29, %28 : vector<144x256xf32>
    %cst_19 = arith.constant 4.471500e-02 : f32
    %31 = vector.broadcast %cst_19 : f32 to vector<144x256xf32>
    %32 = arith.mulf %31, %28 : vector<144x256xf32>
    %33 = arith.mulf %32, %28 : vector<144x256xf32>
    %34 = arith.mulf %33, %28 : vector<144x256xf32>
    %35 = arith.addf %28, %34 : vector<144x256xf32>
    %cst_20 = arith.constant 0.797884583 : f32
    %36 = vector.broadcast %cst_20 : f32 to vector<144x256xf32>
    %37 = arith.mulf %36, %35 : vector<144x256xf32>
    %38 = math.tanh %37 : vector<144x256xf32>
    %cst_21 = arith.constant 1.000000e+00 : f32
    %39 = vector.broadcast %cst_21 : f32 to vector<144x256xf32>
    %40 = arith.addf %39, %38 : vector<144x256xf32>
    %41 = arith.mulf %30, %40 : vector<144x256xf32>
    %42 = arith.truncf %41 : vector<144x256xf32> to vector<144x256xbf16>
    %c256_22 = arith.constant 256 : index
    %c0_23 = arith.constant 0 : index
    %43 = vector.load %arg4[%c256_22, %c0_23] : memref<512x128xbf16, #tpu.memory_space<vmem>>, vector<256x128xbf16>
    %cst_24 = arith.constant dense<0.000000e+00> : vector<144x128xf32>
    %44 = tpu.matmul %42, %43, %cst_24 {dimension_numbers = #tpu.dot_dimension_numbers<[1], [0], [0], [1], [0, 0, 1, 1], [], []>} : vector<144x256xbf16>, vector<256x128xbf16>, vector<144x128xf32> -> vector<144x128xf32>
    %c0_25 = arith.constant 0 : index
    %c0_26 = arith.constant 0 : index
    %45 = vector.load %arg7[%c0_25, %c0_26] : memref<144x128xf32, #tpu.memory_space<vmem>>, vector<144x128xf32>
    %46 = arith.addf %45, %44 : vector<144x128xf32>
    %c0_27 = arith.constant 0 : index
    %c0_28 = arith.constant 0 : index
    %47 = vector.load %arg7[%c0_27, %c0_28] : memref<144x128xf32, #tpu.memory_space<vmem>>, vector<144x128xf32>
    tpu.vector_store %arg7[%c0_27, %c0_28], %46 {strides = array<i32>} : memref<144x128xf32, #tpu.memory_space<vmem>>, vector<144x128xf32>,
    %c0_29 = arith.constant 0 : index
    %c0_30 = arith.constant 0 : index
    %48 = vector.load %arg7[%c0_29, %c0_30] : memref<144x128xf32, #tpu.memory_space<vmem>>, vector<144x128xf32>
    %c0_31 = arith.constant 0 : index
    %c0_32 = arith.constant 0 : index
    %49 = vector.load %arg5[%c0_31, %c0_32] : memref<1x128xf32, #tpu.memory_space<vmem>>, vector<1x128xf32>
    %50 = vector.broadcast %49 : vector<1x128xf32> to vector<144x128xf32>
    %51 = arith.addf %48, %50 : vector<144x128xf32>
    %c0_33 = arith.constant 0 : index
    %c0_34 = arith.constant 0 : index
    %52 = vector.load %arg6[%c0_33, %c0_34] : memref<144x128xf32, #tpu.memory_space<vmem>>, vector<144x128xf32>
    tpu.vector_store %arg6[%c0_33, %c0_34], %51 {strides = array<i32>} : memref<144x128xf32, #tpu.memory_space<vmem>>, vector<144x128xf32>,
    return
  }
  func.func @transform_0(%arg0: i32) -> (i32, i32) {
    %c0_i32 = arith.constant 0 : i32
    %c0_i32_0 = arith.constant 0 : i32
    return %arg0, %c0_i32 : i32, i32
  }
  func.func @transform_1(%arg0: i32) -> (i32, i32) {
    %c0_i32 = arith.constant 0 : i32
    %c0_i32_0 = arith.constant 0 : i32
    %c0_i32_1 = arith.constant 0 : i32
    return %c0_i32, %c0_i32_0 : i32, i32
  }
  func.func @transform_2(%arg0: i32) -> (i32, i32) {
    %c0_i32 = arith.constant 0 : i32
    %c0_i32_0 = arith.constant 0 : i32
    %c0_i32_1 = arith.constant 0 : i32
    return %c0_i32, %c0_i32_0 : i32, i32
  }
  func.func @transform_3(%arg0: i32) -> (i32, i32) {
    %c0_i32 = arith.constant 0 : i32
    %c0_i32_0 = arith.constant 0 : i32
    %c0_i32_1 = arith.constant 0 : i32
    return %c0_i32, %c0_i32_0 : i32, i32
  }
  func.func @transform_4(%arg0: i32) -> (i32, i32) {
    %c0_i32 = arith.constant 0 : i32
    %c0_i32_0 = arith.constant 0 : i32
    %c0_i32_1 = arith.constant 0 : i32
    return %c0_i32, %c0_i32_0 : i32, i32
  }
  func.func @transform_5(%arg0: i32) -> (i32, i32) {
    %c0_i32 = arith.constant 0 : i32
    %c0_i32_0 = arith.constant 0 : i32
    return %arg0, %c0_i32 : i32, i32
  }
}

module attributes {stable_mosaic.version = 11 : i64} {
  func.func @_mlp_kernel_ktiled(%arg0: i32, %arg1: i32, %arg2: memref<144x128xf32, #tpu.memory_space<vmem>>, %arg3: memref<128x256xbf16, #tpu.memory_space<vmem>>, %arg4: memref<1x256xf32, #tpu.memory_space<vmem>>, %arg5: memref<256x128xbf16, #tpu.memory_space<vmem>>, %arg6: memref<1x128xf32, #tpu.memory_space<vmem>>, %arg7: memref<144x128xf32, #tpu.memory_space<vmem>>, %arg8: memref<144x128xf32, #tpu.memory_space<vmem>>) attributes {dimension_semantics = [#tpu.dimension_semantics<parallel>, #tpu.dimension_semantics<arbitrary>], iteration_bounds = array<i64: 1, 2>, scalar_prefetch = 0 : i64, scratch_operands = 1 : i64, tpu.core_type = #tpu.core_type<tc>, window_params = [{transform_indices = @transform_0, window_bounds = array<i64: 144, 128>}, {transform_indices = @transform_1, window_bounds = array<i64: 128, 256>}, {transform_indices = @transform_2, window_bounds = array<i64: 1, 256>}, {transform_indices = @transform_3, window_bounds = array<i64: 256, 128>}, {pipeline_mode = #tpu.pipeline_mode<synchronous>, transform_indices = @transform_4, window_bounds = array<i64: 1, 128>}, {transform_indices = @transform_5, window_bounds = array<i64: 144, 128>}]} {
    %c0 = arith.constant 0 : index
    %c0_0 = arith.constant 0 : index
    %0 = vector.load %arg2[%c0, %c0_0] : memref<144x128xf32, #tpu.memory_space<vmem>>, vector<144x128xf32>
    %1 = arith.truncf %0 : vector<144x128xf32> to vector<144x128xbf16>
    %c0_1 = arith.constant 0 : index
    %c0_2 = arith.constant 0 : index
    %2 = vector.load %arg3[%c0_1, %c0_2] : memref<128x256xbf16, #tpu.memory_space<vmem>>, vector<128x256xbf16>
    %cst = arith.constant dense<0.000000e+00> : vector<144x256xf32>
    %3 = tpu.matmul %1, %2, %cst {dimension_numbers = #tpu.dot_dimension_numbers<[1], [0], [0], [1], [0, 0, 1, 1], [], []>} : vector<144x128xbf16>, vector<128x256xbf16>, vector<144x256xf32> -> vector<144x256xf32>
    %c0_3 = arith.constant 0 : index
    %c0_4 = arith.constant 0 : index
    %4 = vector.load %arg4[%c0_3, %c0_4] : memref<1x256xf32, #tpu.memory_space<vmem>>, vector<1x256xf32>
    %5 = vector.broadcast %4 : vector<1x256xf32> to vector<144x256xf32>
    %6 = arith.addf %3, %5 : vector<144x256xf32>
    %cst_5 = arith.constant 5.000000e-01 : f32
    %7 = vector.broadcast %cst_5 : f32 to vector<144x256xf32>
    %8 = arith.mulf %7, %6 : vector<144x256xf32>
    %cst_6 = arith.constant 4.471500e-02 : f32
    %9 = vector.broadcast %cst_6 : f32 to vector<144x256xf32>
    %10 = arith.mulf %9, %6 : vector<144x256xf32>
    %11 = arith.mulf %10, %6 : vector<144x256xf32>
    %12 = arith.mulf %11, %6 : vector<144x256xf32>
    %13 = arith.addf %6, %12 : vector<144x256xf32>
    %cst_7 = arith.constant 0.797884583 : f32
    %14 = vector.broadcast %cst_7 : f32 to vector<144x256xf32>
    %15 = arith.mulf %14, %13 : vector<144x256xf32>
    %16 = math.tanh %15 : vector<144x256xf32>
    %cst_8 = arith.constant 1.000000e+00 : f32
    %17 = vector.broadcast %cst_8 : f32 to vector<144x256xf32>
    %18 = arith.addf %17, %16 : vector<144x256xf32>
    %19 = arith.mulf %8, %18 : vector<144x256xf32>
    %20 = arith.truncf %19 : vector<144x256xf32> to vector<144x256xbf16>
    %c0_9 = arith.constant 0 : index
    %c0_10 = arith.constant 0 : index
    %21 = vector.load %arg5[%c0_9, %c0_10] : memref<256x128xbf16, #tpu.memory_space<vmem>>, vector<256x128xbf16>
    %cst_11 = arith.constant dense<0.000000e+00> : vector<144x128xf32>
    %22 = tpu.matmul %20, %21, %cst_11 {dimension_numbers = #tpu.dot_dimension_numbers<[1], [0], [0], [1], [0, 0, 1, 1], [], []>} : vector<144x256xbf16>, vector<256x128xbf16>, vector<144x128xf32> -> vector<144x128xf32>
    %c0_i32 = arith.constant 0 : i32
    %23 = arith.cmpi eq, %arg1, %c0_i32 : i32
    %24 = arith.extui %23 : i1 to i32
    %c0_i32_12 = arith.constant 0 : i32
    %25 = arith.cmpi ne, %24, %c0_i32_12 : i32
    scf.if %25 {
      %c0_16 = arith.constant 0 : index
      %c0_17 = arith.constant 0 : index
      %32 = vector.load %arg8[%c0_16, %c0_17] : memref<144x128xf32, #tpu.memory_space<vmem>>, vector<144x128xf32>
      tpu.vector_store %arg8[%c0_16, %c0_17], %22 {strides = array<i32>} : memref<144x128xf32, #tpu.memory_space<vmem>>, vector<144x128xf32>,
    } else {
    }
    %c0_i32_13 = arith.constant 0 : i32
    %26 = arith.cmpi sgt, %arg1, %c0_i32_13 : i32
    %27 = arith.extui %26 : i1 to i32
    %c0_i32_14 = arith.constant 0 : i32
    %28 = arith.cmpi ne, %27, %c0_i32_14 : i32
    scf.if %28 {
      %c0_16 = arith.constant 0 : index
      %c0_17 = arith.constant 0 : index
      %32 = vector.load %arg8[%c0_16, %c0_17] : memref<144x128xf32, #tpu.memory_space<vmem>>, vector<144x128xf32>
      %33 = arith.addf %32, %22 : vector<144x128xf32>
      %c0_18 = arith.constant 0 : index
      %c0_19 = arith.constant 0 : index
      %34 = vector.load %arg8[%c0_18, %c0_19] : memref<144x128xf32, #tpu.memory_space<vmem>>, vector<144x128xf32>
      tpu.vector_store %arg8[%c0_18, %c0_19], %33 {strides = array<i32>} : memref<144x128xf32, #tpu.memory_space<vmem>>, vector<144x128xf32>,
    } else {
    }
    %c1_i32 = arith.constant 1 : i32
    %29 = arith.cmpi eq, %arg1, %c1_i32 : i32
    %30 = arith.extui %29 : i1 to i32
    %c0_i32_15 = arith.constant 0 : i32
    %31 = arith.cmpi ne, %30, %c0_i32_15 : i32
    scf.if %31 {
      %c0_16 = arith.constant 0 : index
      %c0_17 = arith.constant 0 : index
      %32 = vector.load %arg8[%c0_16, %c0_17] : memref<144x128xf32, #tpu.memory_space<vmem>>, vector<144x128xf32>
      %c0_18 = arith.constant 0 : index
      %c0_19 = arith.constant 0 : index
      %33 = vector.load %arg6[%c0_18, %c0_19] : memref<1x128xf32, #tpu.memory_space<vmem>>, vector<1x128xf32>
      %34 = vector.broadcast %33 : vector<1x128xf32> to vector<144x128xf32>
      %35 = arith.addf %32, %34 : vector<144x128xf32>
      %c0_20 = arith.constant 0 : index
      %c0_21 = arith.constant 0 : index
      %36 = vector.load %arg7[%c0_20, %c0_21] : memref<144x128xf32, #tpu.memory_space<vmem>>, vector<144x128xf32>
      tpu.vector_store %arg7[%c0_20, %c0_21], %35 {strides = array<i32>} : memref<144x128xf32, #tpu.memory_space<vmem>>, vector<144x128xf32>,
    } else {
    }
    return
  }
  func.func @transform_0(%arg0: i32, %arg1: i32) -> (i32, i32) {
    %c0_i32 = arith.constant 0 : i32
    %c0_i32_0 = arith.constant 0 : i32
    return %arg0, %c0_i32 : i32, i32
  }
  func.func @transform_1(%arg0: i32, %arg1: i32) -> (i32, i32) {
    %c2_i32 = arith.constant 2 : i32
    %c0_i32 = arith.constant 0 : i32
    %0 = arith.cmpi eq, %c2_i32, %c0_i32 : i32
    %c1_i32 = arith.constant 1 : i32
    %1 = arith.select %0, %c1_i32, %c2_i32 : i32
    %2 = arith.remsi %arg0, %1 : i32
    %c0_i32_0 = arith.constant 0 : i32
    %3 = arith.cmpi ne, %2, %c0_i32_0 : i32
    %c0_i32_1 = arith.constant 0 : i32
    %4 = arith.cmpi slt, %2, %c0_i32_1 : i32
    %c0_i32_2 = arith.constant 0 : i32
    %5 = arith.cmpi slt, %1, %c0_i32_2 : i32
    %6 = arith.xori %4, %5 : i1
    %7 = arith.andi %6, %3 : i1
    %8 = arith.addi %2, %1 : i32
    %9 = arith.select %7, %8, %2 : i32
    %c0_i32_3 = arith.constant 0 : i32
    %10 = arith.cmpi eq, %9, %c0_i32_3 : i32
    %c1_i32_4 = arith.constant 1 : i32
    %11 = arith.subi %c1_i32_4, %arg1 : i32
    %12 = arith.select %10, %arg1, %11 : i32
    %c0_i32_5 = arith.constant 0 : i32
    %c0_i32_6 = arith.constant 0 : i32
    return %c0_i32_5, %12 : i32, i32
  }
  func.func @transform_2(%arg0: i32, %arg1: i32) -> (i32, i32) {
    %c2_i32 = arith.constant 2 : i32
    %c0_i32 = arith.constant 0 : i32
    %0 = arith.cmpi eq, %c2_i32, %c0_i32 : i32
    %c1_i32 = arith.constant 1 : i32
    %1 = arith.select %0, %c1_i32, %c2_i32 : i32
    %2 = arith.remsi %arg0, %1 : i32
    %c0_i32_0 = arith.constant 0 : i32
    %3 = arith.cmpi ne, %2, %c0_i32_0 : i32
    %c0_i32_1 = arith.constant 0 : i32
    %4 = arith.cmpi slt, %2, %c0_i32_1 : i32
    %c0_i32_2 = arith.constant 0 : i32
    %5 = arith.cmpi slt, %1, %c0_i32_2 : i32
    %6 = arith.xori %4, %5 : i1
    %7 = arith.andi %6, %3 : i1
    %8 = arith.addi %2, %1 : i32
    %9 = arith.select %7, %8, %2 : i32
    %c0_i32_3 = arith.constant 0 : i32
    %10 = arith.cmpi eq, %9, %c0_i32_3 : i32
    %c1_i32_4 = arith.constant 1 : i32
    %11 = arith.subi %c1_i32_4, %arg1 : i32
    %12 = arith.select %10, %arg1, %11 : i32
    %c0_i32_5 = arith.constant 0 : i32
    %c0_i32_6 = arith.constant 0 : i32
    return %c0_i32_5, %12 : i32, i32
  }
  func.func @transform_3(%arg0: i32, %arg1: i32) -> (i32, i32) {
    %c2_i32 = arith.constant 2 : i32
    %c0_i32 = arith.constant 0 : i32
    %0 = arith.cmpi eq, %c2_i32, %c0_i32 : i32
    %c1_i32 = arith.constant 1 : i32
    %1 = arith.select %0, %c1_i32, %c2_i32 : i32
    %2 = arith.remsi %arg0, %1 : i32
    %c0_i32_0 = arith.constant 0 : i32
    %3 = arith.cmpi ne, %2, %c0_i32_0 : i32
    %c0_i32_1 = arith.constant 0 : i32
    %4 = arith.cmpi slt, %2, %c0_i32_1 : i32
    %c0_i32_2 = arith.constant 0 : i32
    %5 = arith.cmpi slt, %1, %c0_i32_2 : i32
    %6 = arith.xori %4, %5 : i1
    %7 = arith.andi %6, %3 : i1
    %8 = arith.addi %2, %1 : i32
    %9 = arith.select %7, %8, %2 : i32
    %c0_i32_3 = arith.constant 0 : i32
    %10 = arith.cmpi eq, %9, %c0_i32_3 : i32
    %c1_i32_4 = arith.constant 1 : i32
    %11 = arith.subi %c1_i32_4, %arg1 : i32
    %12 = arith.select %10, %arg1, %11 : i32
    %c0_i32_5 = arith.constant 0 : i32
    %c0_i32_6 = arith.constant 0 : i32
    return %12, %c0_i32_5 : i32, i32
  }
  func.func @transform_4(%arg0: i32, %arg1: i32) -> (i32, i32) {
    %c0_i32 = arith.constant 0 : i32
    %c0_i32_0 = arith.constant 0 : i32
    %c0_i32_1 = arith.constant 0 : i32
    return %c0_i32, %c0_i32_0 : i32, i32
  }
  func.func @transform_5(%arg0: i32, %arg1: i32) -> (i32, i32) {
    %c0_i32 = arith.constant 0 : i32
    %c0_i32_0 = arith.constant 0 : i32
    return %arg0, %c0_i32 : i32, i32
  }
}

</mosaic_0001>

<llo_original>
// kernel: tpu_custom_call.1
$region0: #{tpu_custom_call.1}
  #allocation0 [shape = 'u32[]', space=smem, size = 0x4, offset = 0x4, fixed_abs, tag = 'smem constant byte address 0x4 - core index']
  #allocation1 [shape = 'u32[72,128]{1,0:T(1,128)}', space=vmem, size = 0x9000, scoped, tag = 'internal scratch']
  #allocation2 [shape = 'f32[144,128]{1,0:T(8,128)}', space=vmem, size = 0x12000, scoped, tag = 'scratch operand']
  %s0 = inlined_call_operand.hbm [shape: f32[144,128], index: 0, kind: input, shape index: {}]
  %s1 = inlined_call_operand.hbm [shape: bf16[128,512], index: 1, kind: input, shape index: {}]
  %s2 = inlined_call_operand.hbm [shape: f32[1,512], index: 2, kind: input, shape index: {}]
  %s3 = inlined_call_operand.hbm [shape: bf16[512,128], index: 3, kind: input, shape index: {}]
  %s4 = inlined_call_operand.vmem [shape: f32[1,128], index: 4, kind: input, shape index: {}]
  %s5 = inlined_call_operand.hbm [shape: f32[144,128], index: 5, kind: output, shape index: {}]
  %s6 = sld [smem:[#allocation0]]
  $region46: #{tpu_custom_call.1} parent=0
    _
  %s8 = ssub.s32 1, %s6
  %s9 = scalar_select 0, %s8, %s6
  $region1: #{tpu_custom_call.1} parent=0
    #allocation3 [shape = 'u8[73728]{0}', space=vmem, size = 0x12000, scoped, tag = 'input window, operand 0, single buffered']
    #allocation4 [shape = 's32[1]{0}', space=sflag, size = 0x4, scoped, tag = 'scoped memory for tpu_custom_call.1']
    #allocation5 [shape = 's32[1]{0}', space=sflag, size = 0x4, scoped, tag = 'scoped memory for tpu_custom_call.1']
    #allocation6 [shape = 'u8[131072]{0}', space=vmem, size = 0x20000, scoped, tag = 'input window, operand 1, single buffered']
    #allocation7 [shape = 's32[1]{0}', space=sflag, size = 0x4, scoped, tag = 'scoped memory for tpu_custom_call.1']
    #allocation8 [shape = 'u8[2048]{0}', space=vmem, size = 0x800, scoped, tag = 'input window, operand 2, single buffered']
    #allocation9 [shape = 'u8[131072]{0}', space=vmem, size = 0x20000, scoped, tag = 'input window, operand 3, single buffered']
    #allocation10 [shape = 's32[1]{0}', space=sflag, size = 0x4, scoped, tag = 'scoped memory for tpu_custom_call.1']
    #allocation11 [shape = 'u8[73728]{0}', space=vmem, size = 0x12000, scoped, tag = 'output window, operand 0, single buffered']
    %10 = vsyncpa [#allocation4], 0
    %11 = vsyncpa [#allocation7], 0
    %12 = vsyncpa [#allocation10], 0
    %13 = vsyncpa [#allocation5], 0
    // Predicated region
    $region2: #{tpu_custom_call.1} parent=1 // pred_check
      _
    $region3: #{tpu_custom_call.1} parent=1 // pred_check_branch
      %15 = sbr.rel (0) target = $region5
    $region4: #{tpu_custom_call.1} parent=1 // pred_region
      %17 = vsyncadd [#allocation4], 0
      %s18 = sshll.u32 %s0, 4
      %s19 = int_to_ptr.hbm [resolvable:$true] %s18
      %s20 = sshll.u32 [#allocation3], 4
      %s21 = int_to_ptr.vmem [resolvable:$true] %s20
      %26 = dma.hbm_to_vmem [thread:$0]  %s19, 2304, %s21, [#allocation4], 128, 128, 8
    $region5: #{tpu_custom_call.1} parent=1 // pred_fallthru
      _
    // Predicated region
    $region6: #{tpu_custom_call.1} parent=1 // pred_check
      _
    $region7: #{tpu_custom_call.1} parent=1 // pred_check_branch
      %28 = sbr.rel (0) target = $region9
    $region8: #{tpu_custom_call.1} parent=1 // pred_region
      %30 = vsyncadd [#allocation7], 0
      %s31 = sshll.u32 %s1, 4
      %s32 = int_to_ptr.hbm [resolvable:$true] %s31
      %s33 = sshll.u32 [#allocation6], 4
      %s34 = int_to_ptr.vmem [resolvable:$true] %s33
      %39 = dma.hbm_to_vmem [thread:$0]  %s32, 4096, %s34, [#allocation7], 256, 256, 16
    $region9: #{tpu_custom_call.1} parent=1 // pred_fallthru
      _
    // Predicated region
    $region10: #{tpu_custom_call.1} parent=1 // pred_check
      _
    $region11: #{tpu_custom_call.1} parent=1 // pred_check_branch
      %41 = sbr.rel (0) target = $region13
    $region12: #{tpu_custom_call.1} parent=1 // pred_region
      %43 = vsyncadd [#allocation7], 0
      %s45 = sshll.u32 %s2, 4
      %s46 = int_to_ptr.hbm [resolvable:$true] %s45
      %s47 = sshll.u32 [#allocation8], 4
      %s48 = int_to_ptr.vmem [resolvable:$true] %s47
      %50 = dma.hbm_to_vmem [thread:$0]  %s46, 64, %s48, [#allocation7]
    $region13: #{tpu_custom_call.1} parent=1 // pred_fallthru
      _
    // Predicated region
    $region14: #{tpu_custom_call.1} parent=1 // pred_check
      _
    $region15: #{tpu_custom_call.1} parent=1 // pred_check_branch
      %52 = sbr.rel (0) target = $region17
    $region16: #{tpu_custom_call.1} parent=1 // pred_region
      %54 = vsyncadd [#allocation10], 0
      %s55 = sshll.u32 %s3, 4
      %s56 = int_to_ptr.hbm [resolvable:$true] %s55
      %s57 = sshll.u32 [#allocation9], 4
      %s58 = int_to_ptr.vmem [resolvable:$true] %s57
      %63 = dma.hbm_to_vmem [thread:$0]  %s56, 4096, %s58, [#allocation10], 64, 64, 4
    $region17: #{tpu_custom_call.1} parent=1 // pred_fallthru
      _
    // Predicated region
    $region18: #{tpu_custom_call.1} parent=1 // pred_check
      _
    $region19: #{tpu_custom_call.1} parent=1 // pred_check_branch
      %65 = sbr.rel (0) target = $region21
    $region20: #{tpu_custom_call.1} parent=1 // pred_region
      _
    $region21: #{tpu_custom_call.1} parent=1 // pred_fallthru
      _
    // Predicated region
    $region22: #{tpu_custom_call.1} parent=1 // pred_check
      _
    $region23: #{tpu_custom_call.1} parent=1 // pred_check_branch
      %67 = sbr.rel (0) target = $region25
    $region24: #{tpu_custom_call.1} parent=1 // pred_region
      %69 = dma.done [#allocation4], 2304
    $region25: #{tpu_custom_call.1} parent=1 // pred_fallthru
      _
    // Predicated region
    $region26: #{tpu_custom_call.1} parent=1 // pred_check
      _
    $region27: #{tpu_custom_call.1} parent=1 // pred_check_branch
      %71 = sbr.rel (0) target = $region29
    $region28: #{tpu_custom_call.1} parent=1 // pred_region
      %73 = dma.done [#allocation7], 4096
    $region29: #{tpu_custom_call.1} parent=1 // pred_fallthru
      _
    // Predicated region
    $region30: #{tpu_custom_call.1} parent=1 // pred_check
      _
    $region31: #{tpu_custom_call.1} parent=1 // pred_check_branch
      %75 = sbr.rel (0) target = $region33
    $region32: #{tpu_custom_call.1} parent=1 // pred_region
      %77 = dma.done [#allocation7], 64
    $region33: #{tpu_custom_call.1} parent=1 // pred_fallthru
      _
    // Predicated region
    $region34: #{tpu_custom_call.1} parent=1 // pred_check
      _
    $region35: #{tpu_custom_call.1} parent=1 // pred_check_branch
      %79 = sbr.rel (0) target = $region37
    $region36: #{tpu_custom_call.1} parent=1 // pred_region
      %81 = dma.done [#allocation10], 4096
    $region37: #{tpu_custom_call.1} parent=1 // pred_fallthru
      _
    %v82 = vld [vmem:[#allocation3] sm:$0xff]
    %v83 = vld [vmem:[#allocation3 + $0x8] sm:$0xff]
    %v84 = vld [vmem:[#allocation3 + $0x10] sm:$0xff]
    %v85 = vld [vmem:[#allocation3 + $0x18] sm:$0xff]
    %v86 = vld [vmem:[#allocation3 + $0x20] sm:$0xff]
    %v87 = vld [vmem:[#allocation3 + $0x28] sm:$0xff]
    %v88 = vld [vmem:[#allocation3 + $0x30] sm:$0xff]
    %v89 = vld [vmem:[#allocation3 + $0x38] sm:$0xff]
    %v90 = vld [vmem:[#allocation3 + $0x40] sm:$0xff]
    %v91 = vld [vmem:[#allocation3 + $0x48] sm:$0xff]
    %v92 = vld [vmem:[#allocation3 + $0x50] sm:$0xff]
    %v93 = vld [vmem:[#allocation3 + $0x58] sm:$0xff]
    %v94 = vld [vmem:[#allocation3 + $0x60] sm:$0xff]
    %v95 = vld [vmem:[#allocation3 + $0x68] sm:$0xff]
    %v96 = vld [vmem:[#allocation3 + $0x70] sm:$0xff]
    %v97 = vld [vmem:[#allocation3 + $0x78] sm:$0xff]
    %v98 = vld [vmem:[#allocation3 + $0x80] sm:$0xff]
    %v99 = vld [vmem:[#allocation3 + $0x88] sm:$0xff]
    %v100 = vpack.c.bf16 %v83, %v82
    %v101 = vpack.c.bf16 %v85, %v84
    %v102 = vpack.c.bf16 %v87, %v86
    %v103 = vpack.c.bf16 %v89, %v88
    %v104 = vpack.c.bf16 %v91, %v90
    %v105 = vpack.c.bf16 %v93, %v92
    %v106 = vpack.c.bf16 %v95, %v94
    %v107 = vpack.c.bf16 %v97, %v96
    %v108 = vpack.c.bf16 %v99, %v98
    %v109 = vld [vmem:[#allocation6] sm:$0xff]
    %v110 = vld [vmem:[#allocation6 + $0x10] sm:$0xff]
    %v111 = vld [vmem:[#allocation6 + $0x20] sm:$0xff]
    %v112 = vld [vmem:[#allocation6 + $0x30] sm:$0xff]
    %v113 = vld [vmem:[#allocation6 + $0x40] sm:$0xff]
    %v114 = vld [vmem:[#allocation6 + $0x50] sm:$0xff]
    %v115 = vld [vmem:[#allocation6 + $0x60] sm:$0xff]
    %v116 = vld [vmem:[#allocation6 + $0x70] sm:$0xff]
    %v117 = vld [vmem:[#allocation6 + $0x80] sm:$0xff]
    %v118 = vld [vmem:[#allocation6 + $0x90] sm:$0xff]
    %v119 = vld [vmem:[#allocation6 + $0xa0] sm:$0xff]
    %v120 = vld [vmem:[#allocation6 + $0xb0] sm:$0xff]
    %v121 = vld [vmem:[#allocation6 + $0xc0] sm:$0xff]
    %v122 = vld [vmem:[#allocation6 + $0xd0] sm:$0xff]
    %v123 = vld [vmem:[#allocation6 + $0xe0] sm:$0xff]
    %v124 = vld [vmem:[#allocation6 + $0xf0] sm:$0xff]
    %v125 = vld [vmem:[#allocation8] sm:$0x3]
    %v127 = vperm.slane %v125, 0
    %v128 = vperm.slane %v125, 1
    %v147 = vunpack.c.l.b16 %v109
    %v148 = vunpack.c.h.b16 %v109
    %v149 = vunpack.c.l.b16 %v110
    %v150 = vunpack.c.h.b16 %v110
    %v151 = vunpack.c.l.b16 %v111
    %v152 = vunpack.c.h.b16 %v111
    %v153 = vunpack.c.l.b16 %v112
    %v154 = vunpack.c.h.b16 %v112
    %v155 = vunpack.c.l.b16 %v113
    %v156 = vunpack.c.h.b16 %v113
    %v157 = vunpack.c.l.b16 %v114
    %v158 = vunpack.c.h.b16 %v114
    %v159 = vunpack.c.l.b16 %v115
    %v160 = vunpack.c.h.b16 %v115
    %v161 = vunpack.c.l.b16 %v116
    %v162 = vunpack.c.h.b16 %v116
    %v163 = vunpack.c.l.b16 %v117
    %v164 = vunpack.c.h.b16 %v117
    %v165 = vunpack.c.l.b16 %v118
    %v166 = vunpack.c.h.b16 %v118
    %v167 = vunpack.c.l.b16 %v119
    %v168 = vunpack.c.h.b16 %v119
    %v169 = vunpack.c.l.b16 %v120
    %v170 = vunpack.c.h.b16 %v120
    %v171 = vunpack.c.l.b16 %v121
    %v172 = vunpack.c.h.b16 %v121
    %v173 = vunpack.c.l.b16 %v122
    %v174 = vunpack.c.h.b16 %v122
    %v175 = vunpack.c.l.b16 %v123
    %v176 = vunpack.c.h.b16 %v123
    %v177 = vunpack.c.l.b16 %v124
    %v178 = vunpack.c.h.b16 %v124
    %v179 = vpack.c.b16 %v149, %v147
    %v180 = vpack.c.b16 %v150, %v148
    %v181 = vpack.c.b16 %v153, %v151
    %v182 = vpack.c.b16 %v154, %v152
    %v183 = vpack.c.b16 %v157, %v155
    %v184 = vpack.c.b16 %v158, %v156
    %v185 = vpack.c.b16 %v161, %v159
    %v186 = vpack.c.b16 %v162, %v160
    %v187 = vpack.c.b16 %v165, %v163
    %v188 = vpack.c.b16 %v166, %v164
    %v189 = vpack.c.b16 %v169, %v167
    %v190 = vpack.c.b16 %v170, %v168
    %v191 = vpack.c.b16 %v173, %v171
    %v192 = vpack.c.b16 %v174, %v172
    %v193 = vpack.c.b16 %v177, %v175
    %v194 = vpack.c.b16 %v178, %v176
    %211 = vmatpush.bf16.msra.mxu0 %v193
    %212 = vmatpush.bf16.msra.mxu0 %v191
    %213 = vmatpush.bf16.msra.mxu0 %v189
    %214 = vmatpush.bf16.msra.mxu0 %v187
    %215 = vmatpush.bf16.msra.mxu0 %v185
    %216 = vmatpush.bf16.msra.mxu0 %v183
    %217 = vmatpush.bf16.msra.mxu0 %v181
    %218 = vmatpush.bf16.msra.mxu0 %v179
    %219 = vmatmul.bf16.gmra.mxu0 %v100
    %v220 = vpop.f32.mrf.mxu0
    %v221 = vadd.f32 %v127, %v220
    %v222 = vpop.f32.mrf.mxu0
    %v223 = vadd.f32 %v127, %v222
    %224 = vmatmul.bf16.gmra.mxu0 %v101
    %v225 = vpop.f32.mrf.mxu0
    %v226 = vadd.f32 %v127, %v225
    %v227 = vpop.f32.mrf.mxu0
    %v228 = vadd.f32 %v127, %v227
    %229 = vmatmul.bf16.gmra.mxu0 %v102
    %v230 = vpop.f32.mrf.mxu0
    %v231 = vadd.f32 %v127, %v230
    %v232 = vpop.f32.mrf.mxu0
    %v233 = vadd.f32 %v127, %v232
    %234 = vmatmul.bf16.gmra.mxu0 %v103
    %v235 = vpop.f32.mrf.mxu0
    %v236 = vadd.f32 %v127, %v235
    %v237 = vpop.f32.mrf.mxu0
    %v238 = vadd.f32 %v127, %v237
    %239 = vmatmul.bf16.gmra.mxu0 %v104
    %v240 = vpop.f32.mrf.mxu0
    %v241 = vadd.f32 %v127, %v240
    %v242 = vpop.f32.mrf.mxu0
    %v243 = vadd.f32 %v127, %v242
    %244 = vmatmul.bf16.gmra.mxu0 %v105
    %v245 = vpop.f32.mrf.mxu0
    %v246 = vadd.f32 %v127, %v245
    %v247 = vpop.f32.mrf.mxu0
    %v248 = vadd.f32 %v127, %v247
    %249 = vmatmul.bf16.gmra.mxu0 %v106
    %v250 = vpop.f32.mrf.mxu0
    %v251 = vadd.f32 %v127, %v250
    %v252 = vpop.f32.mrf.mxu0
    %v253 = vadd.f32 %v127, %v252
    %254 = vmatmul.bf16.gmra.mxu0 %v107
    %v255 = vpop.f32.mrf.mxu0
    %v256 = vadd.f32 %v127, %v255
    %v257 = vpop.f32.mrf.mxu0
    %v258 = vadd.f32 %v127, %v257
    %259 = vmatmul.bf16.gmra.mxu0 %v108
    %v260 = vpop.f32.mrf.mxu0
    %v261 = vadd.f32 %v127, %v260
    %v262 = vpop.f32.mrf.mxu0
    %v263 = vadd.f32 %v127, %v262
    %264 = vdwg.mxu0
    %265 = vmatpush.bf16.msra.mxu0 %v194
    %266 = vmatpush.bf16.msra.mxu0 %v192
    %267 = vmatpush.bf16.msra.mxu0 %v190
    %268 = vmatpush.bf16.msra.mxu0 %v188
    %269 = vmatpush.bf16.msra.mxu0 %v186
    %270 = vmatpush.bf16.msra.mxu0 %v184
    %271 = vmatpush.bf16.msra.mxu0 %v182
    %272 = vmatpush.bf16.msra.mxu0 %v180
    %273 = vmatmul.bf16.gmra.mxu0 %v100
    %v274 = vpop.f32.mrf.mxu0
    %v275 = vadd.f32 %v128, %v274
    %v276 = vpop.f32.mrf.mxu0
    %v277 = vadd.f32 %v128, %v276
    %278 = vmatmul.bf16.gmra.mxu0 %v101
    %v279 = vpop.f32.mrf.mxu0
    %v280 = vadd.f32 %v128, %v279
    %v281 = vpop.f32.mrf.mxu0
    %v282 = vadd.f32 %v128, %v281
    %283 = vmatmul.bf16.gmra.mxu0 %v102
    %v284 = vpop.f32.mrf.mxu0
    %v285 = vadd.f32 %v128, %v284
    %v286 = vpop.f32.mrf.mxu0
    %v287 = vadd.f32 %v128, %v286
    %288 = vmatmul.bf16.gmra.mxu0 %v103
    %v289 = vpop.f32.mrf.mxu0
    %v290 = vadd.f32 %v128, %v289
    %v291 = vpop.f32.mrf.mxu0
    %v292 = vadd.f32 %v128, %v291
    %293 = vmatmul.bf16.gmra.mxu0 %v104
    %v294 = vpop.f32.mrf.mxu0
    %v295 = vadd.f32 %v128, %v294
    %v296 = vpop.f32.mrf.mxu0
    %v297 = vadd.f32 %v128, %v296
    %298 = vmatmul.bf16.gmra.mxu0 %v105
    %v299 = vpop.f32.mrf.mxu0
    %v300 = vadd.f32 %v128, %v299
    %v301 = vpop.f32.mrf.mxu0
    %v302 = vadd.f32 %v128, %v301
    %303 = vmatmul.bf16.gmra.mxu0 %v106
    %v304 = vpop.f32.mrf.mxu0
    %v305 = vadd.f32 %v128, %v304
    %v306 = vpop.f32.mrf.mxu0
    %v307 = vadd.f32 %v128, %v306
    %308 = vmatmul.bf16.gmra.mxu0 %v107
    %v309 = vpop.f32.mrf.mxu0
    %v310 = vadd.f32 %v128, %v309
    %v311 = vpop.f32.mrf.mxu0
    %v312 = vadd.f32 %v128, %v311
    %313 = vmatmul.bf16.gmra.mxu0 %v108
    %v314 = vpop.f32.mrf.mxu0
    %v315 = vadd.f32 %v128, %v314
    %v316 = vpop.f32.mrf.mxu0
    %v317 = vadd.f32 %v128, %v316
    %318 = vdwg.mxu0
    %v319 = vmul.f32 %v221, 0.5
    %v320 = vmul.f32 %v275, 0.5
    %v321 = vmul.f32 %v223, 0.5
    %v322 = vmul.f32 %v277, 0.5
    %v323 = vmul.f32 %v226, 0.5
    %v324 = vmul.f32 %v280, 0.5
    %v325 = vmul.f32 %v228, 0.5
    %v326 = vmul.f32 %v282, 0.5
    %v327 = vmul.f32 %v231, 0.5
    %v328 = vmul.f32 %v285, 0.5
    %v329 = vmul.f32 %v233, 0.5
    %v330 = vmul.f32 %v287, 0.5
    %v331 = vmul.f32 %v236, 0.5
    %v332 = vmul.f32 %v290, 0.5
    %v333 = vmul.f32 %v238, 0.5
    %v334 = vmul.f32 %v292, 0.5
    %v335 = vmul.f32 %v241, 0.5
    %v336 = vmul.f32 %v295, 0.5
    %v337 = vmul.f32 %v243, 0.5
    %v338 = vmul.f32 %v297, 0.5
    %v339 = vmul.f32 %v246, 0.5
    %v340 = vmul.f32 %v300, 0.5
    %v341 = vmul.f32 %v248, 0.5
    %v342 = vmul.f32 %v302, 0.5
    %v343 = vmul.f32 %v251, 0.5
    %v344 = vmul.f32 %v305, 0.5
    %v345 = vmul.f32 %v253, 0.5
    %v346 = vmul.f32 %v307, 0.5
    %v347 = vmul.f32 %v256, 0.5
    %v348 = vmul.f32 %v310, 0.5
    %v349 = vmul.f32 %v258, 0.5
    %v350 = vmul.f32 %v312, 0.5
    %v351 = vmul.f32 %v261, 0.5
    %v352 = vmul.f32 %v315, 0.5
    %v353 = vmul.f32 %v263, 0.5
    %v354 = vmul.f32 %v317, 0.5
    %v355 = vmul.f32 %v221, 0.044715
    %v356 = vmul.f32 %v275, 0.044715
    %v357 = vmul.f32 %v223, 0.044715
    %v358 = vmul.f32 %v277, 0.044715
    %v359 = vmul.f32 %v226, 0.044715
    %v360 = vmul.f32 %v280, 0.044715
    %v361 = vmul.f32 %v228, 0.044715
    %v362 = vmul.f32 %v282, 0.044715
    %v363 = vmul.f32 %v231, 0.044715
    %v364 = vmul.f32 %v285, 0.044715
    %v365 = vmul.f32 %v233, 0.044715
    %v366 = vmul.f32 %v287, 0.044715
    %v367 = vmul.f32 %v236, 0.044715
    %v368 = vmul.f32 %v290, 0.044715
    %v369 = vmul.f32 %v238, 0.044715
    %v370 = vmul.f32 %v292, 0.044715
    %v371 = vmul.f32 %v241, 0.044715
    %v372 = vmul.f32 %v295, 0.044715
    %v373 = vmul.f32 %v243, 0.044715
    %v374 = vmul.f32 %v297, 0.044715
    %v375 = vmul.f32 %v246, 0.044715
    %v376 = vmul.f32 %v300, 0.044715
    %v377 = vmul.f32 %v248, 0.044715
    %v378 = vmul.f32 %v302, 0.044715
    %v379 = vmul.f32 %v251, 0.044715
    %v380 = vmul.f32 %v305, 0.044715
    %v381 = vmul.f32 %v253, 0.044715
    %v382 = vmul.f32 %v307, 0.044715
    %v383 = vmul.f32 %v256, 0.044715
    %v384 = vmul.f32 %v310, 0.044715
    %v385 = vmul.f32 %v258, 0.044715
    %v386 = vmul.f32 %v312, 0.044715
    %v387 = vmul.f32 %v261, 0.044715
    %v388 = vmul.f32 %v315, 0.044715
    %v389 = vmul.f32 %v263, 0.044715
    %v390 = vmul.f32 %v317, 0.044715
    %v391 = vmul.f32 %v355, %v221
    %v392 = vmul.f32 %v356, %v275
    %v393 = vmul.f32 %v357, %v223
    %v394 = vmul.f32 %v358, %v277
    %v395 = vmul.f32 %v359, %v226
    %v396 = vmul.f32 %v360, %v280
    %v397 = vmul.f32 %v361, %v228
    %v398 = vmul.f32 %v362, %v282
    %v399 = vmul.f32 %v363, %v231
    %v400 = vmul.f32 %v364, %v285
    %v401 = vmul.f32 %v365, %v233
    %v402 = vmul.f32 %v366, %v287
    %v403 = vmul.f32 %v367, %v236
    %v404 = vmul.f32 %v368, %v290
    %v405 = vmul.f32 %v369, %v238
    %v406 = vmul.f32 %v370, %v292
    %v407 = vmul.f32 %v371, %v241
    %v408 = vmul.f32 %v372, %v295
    %v409 = vmul.f32 %v373, %v243
    %v410 = vmul.f32 %v374, %v297
    %v411 = vmul.f32 %v375, %v246
    %v412 = vmul.f32 %v376, %v300
    %v413 = vmul.f32 %v377, %v248
    %v414 = vmul.f32 %v378, %v302
    %v415 = vmul.f32 %v379, %v251
    %v416 = vmul.f32 %v380, %v305
    %v417 = vmul.f32 %v381, %v253
    %v418 = vmul.f32 %v382, %v307
    %v419 = vmul.f32 %v383, %v256
    %v420 = vmul.f32 %v384, %v310
    %v421 = vmul.f32 %v385, %v258
    %v422 = vmul.f32 %v386, %v312
    %v423 = vmul.f32 %v387, %v261
    %v424 = vmul.f32 %v388, %v315
    %v425 = vmul.f32 %v389, %v263
    %v426 = vmul.f32 %v390, %v317
    %v427 = vmul.f32 %v391, %v221
    %v428 = vmul.f32 %v392, %v275
    %v429 = vmul.f32 %v393, %v223
    %v430 = vmul.f32 %v394, %v277
    %v431 = vmul.f32 %v395, %v226
    %v432 = vmul.f32 %v396, %v280
    %v433 = vmul.f32 %v397, %v228
    %v434 = vmul.f32 %v398, %v282
    %v435 = vmul.f32 %v399, %v231
    %v436 = vmul.f32 %v400, %v285
    %v437 = vmul.f32 %v401, %v233
    %v438 = vmul.f32 %v402, %v287
    %v439 = vmul.f32 %v403, %v236
    %v440 = vmul.f32 %v404, %v290
    %v441 = vmul.f32 %v405, %v238
    %v442 = vmul.f32 %v406, %v292
    %v443 = vmul.f32 %v407, %v241
    %v444 = vmul.f32 %v408, %v295
    %v445 = vmul.f32 %v409, %v243
    %v446 = vmul.f32 %v410, %v297
    %v447 = vmul.f32 %v411, %v246
    %v448 = vmul.f32 %v412, %v300
    %v449 = vmul.f32 %v413, %v248
    %v450 = vmul.f32 %v414, %v302
    %v451 = vmul.f32 %v415, %v251
    %v452 = vmul.f32 %v416, %v305
    %v453 = vmul.f32 %v417, %v253
    %v454 = vmul.f32 %v418, %v307
    %v455 = vmul.f32 %v419, %v256
    %v456 = vmul.f32 %v420, %v310
    %v457 = vmul.f32 %v421, %v258
    %v458 = vmul.f32 %v422, %v312
    %v459 = vmul.f32 %v423, %v261
    %v460 = vmul.f32 %v424, %v315
    %v461 = vmul.f32 %v425, %v263
    %v462 = vmul.f32 %v426, %v317
    %v463 = vadd.f32 %v221, %v427
    %v464 = vadd.f32 %v275, %v428
    %v465 = vadd.f32 %v223, %v429
    %v466 = vadd.f32 %v277, %v430
    %v467 = vadd.f32 %v226, %v431
    %v468 = vadd.f32 %v280, %v432
    %v469 = vadd.f32 %v228, %v433
    %v470 = vadd.f32 %v282, %v434
    %v471 = vadd.f32 %v231, %v435
    %v472 = vadd.f32 %v285, %v436
    %v473 = vadd.f32 %v233, %v437
    %v474 = vadd.f32 %v287, %v438
    %v475 = vadd.f32 %v236, %v439
    %v476 = vadd.f32 %v290, %v440
    %v477 = vadd.f32 %v238, %v441
    %v478 = vadd.f32 %v292, %v442
    %v479 = vadd.f32 %v241, %v443
    %v480 = vadd.f32 %v295, %v444
    %v481 = vadd.f32 %v243, %v445
    %v482 = vadd.f32 %v297, %v446
    %v483 = vadd.f32 %v246, %v447
    %v484 = vadd.f32 %v300, %v448
    %v485 = vadd.f32 %v248, %v449
    %v486 = vadd.f32 %v302, %v450
    %v487 = vadd.f32 %v251, %v451
    %v488 = vadd.f32 %v305, %v452
    %v489 = vadd.f32 %v253, %v453
    %v490 = vadd.f32 %v307, %v454
    %v491 = vadd.f32 %v256, %v455
    %v492 = vadd.f32 %v310, %v456
    %v493 = vadd.f32 %v258, %v457
    %v494 = vadd.f32 %v312, %v458
    %v495 = vadd.f32 %v261, %v459
    %v496 = vadd.f32 %v315, %v460
    %v497 = vadd.f32 %v263, %v461
    %v498 = vadd.f32 %v317, %v462
    %v499 = vmul.f32 %v463, 0.7978846
    %v500 = vmul.f32 %v464, 0.7978846
    %v501 = vmul.f32 %v465, 0.7978846
    %v502 = vmul.f32 %v466, 0.7978846
    %v503 = vmul.f32 %v467, 0.7978846
    %v504 = vmul.f32 %v468, 0.7978846
    %v505 = vmul.f32 %v469, 0.7978846
    %v506 = vmul.f32 %v470, 0.7978846
    %v507 = vmul.f32 %v471, 0.7978846
    %v508 = vmul.f32 %v472, 0.7978846
    %v509 = vmul.f32 %v473, 0.7978846
    %v510 = vmul.f32 %v474, 0.7978846
    %v511 = vmul.f32 %v475, 0.7978846
    %v512 = vmul.f32 %v476, 0.7978846
    %v513 = vmul.f32 %v477, 0.7978846
    %v514 = vmul.f32 %v478, 0.7978846
    %v515 = vmul.f32 %v479, 0.7978846
    %v516 = vmul.f32 %v480, 0.7978846
    %v517 = vmul.f32 %v481, 0.7978846
    %v518 = vmul.f32 %v482, 0.7978846
    %v519 = vmul.f32 %v483, 0.7978846
    %v520 = vmul.f32 %v484, 0.7978846
    %v521 = vmul.f32 %v485, 0.7978846
    %v522 = vmul.f32 %v486, 0.7978846
    %v523 = vmul.f32 %v487, 0.7978846
    %v524 = vmul.f32 %v488, 0.7978846
    %v525 = vmul.f32 %v489, 0.7978846
    %v526 = vmul.f32 %v490, 0.7978846
    %v527 = vmul.f32 %v491, 0.7978846
    %v528 = vmul.f32 %v492, 0.7978846
    %v529 = vmul.f32 %v493, 0.7978846
    %v530 = vmul.f32 %v494, 0.7978846
    %v531 = vmul.f32 %v495, 0.7978846
    %v532 = vmul.f32 %v496, 0.7978846
    %v533 = vmul.f32 %v497, 0.7978846
    %v534 = vmul.f32 %v498, 0.7978846
    %v535 = vtanh.pop %v499
    %v536 = vtanh.pop %v500
    %v537 = vtanh.pop %v501
    %v538 = vtanh.pop %v502
    %v539 = vtanh.pop %v503
    %v540 = vtanh.pop %v504
    %v541 = vtanh.pop %v505
    %v542 = vtanh.pop %v506
    %v543 = vtanh.pop %v507
    %v544 = vtanh.pop %v508
    %v545 = vtanh.pop %v509
    %v546 = vtanh.pop %v510
    %v547 = vtanh.pop %v511
    %v548 = vtanh.pop %v512
    %v549 = vtanh.pop %v513
    %v550 = vtanh.pop %v514
    %v551 = vtanh.pop %v515
    %v552 = vtanh.pop %v516
    %v553 = vtanh.pop %v517
    %v554 = vtanh.pop %v518
    %v555 = vtanh.pop %v519
    %v556 = vtanh.pop %v520
    %v557 = vtanh.pop %v521
    %v558 = vtanh.pop %v522
    %v559 = vtanh.pop %v523
    %v560 = vtanh.pop %v524
    %v561 = vtanh.pop %v525
    %v562 = vtanh.pop %v526
    %v563 = vtanh.pop %v527
    %v564 = vtanh.pop %v528
    %v565 = vtanh.pop %v529
    %v566 = vtanh.pop %v530
    %v567 = vtanh.pop %v531
    %v568 = vtanh.pop %v532
    %v569 = vtanh.pop %v533
    %v570 = vtanh.pop %v534
    %v571 = vadd.f32 %v535, 1.0
    %v572 = vadd.f32 %v536, 1.0
    %v573 = vadd.f32 %v537, 1.0
    %v574 = vadd.f32 %v538, 1.0
    %v575 = vadd.f32 %v539, 1.0
    %v576 = vadd.f32 %v540, 1.0
    %v577 = vadd.f32 %v541, 1.0
    %v578 = vadd.f32 %v542, 1.0
    %v579 = vadd.f32 %v543, 1.0
    %v580 = vadd.f32 %v544, 1.0
    %v581 = vadd.f32 %v545, 1.0
    %v582 = vadd.f32 %v546, 1.0
    %v583 = vadd.f32 %v547, 1.0
    %v584 = vadd.f32 %v548, 1.0
    %v585 = vadd.f32 %v549, 1.0
    %v586 = vadd.f32 %v550, 1.0
    %v587 = vadd.f32 %v551, 1.0
    %v588 = vadd.f32 %v552, 1.0
    %v589 = vadd.f32 %v553, 1.0
    %v590 = vadd.f32 %v554, 1.0
    %v591 = vadd.f32 %v555, 1.0
    %v592 = vadd.f32 %v556, 1.0
    %v593 = vadd.f32 %v557, 1.0
    %v594 = vadd.f32 %v558, 1.0
    %v595 = vadd.f32 %v559, 1.0
    %v596 = vadd.f32 %v560, 1.0
    %v597 = vadd.f32 %v561, 1.0
    %v598 = vadd.f32 %v562, 1.0
    %v599 = vadd.f32 %v563, 1.0
    %v600 = vadd.f32 %v564, 1.0
    %v601 = vadd.f32 %v565, 1.0
    %v602 = vadd.f32 %v566, 1.0
    %v603 = vadd.f32 %v567, 1.0
    %v604 = vadd.f32 %v568, 1.0
    %v605 = vadd.f32 %v569, 1.0
    %v606 = vadd.f32 %v570, 1.0
    %v607 = vmul.f32 %v319, %v571
    %v608 = vmul.f32 %v320, %v572
    %v609 = vmul.f32 %v321, %v573
    %v610 = vmul.f32 %v322, %v574
    %v611 = vmul.f32 %v323, %v575
    %v612 = vmul.f32 %v324, %v576
    %v613 = vmul.f32 %v325, %v577
    %v614 = vmul.f32 %v326, %v578
    %v615 = vmul.f32 %v327, %v579
    %v616 = vmul.f32 %v328, %v580
    %v617 = vmul.f32 %v329, %v581
    %v618 = vmul.f32 %v330, %v582
    %v619 = vmul.f32 %v331, %v583
    %v620 = vmul.f32 %v332, %v584
    %v621 = vmul.f32 %v333, %v585
    %v622 = vmul.f32 %v334, %v586
    %v623 = vmul.f32 %v335, %v587
    %v624 = vmul.f32 %v336, %v588
    %v625 = vmul.f32 %v337, %v589
    %v626 = vmul.f32 %v338, %v590
    %v627 = vmul.f32 %v339, %v591
    %v628 = vmul.f32 %v340, %v592
    %v629 = vmul.f32 %v341, %v593
    %v630 = vmul.f32 %v342, %v594
    %v631 = vmul.f32 %v343, %v595
    %v632 = vmul.f32 %v344, %v596
    %v633 = vmul.f32 %v345, %v597
    %v634 = vmul.f32 %v346, %v598
    %v635 = vmul.f32 %v347, %v599
    %v636 = vmul.f32 %v348, %v600
    %v637 = vmul.f32 %v349, %v601
    %v638 = vmul.f32 %v350, %v602
    %v639 = vmul.f32 %v351, %v603
    %v640 = vmul.f32 %v352, %v604
    %v641 = vmul.f32 %v353, %v605
    %v642 = vmul.f32 %v354, %v606
    %v643 = vpack.c.bf16 %v609, %v607
    %v644 = vpack.c.bf16 %v610, %v608
    %v645 = vpack.c.bf16 %v613, %v611
    %v646 = vpack.c.bf16 %v614, %v612
    %v647 = vpack.c.bf16 %v617, %v615
    %v648 = vpack.c.bf16 %v618, %v616
    %v649 = vpack.c.bf16 %v621, %v619
    %v650 = vpack.c.bf16 %v622, %v620
    %v651 = vpack.c.bf16 %v625, %v623
    %v652 = vpack.c.bf16 %v626, %v624
    %v653 = vpack.c.bf16 %v629, %v627
    %v654 = vpack.c.bf16 %v630, %v628
    %v655 = vpack.c.bf16 %v633, %v631
    %v656 = vpack.c.bf16 %v634, %v632
    %v657 = vpack.c.bf16 %v637, %v635
    %v658 = vpack.c.bf16 %v638, %v636
    %v659 = vpack.c.bf16 %v641, %v639
    %v660 = vpack.c.bf16 %v642, %v640
    %v661 = vld [vmem:[#allocation9] sm:$0xf]
    %v662 = vld [vmem:[#allocation9 + $0x4] sm:$0xf]
    %v663 = vld [vmem:[#allocation9 + $0x8] sm:$0xf]
    %v664 = vld [vmem:[#allocation9 + $0xc] sm:$0xf]
    %v665 = vld [vmem:[#allocation9 + $0x10] sm:$0xf]
    %v666 = vld [vmem:[#allocation9 + $0x14] sm:$0xf]
    %v667 = vld [vmem:[#allocation9 + $0x18] sm:$0xf]
    %v668 = vld [vmem:[#allocation9 + $0x1c] sm:$0xf]
    %v669 = vld [vmem:[#allocation9 + $0x20] sm:$0xf]
    %v670 = vld [vmem:[#allocation9 + $0x24] sm:$0xf]
    %v671 = vld [vmem:[#allocation9 + $0x28] sm:$0xf]
    %v672 = vld [vmem:[#allocation9 + $0x2c] sm:$0xf]
    %v673 = vld [vmem:[#allocation9 + $0x30] sm:$0xf]
    %v674 = vld [vmem:[#allocation9 + $0x34] sm:$0xf]
    %v675 = vld [vmem:[#allocation9 + $0x38] sm:$0xf]
    %v676 = vld [vmem:[#allocation9 + $0x3c] sm:$0xf]
    %v677 = vld [vmem:[#allocation9 + $0x40] sm:$0xf]
    %v678 = vld [vmem:[#allocation9 + $0x44] sm:$0xf]
    %v679 = vld [vmem:[#allocation9 + $0x48] sm:$0xf]
    %v680 = vld [vmem:[#allocation9 + $0x4c] sm:$0xf]
    %v681 = vld [vmem:[#allocation9 + $0x50] sm:$0xf]
    %v682 = vld [vmem:[#allocation9 + $0x54] sm:$0xf]
    %v683 = vld [vmem:[#allocation9 + $0x58] sm:$0xf]
    %v684 = vld [vmem:[#allocation9 + $0x5c] sm:$0xf]
    %v685 = vld [vmem:[#allocation9 + $0x60] sm:$0xf]
    %v686 = vld [vmem:[#allocation9 + $0x64] sm:$0xf]
    %v687 = vld [vmem:[#allocation9 + $0x68] sm:$0xf]
    %v688 = vld [vmem:[#allocation9 + $0x6c] sm:$0xf]
    %v689 = vld [vmem:[#allocation9 + $0x70] sm:$0xf]
    %v690 = vld [vmem:[#allocation9 + $0x74] sm:$0xf]
    %v691 = vld [vmem:[#allocation9 + $0x78] sm:$0xf]
    %v692 = vld [vmem:[#allocation9 + $0x7c] sm:$0xf]
    %v725 = vunpack.c.l.b16 %v661
    %v726 = vunpack.c.l.b16 %v662
    %v727 = vunpack.c.l.b16 %v663
    %v728 = vunpack.c.l.b16 %v664
    %v729 = vunpack.c.l.b16 %v665
    %v730 = vunpack.c.l.b16 %v666
    %v731 = vunpack.c.l.b16 %v667
    %v732 = vunpack.c.l.b16 %v668
    %v733 = vunpack.c.l.b16 %v669
    %v734 = vunpack.c.l.b16 %v670
    %v735 = vunpack.c.l.b16 %v671
    %v736 = vunpack.c.l.b16 %v672
    %v737 = vunpack.c.l.b16 %v673
    %v738 = vunpack.c.l.b16 %v674
    %v739 = vunpack.c.l.b16 %v675
    %v740 = vunpack.c.l.b16 %v676
    %v741 = vunpack.c.l.b16 %v677
    %v742 = vunpack.c.l.b16 %v678
    %v743 = vunpack.c.l.b16 %v679
    %v744 = vunpack.c.l.b16 %v680
    %v745 = vunpack.c.l.b16 %v681
    %v746 = vunpack.c.l.b16 %v682
    %v747 = vunpack.c.l.b16 %v683
    %v748 = vunpack.c.l.b16 %v684
    %v749 = vunpack.c.l.b16 %v685
    %v750 = vunpack.c.l.b16 %v686
    %v751 = vunpack.c.l.b16 %v687
    %v752 = vunpack.c.l.b16 %v688
    %v753 = vunpack.c.l.b16 %v689
    %v754 = vunpack.c.l.b16 %v690
    %v755 = vunpack.c.l.b16 %v691
    %v756 = vunpack.c.l.b16 %v692
    %v757 = vpack.c.b16 %v726, %v725
    %v758 = vpack.c.b16 %v728, %v727
    %v759 = vpack.c.b16 %v730, %v729
    %v760 = vpack.c.b16 %v732, %v731
    %v761 = vpack.c.b16 %v734, %v733
    %v762 = vpack.c.b16 %v736, %v735
    %v763 = vpack.c.b16 %v738, %v737
    %v764 = vpack.c.b16 %v740, %v739
    %v765 = vpack.c.b16 %v742, %v741
    %v766 = vpack.c.b16 %v744, %v743
    %v767 = vpack.c.b16 %v746, %v745
    %v768 = vpack.c.b16 %v748, %v747
    %v769 = vpack.c.b16 %v750, %v749
    %v770 = vpack.c.b16 %v752, %v751
    %v771 = vpack.c.b16 %v754, %v753
    %v772 = vpack.c.b16 %v756, %v755
    %789 = vmatpush.bf16.msra.mxu0 %v764
    %790 = vmatpush.bf16.msra.mxu0 %v763
    %791 = vmatpush.bf16.msra.mxu0 %v762
    %792 = vmatpush.bf16.msra.mxu0 %v761
    %793 = vmatpush.bf16.msra.mxu0 %v760
    %794 = vmatpush.bf16.msra.mxu0 %v759
    %795 = vmatpush.bf16.msra.mxu0 %v758
    %796 = vmatpush.bf16.msra.mxu0 %v757
    %797 = vmatmul.bf16.gmra.mxu0 %v643
    %v798 = vpop.f32.mrf.mxu0
    %v799 = vadd.f32 0.0, %v798
    %v800 = vpop.f32.mrf.mxu0
    %v801 = vadd.f32 0.0, %v800
    %802 = vmatmul.bf16.gmra.mxu0 %v645
    %v803 = vpop.f32.mrf.mxu0
    %v804 = vadd.f32 0.0, %v803
    %v805 = vpop.f32.mrf.mxu0
    %v806 = vadd.f32 0.0, %v805
    %807 = vmatmul.bf16.gmra.mxu0 %v647
    %v808 = vpop.f32.mrf.mxu0
    %v809 = vadd.f32 0.0, %v808
    %v810 = vpop.f32.mrf.mxu0
    %v811 = vadd.f32 0.0, %v810
    %812 = vmatmul.bf16.gmra.mxu0 %v649
    %v813 = vpop.f32.mrf.mxu0
    %v814 = vadd.f32 0.0, %v813
    %v815 = vpop.f32.mrf.mxu0
    %v816 = vadd.f32 0.0, %v815
    %817 = vmatmul.bf16.gmra.mxu0 %v651
    %v818 = vpop.f32.mrf.mxu0
    %v819 = vadd.f32 0.0, %v818
    %v820 = vpop.f32.mrf.mxu0
    %v821 = vadd.f32 0.0, %v820
    %822 = vmatmul.bf16.gmra.mxu0 %v653
    %v823 = vpop.f32.mrf.mxu0
    %v824 = vadd.f32 0.0, %v823
    %v825 = vpop.f32.mrf.mxu0
    %v826 = vadd.f32 0.0, %v825
    %827 = vmatmul.bf16.gmra.mxu0 %v655
    %v828 = vpop.f32.mrf.mxu0
    %v829 = vadd.f32 0.0, %v828
    %v830 = vpop.f32.mrf.mxu0
    %v831 = vadd.f32 0.0, %v830
    %832 = vmatmul.bf16.gmra.mxu0 %v657
    %v833 = vpop.f32.mrf.mxu0
    %v834 = vadd.f32 0.0, %v833
    %v835 = vpop.f32.mrf.mxu0
    %v836 = vadd.f32 0.0, %v835
    %837 = vmatmul.bf16.gmra.mxu0 %v659
    %v838 = vpop.f32.mrf.mxu0
    %v839 = vadd.f32 0.0, %v838
    %v840 = vpop.f32.mrf.mxu0
    %v841 = vadd.f32 0.0, %v840
    %842 = vdwg.mxu0
    %843 = vmatpush.bf16.msra.mxu0 %v772
    %844 = vmatpush.bf16.msra.mxu0 %v771
    %845 = vmatpush.bf16.msra.mxu0 %v770
    %846 = vmatpush.bf16.msra.mxu0 %v769
    %847 = vmatpush.bf16.msra.mxu0 %v768
    %848 = vmatpush.bf16.msra.mxu0 %v767
    %849 = vmatpush.bf16.msra.mxu0 %v766
    %850 = vmatpush.bf16.msra.mxu0 %v765
    %851 = vmatmul.bf16.gmra.mxu0 %v644
    %v852 = vpop.f32.mrf.mxu0
    %v853 = vadd.f32 %v799, %v852
    %v854 = vpop.f32.mrf.mxu0
    %v855 = vadd.f32 %v801, %v854
    %856 = vmatmul.bf16.gmra.mxu0 %v646
    %v857 = vpop.f32.mrf.mxu0
    %v858 = vadd.f32 %v804, %v857
    %v859 = vpop.f32.mrf.mxu0
    %v860 = vadd.f32 %v806, %v859
    %861 = vmatmul.bf16.gmra.mxu0 %v648
    %v862 = vpop.f32.mrf.mxu0
    %v863 = vadd.f32 %v809, %v862
    %v864 = vpop.f32.mrf.mxu0
    %v865 = vadd.f32 %v811, %v864
    %866 = vmatmul.bf16.gmra.mxu0 %v650
    %v867 = vpop.f32.mrf.mxu0
    %v868 = vadd.f32 %v814, %v867
    %v869 = vpop.f32.mrf.mxu0
    %v870 = vadd.f32 %v816, %v869
    %871 = vmatmul.bf16.gmra.mxu0 %v652
    %v872 = vpop.f32.mrf.mxu0
    %v873 = vadd.f32 %v819, %v872
    %v874 = vpop.f32.mrf.mxu0
    %v875 = vadd.f32 %v821, %v874
    %876 = vmatmul.bf16.gmra.mxu0 %v654
    %v877 = vpop.f32.mrf.mxu0
    %v878 = vadd.f32 %v824, %v877
    %v879 = vpop.f32.mrf.mxu0
    %v880 = vadd.f32 %v826, %v879
    %881 = vmatmul.bf16.gmra.mxu0 %v656
    %v882 = vpop.f32.mrf.mxu0
    %v883 = vadd.f32 %v829, %v882
    %v884 = vpop.f32.mrf.mxu0
    %v885 = vadd.f32 %v831, %v884
    %886 = vmatmul.bf16.gmra.mxu0 %v658
    %v887 = vpop.f32.mrf.mxu0
    %v888 = vadd.f32 %v834, %v887
    %v889 = vpop.f32.mrf.mxu0
    %v890 = vadd.f32 %v836, %v889
    %891 = vmatmul.bf16.gmra.mxu0 %v660
    %v892 = vpop.f32.mrf.mxu0
    %v893 = vadd.f32 %v839, %v892
    %v894 = vpop.f32.mrf.mxu0
    %v895 = vadd.f32 %v841, %v894
    %896 = vdwg.mxu0
    %897 = vst [vmem:[#allocation2] sm:$0xff] %v853
    %898 = vst [vmem:[#allocation2 + $0x8] sm:$0xff] %v855
    %899 = vst [vmem:[#allocation2 + $0x10] sm:$0xff] %v858
    %900 = vst [vmem:[#allocation2 + $0x18] sm:$0xff] %v860
    %901 = vst [vmem:[#allocation2 + $0x20] sm:$0xff] %v863
    %902 = vst [vmem:[#allocation2 + $0x28] sm:$0xff] %v865
    %903 = vst [vmem:[#allocation2 + $0x30] sm:$0xff] %v868
    %904 = vst [vmem:[#allocation2 + $0x38] sm:$0xff] %v870
    %905 = vst [vmem:[#allocation2 + $0x40] sm:$0xff] %v873
    %906 = vst [vmem:[#allocation2 + $0x48] sm:$0xff] %v875
    %907 = vst [vmem:[#allocation2 + $0x50] sm:$0xff] %v878
    %908 = vst [vmem:[#allocation2 + $0x58] sm:$0xff] %v880
    %909 = vst [vmem:[#allocation2 + $0x60] sm:$0xff] %v883
    %910 = vst [vmem:[#allocation2 + $0x68] sm:$0xff] %v885
    %911 = vst [vmem:[#allocation2 + $0x70] sm:$0xff] %v888
    %912 = vst [vmem:[#allocation2 + $0x78] sm:$0xff] %v890
    %913 = vst [vmem:[#allocation2 + $0x80] sm:$0xff] %v893
    %914 = vst [vmem:[#allocation2 + $0x88] sm:$0xff] %v895
    %v915 = vld [vmem:[#allocation6 + $0x8] sm:$0xff]
    %v916 = vld [vmem:[#allocation6 + $0x18] sm:$0xff]
    %v917 = vld [vmem:[#allocation6 + $0x28] sm:$0xff]
    %v918 = vld [vmem:[#allocation6 + $0x38] sm:$0xff]
    %v919 = vld [vmem:[#allocation6 + $0x48] sm:$0xff]
    %v920 = vld [vmem:[#allocation6 + $0x58] sm:$0xff]
    %v921 = vld [vmem:[#allocation6 + $0x68] sm:$0xff]
    %v922 = vld [vmem:[#allocation6 + $0x78] sm:$0xff]
    %v923 = vld [vmem:[#allocation6 + $0x88] sm:$0xff]
    %v924 = vld [vmem:[#allocation6 + $0x98] sm:$0xff]
    %v925 = vld [vmem:[#allocation6 + $0xa8] sm:$0xff]
    %v926 = vld [vmem:[#allocation6 + $0xb8] sm:$0xff]
    %v927 = vld [vmem:[#allocation6 + $0xc8] sm:$0xff]
    %v928 = vld [vmem:[#allocation6 + $0xd8] sm:$0xff]
    %v929 = vld [vmem:[#allocation6 + $0xe8] sm:$0xff]
    %v930 = vld [vmem:[#allocation6 + $0xf8] sm:$0xff]
    %v931 = vld [vmem:[#allocation8 + $0x2] sm:$0x3]
    %v933 = vperm.slane %v931, 0
    %v934 = vperm.slane %v931, 1
    %v953 = vunpack.c.l.b16 %v915
    %v954 = vunpack.c.h.b16 %v915
    %v955 = vunpack.c.l.b16 %v916
    %v956 = vunpack.c.h.b16 %v916
    %v957 = vunpack.c.l.b16 %v917
    %v958 = vunpack.c.h.b16 %v917
    %v959 = vunpack.c.l.b16 %v918
    %v960 = vunpack.c.h.b16 %v918
    %v961 = vunpack.c.l.b16 %v919
    %v962 = vunpack.c.h.b16 %v919
    %v963 = vunpack.c.l.b16 %v920
    %v964 = vunpack.c.h.b16 %v920
    %v965 = vunpack.c.l.b16 %v921
    %v966 = vunpack.c.h.b16 %v921
    %v967 = vunpack.c.l.b16 %v922
    %v968 = vunpack.c.h.b16 %v922
    %v969 = vunpack.c.l.b16 %v923
    %v970 = vunpack.c.h.b16 %v923
    %v971 = vunpack.c.l.b16 %v924
    %v972 = vunpack.c.h.b16 %v924
    %v973 = vunpack.c.l.b16 %v925
    %v974 = vunpack.c.h.b16 %v925
    %v975 = vunpack.c.l.b16 %v926
    %v976 = vunpack.c.h.b16 %v926
    %v977 = vunpack.c.l.b16 %v927
    %v978 = vunpack.c.h.b16 %v927
    %v979 = vunpack.c.l.b16 %v928
    %v980 = vunpack.c.h.b16 %v928
    %v981 = vunpack.c.l.b16 %v929
    %v982 = vunpack.c.h.b16 %v929
    %v983 = vunpack.c.l.b16 %v930
    %v984 = vunpack.c.h.b16 %v930
    %v985 = vpack.c.b16 %v955, %v953
    %v986 = vpack.c.b16 %v956, %v954
    %v987 = vpack.c.b16 %v959, %v957
    %v988 = vpack.c.b16 %v960, %v958
    %v989 = vpack.c.b16 %v963, %v961
    %v990 = vpack.c.b16 %v964, %v962
    %v991 = vpack.c.b16 %v967, %v965
    %v992 = vpack.c.b16 %v968, %v966
    %v993 = vpack.c.b16 %v971, %v969
    %v994 = vpack.c.b16 %v972, %v970
    %v995 = vpack.c.b16 %v975, %v973
    %v996 = vpack.c.b16 %v976, %v974
    %v997 = vpack.c.b16 %v979, %v977
    %v998 = vpack.c.b16 %v980, %v978
    %v999 = vpack.c.b16 %v983, %v981
    %v1000 = vpack.c.b16 %v984, %v982
    %1017 = vmatpush.bf16.msra.mxu0 %v999
    %1018 = vmatpush.bf16.msra.mxu0 %v997
    %1019 = vmatpush.bf16.msra.mxu0 %v995
    %1020 = vmatpush.bf16.msra.mxu0 %v993
    %1021 = vmatpush.bf16.msra.mxu0 %v991
    %1022 = vmatpush.bf16.msra.mxu0 %v989
    %1023 = vmatpush.bf16.msra.mxu0 %v987
    %1024 = vmatpush.bf16.msra.mxu0 %v985
    %1025 = vmatmul.bf16.gmra.mxu0 %v100
    %v1026 = vpop.f32.mrf.mxu0
    %v1027 = vadd.f32 %v933, %v1026
    %v1028 = vpop.f32.mrf.mxu0
    %v1029 = vadd.f32 %v933, %v1028
    %1030 = vmatmul.bf16.gmra.mxu0 %v101
    %v1031 = vpop.f32.mrf.mxu0
    %v1032 = vadd.f32 %v933, %v1031
    %v1033 = vpop.f32.mrf.mxu0
    %v1034 = vadd.f32 %v933, %v1033
    %1035 = vmatmul.bf16.gmra.mxu0 %v102
    %v1036 = vpop.f32.mrf.mxu0
    %v1037 = vadd.f32 %v933, %v1036
    %v1038 = vpop.f32.mrf.mxu0
    %v1039 = vadd.f32 %v933, %v1038
    %1040 = vmatmul.bf16.gmra.mxu0 %v103
    %v1041 = vpop.f32.mrf.mxu0
    %v1042 = vadd.f32 %v933, %v1041
    %v1043 = vpop.f32.mrf.mxu0
    %v1044 = vadd.f32 %v933, %v1043
    %1045 = vmatmul.bf16.gmra.mxu0 %v104
    %v1046 = vpop.f32.mrf.mxu0
    %v1047 = vadd.f32 %v933, %v1046
    %v1048 = vpop.f32.mrf.mxu0
    %v1049 = vadd.f32 %v933, %v1048
    %1050 = vmatmul.bf16.gmra.mxu0 %v105
    %v1051 = vpop.f32.mrf.mxu0
    %v1052 = vadd.f32 %v933, %v1051
    %v1053 = vpop.f32.mrf.mxu0
    %v1054 = vadd.f32 %v933, %v1053
    %1055 = vmatmul.bf16.gmra.mxu0 %v106
    %v1056 = vpop.f32.mrf.mxu0
    %v1057 = vadd.f32 %v933, %v1056
    %v1058 = vpop.f32.mrf.mxu0
    %v1059 = vadd.f32 %v933, %v1058
    %1060 = vmatmul.bf16.gmra.mxu0 %v107
    %v1061 = vpop.f32.mrf.mxu0
    %v1062 = vadd.f32 %v933, %v1061
    %v1063 = vpop.f32.mrf.mxu0
    %v1064 = vadd.f32 %v933, %v1063
    %1065 = vmatmul.bf16.gmra.mxu0 %v108
    %v1066 = vpop.f32.mrf.mxu0
    %v1067 = vadd.f32 %v933, %v1066
    %v1068 = vpop.f32.mrf.mxu0
    %v1069 = vadd.f32 %v933, %v1068
    %1070 = vdwg.mxu0
    %1071 = vmatpush.bf16.msra.mxu0 %v1000
    %1072 = vmatpush.bf16.msra.mxu0 %v998
    %1073 = vmatpush.bf16.msra.mxu0 %v996
    %1074 = vmatpush.bf16.msra.mxu0 %v994
    %1075 = vmatpush.bf16.msra.mxu0 %v992
    %1076 = vmatpush.bf16.msra.mxu0 %v990
    %1077 = vmatpush.bf16.msra.mxu0 %v988
    %1078 = vmatpush.bf16.msra.mxu0 %v986
    %1079 = vmatmul.bf16.gmra.mxu0 %v100
    %v1080 = vpop.f32.mrf.mxu0
    %v1081 = vadd.f32 %v934, %v1080
    %v1082 = vpop.f32.mrf.mxu0
    %v1083 = vadd.f32 %v934, %v1082
    %1084 = vmatmul.bf16.gmra.mxu0 %v101
    %v1085 = vpop.f32.mrf.mxu0
    %v1086 = vadd.f32 %v934, %v1085
    %v1087 = vpop.f32.mrf.mxu0
    %v1088 = vadd.f32 %v934, %v1087
    %1089 = vmatmul.bf16.gmra.mxu0 %v102
    %v1090 = vpop.f32.mrf.mxu0
    %v1091 = vadd.f32 %v934, %v1090
    %v1092 = vpop.f32.mrf.mxu0
    %v1093 = vadd.f32 %v934, %v1092
    %1094 = vmatmul.bf16.gmra.mxu0 %v103
    %v1095 = vpop.f32.mrf.mxu0
    %v1096 = vadd.f32 %v934, %v1095
    %v1097 = vpop.f32.mrf.mxu0
    %v1098 = vadd.f32 %v934, %v1097
    %1099 = vmatmul.bf16.gmra.mxu0 %v104
    %v1100 = vpop.f32.mrf.mxu0
    %v1101 = vadd.f32 %v934, %v1100
    %v1102 = vpop.f32.mrf.mxu0
    %v1103 = vadd.f32 %v934, %v1102
    %1104 = vmatmul.bf16.gmra.mxu0 %v105
    %v1105 = vpop.f32.mrf.mxu0
    %v1106 = vadd.f32 %v934, %v1105
    %v1107 = vpop.f32.mrf.mxu0
    %v1108 = vadd.f32 %v934, %v1107
    %1109 = vmatmul.bf16.gmra.mxu0 %v106
    %v1110 = vpop.f32.mrf.mxu0
    %v1111 = vadd.f32 %v934, %v1110
    %v1112 = vpop.f32.mrf.mxu0
    %v1113 = vadd.f32 %v934, %v1112
    %1114 = vmatmul.bf16.gmra.mxu0 %v107
    %v1115 = vpop.f32.mrf.mxu0
    %v1116 = vadd.f32 %v934, %v1115
    %v1117 = vpop.f32.mrf.mxu0
    %v1118 = vadd.f32 %v934, %v1117
    %1119 = vmatmul.bf16.gmra.mxu0 %v108
    %v1120 = vpop.f32.mrf.mxu0
    %v1121 = vadd.f32 %v934, %v1120
    %v1122 = vpop.f32.mrf.mxu0
    %v1123 = vadd.f32 %v934, %v1122
    %1124 = vdwg.mxu0
    %v1125 = vmul.f32 %v1027, 0.5
    %v1126 = vmul.f32 %v1081, 0.5
    %v1127 = vmul.f32 %v1029, 0.5
    %v1128 = vmul.f32 %v1083, 0.5
    %v1129 = vmul.f32 %v1032, 0.5
    %v1130 = vmul.f32 %v1086, 0.5
    %v1131 = vmul.f32 %v1034, 0.5
    %v1132 = vmul.f32 %v1088, 0.5
    %v1133 = vmul.f32 %v1037, 0.5
    %v1134 = vmul.f32 %v1091, 0.5
    %v1135 = vmul.f32 %v1039, 0.5
    %v1136 = vmul.f32 %v1093, 0.5
    %v1137 = vmul.f32 %v1042, 0.5
    %v1138 = vmul.f32 %v1096, 0.5
    %v1139 = vmul.f32 %v1044, 0.5
    %v1140 = vmul.f32 %v1098, 0.5
    %v1141 = vmul.f32 %v1047, 0.5
    %v1142 = vmul.f32 %v1101, 0.5
    %v1143 = vmul.f32 %v1049, 0.5
    %v1144 = vmul.f32 %v1103, 0.5
    %v1145 = vmul.f32 %v1052, 0.5
    %v1146 = vmul.f32 %v1106, 0.5
    %v1147 = vmul.f32 %v1054, 0.5
    %v1148 = vmul.f32 %v1108, 0.5
    %v1149 = vmul.f32 %v1057, 0.5
    %v1150 = vmul.f32 %v1111, 0.5
    %v1151 = vmul.f32 %v1059, 0.5
    %v1152 = vmul.f32 %v1113, 0.5
    %v1153 = vmul.f32 %v1062, 0.5
    %v1154 = vmul.f32 %v1116, 0.5
    %v1155 = vmul.f32 %v1064, 0.5
    %v1156 = vmul.f32 %v1118, 0.5
    %v1157 = vmul.f32 %v1067, 0.5
    %v1158 = vmul.f32 %v1121, 0.5
    %v1159 = vmul.f32 %v1069, 0.5
    %v1160 = vmul.f32 %v1123, 0.5
    %v1161 = vmul.f32 %v1027, 0.044715
    %v1162 = vmul.f32 %v1081, 0.044715
    %v1163 = vmul.f32 %v1029, 0.044715
    %v1164 = vmul.f32 %v1083, 0.044715
    %v1165 = vmul.f32 %v1032, 0.044715
    %v1166 = vmul.f32 %v1086, 0.044715
    %v1167 = vmul.f32 %v1034, 0.044715
    %v1168 = vmul.f32 %v1088, 0.044715
    %v1169 = vmul.f32 %v1037, 0.044715
    %v1170 = vmul.f32 %v1091, 0.044715
    %v1171 = vmul.f32 %v1039, 0.044715
    %v1172 = vmul.f32 %v1093, 0.044715
    %v1173 = vmul.f32 %v1042, 0.044715
    %v1174 = vmul.f32 %v1096, 0.044715
    %v1175 = vmul.f32 %v1044, 0.044715
    %v1176 = vmul.f32 %v1098, 0.044715
    %v1177 = vmul.f32 %v1047, 0.044715
    %v1178 = vmul.f32 %v1101, 0.044715
    %v1179 = vmul.f32 %v1049, 0.044715
    %v1180 = vmul.f32 %v1103, 0.044715
    %v1181 = vmul.f32 %v1052, 0.044715
    %v1182 = vmul.f32 %v1106, 0.044715
    %v1183 = vmul.f32 %v1054, 0.044715
    %v1184 = vmul.f32 %v1108, 0.044715
    %v1185 = vmul.f32 %v1057, 0.044715
    %v1186 = vmul.f32 %v1111, 0.044715
    %v1187 = vmul.f32 %v1059, 0.044715
    %v1188 = vmul.f32 %v1113, 0.044715
    %v1189 = vmul.f32 %v1062, 0.044715
    %v1190 = vmul.f32 %v1116, 0.044715
    %v1191 = vmul.f32 %v1064, 0.044715
    %v1192 = vmul.f32 %v1118, 0.044715
    %v1193 = vmul.f32 %v1067, 0.044715
    %v1194 = vmul.f32 %v1121, 0.044715
    %v1195 = vmul.f32 %v1069, 0.044715
    %v1196 = vmul.f32 %v1123, 0.044715
    %v1197 = vmul.f32 %v1161, %v1027
    %v1198 = vmul.f32 %v1162, %v1081
    %v1199 = vmul.f32 %v1163, %v1029
    %v1200 = vmul.f32 %v1164, %v1083
    %v1201 = vmul.f32 %v1165, %v1032
    %v1202 = vmul.f32 %v1166, %v1086
    %v1203 = vmul.f32 %v1167, %v1034
    %v1204 = vmul.f32 %v1168, %v1088
    %v1205 = vmul.f32 %v1169, %v1037
    %v1206 = vmul.f32 %v1170, %v1091
    %v1207 = vmul.f32 %v1171, %v1039
    %v1208 = vmul.f32 %v1172, %v1093
    %v1209 = vmul.f32 %v1173, %v1042
    %v1210 = vmul.f32 %v1174, %v1096
    %v1211 = vmul.f32 %v1175, %v1044
    %v1212 = vmul.f32 %v1176, %v1098
    %v1213 = vmul.f32 %v1177, %v1047
    %v1214 = vmul.f32 %v1178, %v1101
    %v1215 = vmul.f32 %v1179, %v1049
    %v1216 = vmul.f32 %v1180, %v1103
    %v1217 = vmul.f32 %v1181, %v1052
    %v1218 = vmul.f32 %v1182, %v1106
    %v1219 = vmul.f32 %v1183, %v1054
    %v1220 = vmul.f32 %v1184, %v1108
    %v1221 = vmul.f32 %v1185, %v1057
    %v1222 = vmul.f32 %v1186, %v1111
    %v1223 = vmul.f32 %v1187, %v1059
    %v1224 = vmul.f32 %v1188, %v1113
    %v1225 = vmul.f32 %v1189, %v1062
    %v1226 = vmul.f32 %v1190, %v1116
    %v1227 = vmul.f32 %v1191, %v1064
    %v1228 = vmul.f32 %v1192, %v1118
    %v1229 = vmul.f32 %v1193, %v1067
    %v1230 = vmul.f32 %v1194, %v1121
    %v1231 = vmul.f32 %v1195, %v1069
    %v1232 = vmul.f32 %v1196, %v1123
    %v1233 = vmul.f32 %v1197, %v1027
    %v1234 = vmul.f32 %v1198, %v1081
    %v1235 = vmul.f32 %v1199, %v1029
    %v1236 = vmul.f32 %v1200, %v1083
    %v1237 = vmul.f32 %v1201, %v1032
    %v1238 = vmul.f32 %v1202, %v1086
    %v1239 = vmul.f32 %v1203, %v1034
    %v1240 = vmul.f32 %v1204, %v1088
    %v1241 = vmul.f32 %v1205, %v1037
    %v1242 = vmul.f32 %v1206, %v1091
    %v1243 = vmul.f32 %v1207, %v1039
    %v1244 = vmul.f32 %v1208, %v1093
    %v1245 = vmul.f32 %v1209, %v1042
    %v1246 = vmul.f32 %v1210, %v1096
    %v1247 = vmul.f32 %v1211, %v1044
    %v1248 = vmul.f32 %v1212, %v1098
    %v1249 = vmul.f32 %v1213, %v1047
    %v1250 = vmul.f32 %v1214, %v1101
    %v1251 = vmul.f32 %v1215, %v1049
    %v1252 = vmul.f32 %v1216, %v1103
    %v1253 = vmul.f32 %v1217, %v1052
    %v1254 = vmul.f32 %v1218, %v1106
    %v1255 = vmul.f32 %v1219, %v1054
    %v1256 = vmul.f32 %v1220, %v1108
    %v1257 = vmul.f32 %v1221, %v1057
    %v1258 = vmul.f32 %v1222, %v1111
    %v1259 = vmul.f32 %v1223, %v1059
    %v1260 = vmul.f32 %v1224, %v1113
    %v1261 = vmul.f32 %v1225, %v1062
    %v1262 = vmul.f32 %v1226, %v1116
    %v1263 = vmul.f32 %v1227, %v1064
    %v1264 = vmul.f32 %v1228, %v1118
    %v1265 = vmul.f32 %v1229, %v1067
    %v1266 = vmul.f32 %v1230, %v1121
    %v1267 = vmul.f32 %v1231, %v1069
    %v1268 = vmul.f32 %v1232, %v1123
    %v1269 = vadd.f32 %v1027, %v1233
    %v1270 = vadd.f32 %v1081, %v1234
    %v1271 = vadd.f32 %v1029, %v1235
    %v1272 = vadd.f32 %v1083, %v1236
    %v1273 = vadd.f32 %v1032, %v1237
    %v1274 = vadd.f32 %v1086, %v1238
    %v1275 = vadd.f32 %v1034, %v1239
    %v1276 = vadd.f32 %v1088, %v1240
    %v1277 = vadd.f32 %v1037, %v1241
    %v1278 = vadd.f32 %v1091, %v1242
    %v1279 = vadd.f32 %v1039, %v1243
    %v1280 = vadd.f32 %v1093, %v1244
    %v1281 = vadd.f32 %v1042, %v1245
    %v1282 = vadd.f32 %v1096, %v1246
    %v1283 = vadd.f32 %v1044, %v1247
    %v1284 = vadd.f32 %v1098, %v1248
    %v1285 = vadd.f32 %v1047, %v1249
    %v1286 = vadd.f32 %v1101, %v1250
    %v1287 = vadd.f32 %v1049, %v1251
    %v1288 = vadd.f32 %v1103, %v1252
    %v1289 = vadd.f32 %v1052, %v1253
    %v1290 = vadd.f32 %v1106, %v1254
    %v1291 = vadd.f32 %v1054, %v1255
    %v1292 = vadd.f32 %v1108, %v1256
    %v1293 = vadd.f32 %v1057, %v1257
    %v1294 = vadd.f32 %v1111, %v1258
    %v1295 = vadd.f32 %v1059, %v1259
    %v1296 = vadd.f32 %v1113, %v1260
    %v1297 = vadd.f32 %v1062, %v1261
    %v1298 = vadd.f32 %v1116, %v1262
    %v1299 = vadd.f32 %v1064, %v1263
    %v1300 = vadd.f32 %v1118, %v1264
    %v1301 = vadd.f32 %v1067, %v1265
    %v1302 = vadd.f32 %v1121, %v1266
    %v1303 = vadd.f32 %v1069, %v1267
    %v1304 = vadd.f32 %v1123, %v1268
    %v1305 = vmul.f32 %v1269, 0.7978846
    %v1306 = vmul.f32 %v1270, 0.7978846
    %v1307 = vmul.f32 %v1271, 0.7978846
    %v1308 = vmul.f32 %v1272, 0.7978846
    %v1309 = vmul.f32 %v1273, 0.7978846
    %v1310 = vmul.f32 %v1274, 0.7978846
    %v1311 = vmul.f32 %v1275, 0.7978846
    %v1312 = vmul.f32 %v1276, 0.7978846
    %v1313 = vmul.f32 %v1277, 0.7978846
    %v1314 = vmul.f32 %v1278, 0.7978846
    %v1315 = vmul.f32 %v1279, 0.7978846
    %v1316 = vmul.f32 %v1280, 0.7978846
    %v1317 = vmul.f32 %v1281, 0.7978846
    %v1318 = vmul.f32 %v1282, 0.7978846
    %v1319 = vmul.f32 %v1283, 0.7978846
    %v1320 = vmul.f32 %v1284, 0.7978846
    %v1321 = vmul.f32 %v1285, 0.7978846
    %v1322 = vmul.f32 %v1286, 0.7978846
    %v1323 = vmul.f32 %v1287, 0.7978846
    %v1324 = vmul.f32 %v1288, 0.7978846
    %v1325 = vmul.f32 %v1289, 0.7978846
    %v1326 = vmul.f32 %v1290, 0.7978846
    %v1327 = vmul.f32 %v1291, 0.7978846
    %v1328 = vmul.f32 %v1292, 0.7978846
    %v1329 = vmul.f32 %v1293, 0.7978846
    %v1330 = vmul.f32 %v1294, 0.7978846
    %v1331 = vmul.f32 %v1295, 0.7978846
    %v1332 = vmul.f32 %v1296, 0.7978846
    %v1333 = vmul.f32 %v1297, 0.7978846
    %v1334 = vmul.f32 %v1298, 0.7978846
    %v1335 = vmul.f32 %v1299, 0.7978846
    %v1336 = vmul.f32 %v1300, 0.7978846
    %v1337 = vmul.f32 %v1301, 0.7978846
    %v1338 = vmul.f32 %v1302, 0.7978846
    %v1339 = vmul.f32 %v1303, 0.7978846
    %v1340 = vmul.f32 %v1304, 0.7978846
    %v1341 = vtanh.pop %v1305
    %v1342 = vtanh.pop %v1306
    %v1343 = vtanh.pop %v1307
    %v1344 = vtanh.pop %v1308
    %v1345 = vtanh.pop %v1309
    %v1346 = vtanh.pop %v1310
    %v1347 = vtanh.pop %v1311
    %v1348 = vtanh.pop %v1312
    %v1349 = vtanh.pop %v1313
    %v1350 = vtanh.pop %v1314
    %v1351 = vtanh.pop %v1315
    %v1352 = vtanh.pop %v1316
    %v1353 = vtanh.pop %v1317
    %v1354 = vtanh.pop %v1318
    %v1355 = vtanh.pop %v1319
    %v1356 = vtanh.pop %v1320
    %v1357 = vtanh.pop %v1321
    %v1358 = vtanh.pop %v1322
    %v1359 = vtanh.pop %v1323
    %v1360 = vtanh.pop %v1324
    %v1361 = vtanh.pop %v1325
    %v1362 = vtanh.pop %v1326
    %v1363 = vtanh.pop %v1327
    %v1364 = vtanh.pop %v1328
    %v1365 = vtanh.pop %v1329
    %v1366 = vtanh.pop %v1330
    %v1367 = vtanh.pop %v1331
    %v1368 = vtanh.pop %v1332
    %v1369 = vtanh.pop %v1333
    %v1370 = vtanh.pop %v1334
    %v1371 = vtanh.pop %v1335
    %v1372 = vtanh.pop %v1336
    %v1373 = vtanh.pop %v1337
    %v1374 = vtanh.pop %v1338
    %v1375 = vtanh.pop %v1339
    %v1376 = vtanh.pop %v1340
    %v1377 = vadd.f32 %v1341, 1.0
    %v1378 = vadd.f32 %v1342, 1.0
    %v1379 = vadd.f32 %v1343, 1.0
    %v1380 = vadd.f32 %v1344, 1.0
    %v1381 = vadd.f32 %v1345, 1.0
    %v1382 = vadd.f32 %v1346, 1.0
    %v1383 = vadd.f32 %v1347, 1.0
    %v1384 = vadd.f32 %v1348, 1.0
    %v1385 = vadd.f32 %v1349, 1.0
    %v1386 = vadd.f32 %v1350, 1.0
    %v1387 = vadd.f32 %v1351, 1.0
    %v1388 = vadd.f32 %v1352, 1.0
    %v1389 = vadd.f32 %v1353, 1.0
    %v1390 = vadd.f32 %v1354, 1.0
    %v1391 = vadd.f32 %v1355, 1.0
    %v1392 = vadd.f32 %v1356, 1.0
    %v1393 = vadd.f32 %v1357, 1.0
    %v1394 = vadd.f32 %v1358, 1.0
    %v1395 = vadd.f32 %v1359, 1.0
    %v1396 = vadd.f32 %v1360, 1.0
    %v1397 = vadd.f32 %v1361, 1.0
    %v1398 = vadd.f32 %v1362, 1.0
    %v1399 = vadd.f32 %v1363, 1.0
    %v1400 = vadd.f32 %v1364, 1.0
    %v1401 = vadd.f32 %v1365, 1.0
    %v1402 = vadd.f32 %v1366, 1.0
    %v1403 = vadd.f32 %v1367, 1.0
    %v1404 = vadd.f32 %v1368, 1.0
    %v1405 = vadd.f32 %v1369, 1.0
    %v1406 = vadd.f32 %v1370, 1.0
    %v1407 = vadd.f32 %v1371, 1.0
    %v1408 = vadd.f32 %v1372, 1.0
    %v1409 = vadd.f32 %v1373, 1.0
    %v1410 = vadd.f32 %v1374, 1.0
    %v1411 = vadd.f32 %v1375, 1.0
    %v1412 = vadd.f32 %v1376, 1.0
    %v1413 = vmul.f32 %v1125, %v1377
    %v1414 = vmul.f32 %v1126, %v1378
    %v1415 = vmul.f32 %v1127, %v1379
    %v1416 = vmul.f32 %v1128, %v1380
    %v1417 = vmul.f32 %v1129, %v1381
    %v1418 = vmul.f32 %v1130, %v1382
    %v1419 = vmul.f32 %v1131, %v1383
    %v1420 = vmul.f32 %v1132, %v1384
    %v1421 = vmul.f32 %v1133, %v1385
    %v1422 = vmul.f32 %v1134, %v1386
    %v1423 = vmul.f32 %v1135, %v1387
    %v1424 = vmul.f32 %v1136, %v1388
    %v1425 = vmul.f32 %v1137, %v1389
    %v1426 = vmul.f32 %v1138, %v1390
    %v1427 = vmul.f32 %v1139, %v1391
    %v1428 = vmul.f32 %v1140, %v1392
    %v1429 = vmul.f32 %v1141, %v1393
    %v1430 = vmul.f32 %v1142, %v1394
    %v1431 = vmul.f32 %v1143, %v1395
    %v1432 = vmul.f32 %v1144, %v1396
    %v1433 = vmul.f32 %v1145, %v1397
    %v1434 = vmul.f32 %v1146, %v1398
    %v1435 = vmul.f32 %v1147, %v1399
    %v1436 = vmul.f32 %v1148, %v1400
    %v1437 = vmul.f32 %v1149, %v1401
    %v1438 = vmul.f32 %v1150, %v1402
    %v1439 = vmul.f32 %v1151, %v1403
    %v1440 = vmul.f32 %v1152, %v1404
    %v1441 = vmul.f32 %v1153, %v1405
    %v1442 = vmul.f32 %v1154, %v1406
    %v1443 = vmul.f32 %v1155, %v1407
    %v1444 = vmul.f32 %v1156, %v1408
    %v1445 = vmul.f32 %v1157, %v1409
    %v1446 = vmul.f32 %v1158, %v1410
    %v1447 = vmul.f32 %v1159, %v1411
    %v1448 = vmul.f32 %v1160, %v1412
    %v1449 = vpack.c.bf16 %v1415, %v1413
    %v1450 = vpack.c.bf16 %v1416, %v1414
    %v1451 = vpack.c.bf16 %v1419, %v1417
    %v1452 = vpack.c.bf16 %v1420, %v1418
    %v1453 = vpack.c.bf16 %v1423, %v1421
    %v1454 = vpack.c.bf16 %v1424, %v1422
    %v1455 = vpack.c.bf16 %v1427, %v1425
    %v1456 = vpack.c.bf16 %v1428, %v1426
    %v1457 = vpack.c.bf16 %v1431, %v1429
    %v1458 = vpack.c.bf16 %v1432, %v1430
    %v1459 = vpack.c.bf16 %v1435, %v1433
    %v1460 = vpack.c.bf16 %v1436, %v1434
    %v1461 = vpack.c.bf16 %v1439, %v1437
    %v1462 = vpack.c.bf16 %v1440, %v1438
    %v1463 = vpack.c.bf16 %v1443, %v1441
    %v1464 = vpack.c.bf16 %v1444, %v1442
    %v1465 = vpack.c.bf16 %v1447, %v1445
    %v1466 = vpack.c.bf16 %v1448, %v1446
    %v1467 = vld [vmem:[#allocation9 + $0x80] sm:$0xf]
    %v1468 = vld [vmem:[#allocation9 + $0x84] sm:$0xf]
    %v1469 = vld [vmem:[#allocation9 + $0x88] sm:$0xf]
    %v1470 = vld [vmem:[#allocation9 + $0x8c] sm:$0xf]
    %v1471 = vld [vmem:[#allocation9 + $0x90] sm:$0xf]
    %v1472 = vld [vmem:[#allocation9 + $0x94] sm:$0xf]
    %v1473 = vld [vmem:[#allocation9 + $0x98] sm:$0xf]
    %v1474 = vld [vmem:[#allocation9 + $0x9c] sm:$0xf]
    %v1475 = vld [vmem:[#allocation9 + $0xa0] sm:$0xf]
    %v1476 = vld [vmem:[#allocation9 + $0xa4] sm:$0xf]
    %v1477 = vld [vmem:[#allocation9 + $0xa8] sm:$0xf]
    %v1478 = vld [vmem:[#allocation9 + $0xac] sm:$0xf]
    %v1479 = vld [vmem:[#allocation9 + $0xb0] sm:$0xf]
    %v1480 = vld [vmem:[#allocation9 + $0xb4] sm:$0xf]
    %v1481 = vld [vmem:[#allocation9 + $0xb8] sm:$0xf]
    %v1482 = vld [vmem:[#allocation9 + $0xbc] sm:$0xf]
    %v1483 = vld [vmem:[#allocation9 + $0xc0] sm:$0xf]
    %v1484 = vld [vmem:[#allocation9 + $0xc4] sm:$0xf]
    %v1485 = vld [vmem:[#allocation9 + $0xc8] sm:$0xf]
    %v1486 = vld [vmem:[#allocation9 + $0xcc] sm:$0xf]
    %v1487 = vld [vmem:[#allocation9 + $0xd0] sm:$0xf]
    %v1488 = vld [vmem:[#allocation9 + $0xd4] sm:$0xf]
    %v1489 = vld [vmem:[#allocation9 + $0xd8] sm:$0xf]
    %v1490 = vld [vmem:[#allocation9 + $0xdc] sm:$0xf]
    %v1491 = vld [vmem:[#allocation9 + $0xe0] sm:$0xf]
    %v1492 = vld [vmem:[#allocation9 + $0xe4] sm:$0xf]
    %v1493 = vld [vmem:[#allocation9 + $0xe8] sm:$0xf]
    %v1494 = vld [vmem:[#allocation9 + $0xec] sm:$0xf]
    %v1495 = vld [vmem:[#allocation9 + $0xf0] sm:$0xf]
    %v1496 = vld [vmem:[#allocation9 + $0xf4] sm:$0xf]
    %v1497 = vld [vmem:[#allocation9 + $0xf8] sm:$0xf]
    %v1498 = vld [vmem:[#allocation9 + $0xfc] sm:$0xf]
    %v1531 = vunpack.c.l.b16 %v1467
    %v1532 = vunpack.c.l.b16 %v1468
    %v1533 = vunpack.c.l.b16 %v1469
    %v1534 = vunpack.c.l.b16 %v1470
    %v1535 = vunpack.c.l.b16 %v1471
    %v1536 = vunpack.c.l.b16 %v1472
    %v1537 = vunpack.c.l.b16 %v1473
    %v1538 = vunpack.c.l.b16 %v1474
    %v1539 = vunpack.c.l.b16 %v1475
    %v1540 = vunpack.c.l.b16 %v1476
    %v1541 = vunpack.c.l.b16 %v1477
    %v1542 = vunpack.c.l.b16 %v1478
    %v1543 = vunpack.c.l.b16 %v1479
    %v1544 = vunpack.c.l.b16 %v1480
    %v1545 = vunpack.c.l.b16 %v1481
    %v1546 = vunpack.c.l.b16 %v1482
    %v1547 = vunpack.c.l.b16 %v1483
    %v1548 = vunpack.c.l.b16 %v1484
    %v1549 = vunpack.c.l.b16 %v1485
    %v1550 = vunpack.c.l.b16 %v1486
    %v1551 = vunpack.c.l.b16 %v1487
    %v1552 = vunpack.c.l.b16 %v1488
    %v1553 = vunpack.c.l.b16 %v1489
    %v1554 = vunpack.c.l.b16 %v1490
    %v1555 = vunpack.c.l.b16 %v1491
    %v1556 = vunpack.c.l.b16 %v1492
    %v1557 = vunpack.c.l.b16 %v1493
    %v1558 = vunpack.c.l.b16 %v1494
    %v1559 = vunpack.c.l.b16 %v1495
    %v1560 = vunpack.c.l.b16 %v1496
    %v1561 = vunpack.c.l.b16 %v1497
    %v1562 = vunpack.c.l.b16 %v1498
    %v1563 = vpack.c.b16 %v1532, %v1531
    %v1564 = vpack.c.b16 %v1534, %v1533
    %v1565 = vpack.c.b16 %v1536, %v1535
    %v1566 = vpack.c.b16 %v1538, %v1537
    %v1567 = vpack.c.b16 %v1540, %v1539
    %v1568 = vpack.c.b16 %v1542, %v1541
    %v1569 = vpack.c.b16 %v1544, %v1543
    %v1570 = vpack.c.b16 %v1546, %v1545
    %v1571 = vpack.c.b16 %v1548, %v1547
    %v1572 = vpack.c.b16 %v1550, %v1549
    %v1573 = vpack.c.b16 %v1552, %v1551
    %v1574 = vpack.c.b16 %v1554, %v1553
    %v1575 = vpack.c.b16 %v1556, %v1555
    %v1576 = vpack.c.b16 %v1558, %v1557
    %v1577 = vpack.c.b16 %v1560, %v1559
    %v1578 = vpack.c.b16 %v1562, %v1561
    %1595 = vmatpush.bf16.msra.mxu0 %v1570
    %1596 = vmatpush.bf16.msra.mxu0 %v1569
    %1597 = vmatpush.bf16.msra.mxu0 %v1568
    %1598 = vmatpush.bf16.msra.mxu0 %v1567
    %1599 = vmatpush.bf16.msra.mxu0 %v1566
    %1600 = vmatpush.bf16.msra.mxu0 %v1565
    %1601 = vmatpush.bf16.msra.mxu0 %v1564
    %1602 = vmatpush.bf16.msra.mxu0 %v1563
    %1603 = vmatmul.bf16.gmra.mxu0 %v1449
    %v1604 = vpop.f32.mrf.mxu0
    %v1605 = vadd.f32 0.0, %v1604
    %v1606 = vpop.f32.mrf.mxu0
    %v1607 = vadd.f32 0.0, %v1606
    %1608 = vmatmul.bf16.gmra.mxu0 %v1451
    %v1609 = vpop.f32.mrf.mxu0
    %v1610 = vadd.f32 0.0, %v1609
    %v1611 = vpop.f32.mrf.mxu0
    %v1612 = vadd.f32 0.0, %v1611
    %1613 = vmatmul.bf16.gmra.mxu0 %v1453
    %v1614 = vpop.f32.mrf.mxu0
    %v1615 = vadd.f32 0.0, %v1614
    %v1616 = vpop.f32.mrf.mxu0
    %v1617 = vadd.f32 0.0, %v1616
    %1618 = vmatmul.bf16.gmra.mxu0 %v1455
    %v1619 = vpop.f32.mrf.mxu0
    %v1620 = vadd.f32 0.0, %v1619
    %v1621 = vpop.f32.mrf.mxu0
    %v1622 = vadd.f32 0.0, %v1621
    %1623 = vmatmul.bf16.gmra.mxu0 %v1457
    %v1624 = vpop.f32.mrf.mxu0
    %v1625 = vadd.f32 0.0, %v1624
    %v1626 = vpop.f32.mrf.mxu0
    %v1627 = vadd.f32 0.0, %v1626
    %1628 = vmatmul.bf16.gmra.mxu0 %v1459
    %v1629 = vpop.f32.mrf.mxu0
    %v1630 = vadd.f32 0.0, %v1629
    %v1631 = vpop.f32.mrf.mxu0
    %v1632 = vadd.f32 0.0, %v1631
    %1633 = vmatmul.bf16.gmra.mxu0 %v1461
    %v1634 = vpop.f32.mrf.mxu0
    %v1635 = vadd.f32 0.0, %v1634
    %v1636 = vpop.f32.mrf.mxu0
    %v1637 = vadd.f32 0.0, %v1636
    %1638 = vmatmul.bf16.gmra.mxu0 %v1463
    %v1639 = vpop.f32.mrf.mxu0
    %v1640 = vadd.f32 0.0, %v1639
    %v1641 = vpop.f32.mrf.mxu0
    %v1642 = vadd.f32 0.0, %v1641
    %1643 = vmatmul.bf16.gmra.mxu0 %v1465
    %v1644 = vpop.f32.mrf.mxu0
    %v1645 = vadd.f32 0.0, %v1644
    %v1646 = vpop.f32.mrf.mxu0
    %v1647 = vadd.f32 0.0, %v1646
    %1648 = vdwg.mxu0
    %1649 = vmatpush.bf16.msra.mxu0 %v1578
    %1650 = vmatpush.bf16.msra.mxu0 %v1577
    %1651 = vmatpush.bf16.msra.mxu0 %v1576
    %1652 = vmatpush.bf16.msra.mxu0 %v1575
    %1653 = vmatpush.bf16.msra.mxu0 %v1574
    %1654 = vmatpush.bf16.msra.mxu0 %v1573
    %1655 = vmatpush.bf16.msra.mxu0 %v1572
    %1656 = vmatpush.bf16.msra.mxu0 %v1571
    %1657 = vmatmul.bf16.gmra.mxu0 %v1450
    %v1658 = vpop.f32.mrf.mxu0
    %v1659 = vadd.f32 %v1605, %v1658
    %v1660 = vpop.f32.mrf.mxu0
    %v1661 = vadd.f32 %v1607, %v1660
    %1662 = vmatmul.bf16.gmra.mxu0 %v1452
    %v1663 = vpop.f32.mrf.mxu0
    %v1664 = vadd.f32 %v1610, %v1663
    %v1665 = vpop.f32.mrf.mxu0
    %v1666 = vadd.f32 %v1612, %v1665
    %1667 = vmatmul.bf16.gmra.mxu0 %v1454
    %v1668 = vpop.f32.mrf.mxu0
    %v1669 = vadd.f32 %v1615, %v1668
    %v1670 = vpop.f32.mrf.mxu0
    %v1671 = vadd.f32 %v1617, %v1670
    %1672 = vmatmul.bf16.gmra.mxu0 %v1456
    %v1673 = vpop.f32.mrf.mxu0
    %v1674 = vadd.f32 %v1620, %v1673
    %v1675 = vpop.f32.mrf.mxu0
    %v1676 = vadd.f32 %v1622, %v1675
    %1677 = vmatmul.bf16.gmra.mxu0 %v1458
    %v1678 = vpop.f32.mrf.mxu0
    %v1679 = vadd.f32 %v1625, %v1678
    %v1680 = vpop.f32.mrf.mxu0
    %v1681 = vadd.f32 %v1627, %v1680
    %1682 = vmatmul.bf16.gmra.mxu0 %v1460
    %v1683 = vpop.f32.mrf.mxu0
    %v1684 = vadd.f32 %v1630, %v1683
    %v1685 = vpop.f32.mrf.mxu0
    %v1686 = vadd.f32 %v1632, %v1685
    %1687 = vmatmul.bf16.gmra.mxu0 %v1462
    %v1688 = vpop.f32.mrf.mxu0
    %v1689 = vadd.f32 %v1635, %v1688
    %v1690 = vpop.f32.mrf.mxu0
    %v1691 = vadd.f32 %v1637, %v1690
    %1692 = vmatmul.bf16.gmra.mxu0 %v1464
    %v1693 = vpop.f32.mrf.mxu0
    %v1694 = vadd.f32 %v1640, %v1693
    %v1695 = vpop.f32.mrf.mxu0
    %v1696 = vadd.f32 %v1642, %v1695
    %1697 = vmatmul.bf16.gmra.mxu0 %v1466
    %v1698 = vpop.f32.mrf.mxu0
    %v1699 = vadd.f32 %v1645, %v1698
    %v1700 = vpop.f32.mrf.mxu0
    %v1701 = vadd.f32 %v1647, %v1700
    %1702 = vdwg.mxu0
    %v1703 = vld [vmem:[#allocation2] sm:$0xff]
    %v1704 = vld [vmem:[#allocation2 + $0x8] sm:$0xff]
    %v1705 = vld [vmem:[#allocation2 + $0x10] sm:$0xff]
    %v1706 = vld [vmem:[#allocation2 + $0x18] sm:$0xff]
    %v1707 = vld [vmem:[#allocation2 + $0x20] sm:$0xff]
    %v1708 = vld [vmem:[#allocation2 + $0x28] sm:$0xff]
    %v1709 = vld [vmem:[#allocation2 + $0x30] sm:$0xff]
    %v1710 = vld [vmem:[#allocation2 + $0x38] sm:$0xff]
    %v1711 = vld [vmem:[#allocation2 + $0x40] sm:$0xff]
    %v1712 = vld [vmem:[#allocation2 + $0x48] sm:$0xff]
    %v1713 = vld [vmem:[#allocation2 + $0x50] sm:$0xff]
    %v1714 = vld [vmem:[#allocation2 + $0x58] sm:$0xff]
    %v1715 = vld [vmem:[#allocation2 + $0x60] sm:$0xff]
    %v1716 = vld [vmem:[#allocation2 + $0x68] sm:$0xff]
    %v1717 = vld [vmem:[#allocation2 + $0x70] sm:$0xff]
    %v1718 = vld [vmem:[#allocation2 + $0x78] sm:$0xff]
    %v1719 = vld [vmem:[#allocation2 + $0x80] sm:$0xff]
    %v1720 = vld [vmem:[#allocation2 + $0x88] sm:$0xff]
    %v1721 = vadd.f32 %v1703, %v1659
    %v1722 = vadd.f32 %v1704, %v1661
    %v1723 = vadd.f32 %v1705, %v1664
    %v1724 = vadd.f32 %v1706, %v1666
    %v1725 = vadd.f32 %v1707, %v1669
    %v1726 = vadd.f32 %v1708, %v1671
    %v1727 = vadd.f32 %v1709, %v1674
    %v1728 = vadd.f32 %v1710, %v1676
    %v1729 = vadd.f32 %v1711, %v1679
    %v1730 = vadd.f32 %v1712, %v1681
    %v1731 = vadd.f32 %v1713, %v1684
    %v1732 = vadd.f32 %v1714, %v1686
    %v1733 = vadd.f32 %v1715, %v1689
    %v1734 = vadd.f32 %v1716, %v1691
    %v1735 = vadd.f32 %v1717, %v1694
    %v1736 = vadd.f32 %v1718, %v1696
    %v1737 = vadd.f32 %v1719, %v1699
    %v1738 = vadd.f32 %v1720, %v1701
    %1739 = vst [vmem:[#allocation2] sm:$0xff] %v1721
    %1740 = vst [vmem:[#allocation2 + $0x8] sm:$0xff] %v1722
    %1741 = vst [vmem:[#allocation2 + $0x10] sm:$0xff] %v1723
    %1742 = vst [vmem:[#allocation2 + $0x18] sm:$0xff] %v1724
    %1743 = vst [vmem:[#allocation2 + $0x20] sm:$0xff] %v1725
    %1744 = vst [vmem:[#allocation2 + $0x28] sm:$0xff] %v1726
    %1745 = vst [vmem:[#allocation2 + $0x30] sm:$0xff] %v1727
    %1746 = vst [vmem:[#allocation2 + $0x38] sm:$0xff] %v1728
    %1747 = vst [vmem:[#allocation2 + $0x40] sm:$0xff] %v1729
    %1748 = vst [vmem:[#allocation2 + $0x48] sm:$0xff] %v1730
    %1749 = vst [vmem:[#allocation2 + $0x50] sm:$0xff] %v1731
    %1750 = vst [vmem:[#allocation2 + $0x58] sm:$0xff] %v1732
    %1751 = vst [vmem:[#allocation2 + $0x60] sm:$0xff] %v1733
    %1752 = vst [vmem:[#allocation2 + $0x68] sm:$0xff] %v1734
    %1753 = vst [vmem:[#allocation2 + $0x70] sm:$0xff] %v1735
    %1754 = vst [vmem:[#allocation2 + $0x78] sm:$0xff] %v1736
    %1755 = vst [vmem:[#allocation2 + $0x80] sm:$0xff] %v1737
    %1756 = vst [vmem:[#allocation2 + $0x88] sm:$0xff] %v1738
    %v1757 = vld [vmem:[#allocation2] sm:$0xff]
    %v1758 = vld [vmem:[#allocation2 + $0x8] sm:$0xff]
    %v1759 = vld [vmem:[#allocation2 + $0x10] sm:$0xff]
    %v1760 = vld [vmem:[#allocation2 + $0x18] sm:$0xff]
    %v1761 = vld [vmem:[#allocation2 + $0x20] sm:$0xff]
    %v1762 = vld [vmem:[#allocation2 + $0x28] sm:$0xff]
    %v1763 = vld [vmem:[#allocation2 + $0x30] sm:$0xff]
    %v1764 = vld [vmem:[#allocation2 + $0x38] sm:$0xff]
    %v1765 = vld [vmem:[#allocation2 + $0x40] sm:$0xff]
    %v1766 = vld [vmem:[#allocation2 + $0x48] sm:$0xff]
    %v1767 = vld [vmem:[#allocation2 + $0x50] sm:$0xff]
    %v1768 = vld [vmem:[#allocation2 + $0x58] sm:$0xff]
    %v1769 = vld [vmem:[#allocation2 + $0x60] sm:$0xff]
    %v1770 = vld [vmem:[#allocation2 + $0x68] sm:$0xff]
    %v1771 = vld [vmem:[#allocation2 + $0x70] sm:$0xff]
    %v1772 = vld [vmem:[#allocation2 + $0x78] sm:$0xff]
    %v1773 = vld [vmem:[#allocation2 + $0x80] sm:$0xff]
    %v1774 = vld [vmem:[#allocation2 + $0x88] sm:$0xff]
    %v1775 = vld [vmem:[%s4] sm:$0x1]
    %v1777 = vperm.slane %v1775, 0
    %v1779 = vadd.f32 %v1757, %v1777
    %v1780 = vadd.f32 %v1758, %v1777
    %v1781 = vadd.f32 %v1759, %v1777
    %v1782 = vadd.f32 %v1760, %v1777
    %v1783 = vadd.f32 %v1761, %v1777
    %v1784 = vadd.f32 %v1762, %v1777
    %v1785 = vadd.f32 %v1763, %v1777
    %v1786 = vadd.f32 %v1764, %v1777
    %v1787 = vadd.f32 %v1765, %v1777
    %v1788 = vadd.f32 %v1766, %v1777
    %v1789 = vadd.f32 %v1767, %v1777
    %v1790 = vadd.f32 %v1768, %v1777
    %v1791 = vadd.f32 %v1769, %v1777
    %v1792 = vadd.f32 %v1770, %v1777
    %v1793 = vadd.f32 %v1771, %v1777
    %v1794 = vadd.f32 %v1772, %v1777
    %v1795 = vadd.f32 %v1773, %v1777
    %v1796 = vadd.f32 %v1774, %v1777
    %1797 = vst [vmem:[#allocation11] sm:$0xff] %v1779
    %1798 = vst [vmem:[#allocation11 + $0x8] sm:$0xff] %v1780
    %1799 = vst [vmem:[#allocation11 + $0x10] sm:$0xff] %v1781
    %1800 = vst [vmem:[#allocation11 + $0x18] sm:$0xff] %v1782
    %1801 = vst [vmem:[#allocation11 + $0x20] sm:$0xff] %v1783
    %1802 = vst [vmem:[#allocation11 + $0x28] sm:$0xff] %v1784
    %1803 = vst [vmem:[#allocation11 + $0x30] sm:$0xff] %v1785
    %1804 = vst [vmem:[#allocation11 + $0x38] sm:$0xff] %v1786
    %1805 = vst [vmem:[#allocation11 + $0x40] sm:$0xff] %v1787
    %1806 = vst [vmem:[#allocation11 + $0x48] sm:$0xff] %v1788
    %1807 = vst [vmem:[#allocation11 + $0x50] sm:$0xff] %v1789
    %1808 = vst [vmem:[#allocation11 + $0x58] sm:$0xff] %v1790
    %1809 = vst [vmem:[#allocation11 + $0x60] sm:$0xff] %v1791
    %1810 = vst [vmem:[#allocation11 + $0x68] sm:$0xff] %v1792
    %1811 = vst [vmem:[#allocation11 + $0x70] sm:$0xff] %v1793
    %1812 = vst [vmem:[#allocation11 + $0x78] sm:$0xff] %v1794
    %1813 = vst [vmem:[#allocation11 + $0x80] sm:$0xff] %v1795
    %1814 = vst [vmem:[#allocation11 + $0x88] sm:$0xff] %v1796
    // Predicated region
    $region38: #{tpu_custom_call.1} parent=1 // pred_check
      _
    $region39: #{tpu_custom_call.1} parent=1 // pred_check_branch
      %1816 = sbr.rel (0) target = $region41
    $region40: #{tpu_custom_call.1} parent=1 // pred_region
      %1818 = vsyncadd [#allocation5], 0
      %s1819 = sshll.u32 [#allocation11], 4
      %s1820 = int_to_ptr.vmem [resolvable:$true] %s1819
      %s1821 = sshll.u32 %s5, 4
      %s1822 = int_to_ptr.hbm [resolvable:$true] %s1821
      %1827 = dma.vmem_to_hbm [thread:$0]  %s1820, 2304, %s1822, [#allocation5], 128, 128, 8
    $region41: #{tpu_custom_call.1} parent=1 // pred_fallthru
      _
    // Predicated region
    $region42: #{tpu_custom_call.1} parent=1 // pred_check
      _
    $region43: #{tpu_custom_call.1} parent=1 // pred_check_branch
      %1829 = sbr.rel (0) target = $region45
    $region44: #{tpu_custom_call.1} parent=1 // pred_region
      %1831 = dma.done [#allocation5], 2304
    $region45: #{tpu_custom_call.1} parent=1 // pred_fallthru
      _
    %1832 = vsyncpa [#allocation4], 1
    %1833 = vsyncpa [#allocation7], 1
    %1834 = vsyncpa [#allocation10], 1
    %1835 = vsyncpa [#allocation5], 1

// kernel: tpu_custom_call.1
$region0: #{tpu_custom_call.1}
  #allocation0 [shape = 'u32[]', space=smem, size = 0x4, offset = 0x4, fixed_abs, tag = 'smem constant byte address 0x4 - core index']
  #allocation1 [shape = 'u32[72,128]{1,0:T(1,128)}', space=vmem, size = 0x9000, scoped, tag = 'internal scratch']
  #allocation2 [shape = 'f32[144,128]{1,0:T(8,128)}', space=vmem, size = 0x12000, scoped, tag = 'scratch operand']
  %s0 = inlined_call_operand.hbm [shape: f32[144,128], index: 0, kind: input, shape index: {}]
  %s1 = inlined_call_operand.hbm [shape: bf16[128,512], index: 1, kind: input, shape index: {}]
  %s2 = inlined_call_operand.hbm [shape: f32[1,512], index: 2, kind: input, shape index: {}]
  %s3 = inlined_call_operand.hbm [shape: bf16[512,128], index: 3, kind: input, shape index: {}]
  %s4 = inlined_call_operand.vmem [shape: f32[1,128], index: 4, kind: input, shape index: {}]
  %s5 = inlined_call_operand.hbm [shape: f32[144,128], index: 5, kind: output, shape index: {}]
  %s6 = sld [smem:[#allocation0]]
  $region46: #{tpu_custom_call.1} parent=0
    _
  %s8 = ssub.s32 1, %s6
  %s9 = scalar_select 0, %s8, %s6
  $region1: #{tpu_custom_call.1} parent=0
    #allocation3 [shape = 'u8[73728]{0}', space=vmem, size = 0x12000, scoped, tag = 'input window, operand 0, single buffered']
    #allocation4 [shape = 's32[1]{0}', space=sflag, size = 0x4, scoped, tag = 'scoped memory for tpu_custom_call.1']
    #allocation5 [shape = 's32[1]{0}', space=sflag, size = 0x4, scoped, tag = 'scoped memory for tpu_custom_call.1']
    #allocation6 [shape = 'u8[131072]{0}', space=vmem, size = 0x20000, scoped, tag = 'input window, operand 1, single buffered']
    #allocation7 [shape = 's32[1]{0}', space=sflag, size = 0x4, scoped, tag = 'scoped memory for tpu_custom_call.1']
    #allocation8 [shape = 'u8[2048]{0}', space=vmem, size = 0x800, scoped, tag = 'input window, operand 2, single buffered']
    #allocation9 [shape = 'u8[131072]{0}', space=vmem, size = 0x20000, scoped, tag = 'input window, operand 3, single buffered']
    #allocation10 [shape = 's32[1]{0}', space=sflag, size = 0x4, scoped, tag = 'scoped memory for tpu_custom_call.1']
    #allocation11 [shape = 'u8[73728]{0}', space=vmem, size = 0x12000, scoped, tag = 'output window, operand 0, single buffered']
    %10 = vsyncpa [#allocation4], 0
    %11 = vsyncpa [#allocation7], 0
    %12 = vsyncpa [#allocation10], 0
    %13 = vsyncpa [#allocation5], 0
    // Predicated region
    $region2: #{tpu_custom_call.1} parent=1 // pred_check
      _
    $region3: #{tpu_custom_call.1} parent=1 // pred_check_branch
      %15 = sbr.rel (0) target = $region5
    $region4: #{tpu_custom_call.1} parent=1 // pred_region
      %17 = vsyncadd [#allocation4], 0
      %s18 = sshll.u32 %s0, 4
      %s19 = int_to_ptr.hbm [resolvable:$true] %s18
      %s20 = sshll.u32 [#allocation3], 4
      %s21 = int_to_ptr.vmem [resolvable:$true] %s20
      %26 = dma.hbm_to_vmem [thread:$0]  %s19, 2304, %s21, [#allocation4], 128, 128, 8
    $region5: #{tpu_custom_call.1} parent=1 // pred_fallthru
      _
    // Predicated region
    $region6: #{tpu_custom_call.1} parent=1 // pred_check
      _
    $region7: #{tpu_custom_call.1} parent=1 // pred_check_branch
      %28 = sbr.rel (0) target = $region9
    $region8: #{tpu_custom_call.1} parent=1 // pred_region
      %30 = vsyncadd [#allocation7], 0
      %s31 = sshll.u32 %s1, 4
      %s32 = int_to_ptr.hbm [resolvable:$true] %s31
      %s33 = sshll.u32 [#allocation6], 4
      %s34 = int_to_ptr.vmem [resolvable:$true] %s33
      %39 = dma.hbm_to_vmem [thread:$0]  %s32, 4096, %s34, [#allocation7], 256, 256, 16
    $region9: #{tpu_custom_call.1} parent=1 // pred_fallthru
      _
    // Predicated region
    $region10: #{tpu_custom_call.1} parent=1 // pred_check
      _
    $region11: #{tpu_custom_call.1} parent=1 // pred_check_branch
      %41 = sbr.rel (0) target = $region13
    $region12: #{tpu_custom_call.1} parent=1 // pred_region
      %43 = vsyncadd [#allocation7], 0
      %s45 = sshll.u32 %s2, 4
      %s46 = int_to_ptr.hbm [resolvable:$true] %s45
      %s47 = sshll.u32 [#allocation8], 4
      %s48 = int_to_ptr.vmem [resolvable:$true] %s47
      %50 = dma.hbm_to_vmem [thread:$0]  %s46, 64, %s48, [#allocation7]
    $region13: #{tpu_custom_call.1} parent=1 // pred_fallthru
      _
    // Predicated region
    $region14: #{tpu_custom_call.1} parent=1 // pred_check
      _
    $region15: #{tpu_custom_call.1} parent=1 // pred_check_branch
      %52 = sbr.rel (0) target = $region17
    $region16: #{tpu_custom_call.1} parent=1 // pred_region
      %54 = vsyncadd [#allocation10], 0
      %s55 = sshll.u32 %s3, 4
      %s56 = int_to_ptr.hbm [resolvable:$true] %s55
      %s57 = sshll.u32 [#allocation9], 4
      %s58 = int_to_ptr.vmem [resolvable:$true] %s57
      %63 = dma.hbm_to_vmem [thread:$0]  %s56, 4096, %s58, [#allocation10], 64, 64, 4
    $region17: #{tpu_custom_call.1} parent=1 // pred_fallthru
      _
    // Predicated region
    $region18: #{tpu_custom_call.1} parent=1 // pred_check
      _
    $region19: #{tpu_custom_call.1} parent=1 // pred_check_branch
      %65 = sbr.rel (0) target = $region21
    $region20: #{tpu_custom_call.1} parent=1 // pred_region
      _
    $region21: #{tpu_custom_call.1} parent=1 // pred_fallthru
      _
    // Predicated region
    $region22: #{tpu_custom_call.1} parent=1 // pred_check
      _
    $region23: #{tpu_custom_call.1} parent=1 // pred_check_branch
      %67 = sbr.rel (0) target = $region25
    $region24: #{tpu_custom_call.1} parent=1 // pred_region
      %69 = dma.done [#allocation4], 2304
    $region25: #{tpu_custom_call.1} parent=1 // pred_fallthru
      _
    // Predicated region
    $region26: #{tpu_custom_call.1} parent=1 // pred_check
      _
    $region27: #{tpu_custom_call.1} parent=1 // pred_check_branch
      %71 = sbr.rel (0) target = $region29
    $region28: #{tpu_custom_call.1} parent=1 // pred_region
      %73 = dma.done [#allocation7], 4096
    $region29: #{tpu_custom_call.1} parent=1 // pred_fallthru
      _
    // Predicated region
    $region30: #{tpu_custom_call.1} parent=1 // pred_check
      _
    $region31: #{tpu_custom_call.1} parent=1 // pred_check_branch
      %75 = sbr.rel (0) target = $region33
    $region32: #{tpu_custom_call.1} parent=1 // pred_region
      %77 = dma.done [#allocation7], 64
    $region33: #{tpu_custom_call.1} parent=1 // pred_fallthru
      _
    // Predicated region
    $region34: #{tpu_custom_call.1} parent=1 // pred_check
      _
    $region35: #{tpu_custom_call.1} parent=1 // pred_check_branch
      %79 = sbr.rel (0) target = $region37
    $region36: #{tpu_custom_call.1} parent=1 // pred_region
      %81 = dma.done [#allocation10], 4096
    $region37: #{tpu_custom_call.1} parent=1 // pred_fallthru
      _
    %v82 = vld [vmem:[#allocation3] sm:$0xff]
    %v83 = vld [vmem:[#allocation3 + $0x8] sm:$0xff]
    %v84 = vld [vmem:[#allocation3 + $0x10] sm:$0xff]
    %v85 = vld [vmem:[#allocation3 + $0x18] sm:$0xff]
    %v86 = vld [vmem:[#allocation3 + $0x20] sm:$0xff]
    %v87 = vld [vmem:[#allocation3 + $0x28] sm:$0xff]
    %v88 = vld [vmem:[#allocation3 + $0x30] sm:$0xff]
    %v89 = vld [vmem:[#allocation3 + $0x38] sm:$0xff]
    %v90 = vld [vmem:[#allocation3 + $0x40] sm:$0xff]
    %v91 = vld [vmem:[#allocation3 + $0x48] sm:$0xff]
    %v92 = vld [vmem:[#allocation3 + $0x50] sm:$0xff]
    %v93 = vld [vmem:[#allocation3 + $0x58] sm:$0xff]
    %v94 = vld [vmem:[#allocation3 + $0x60] sm:$0xff]
    %v95 = vld [vmem:[#allocation3 + $0x68] sm:$0xff]
    %v96 = vld [vmem:[#allocation3 + $0x70] sm:$0xff]
    %v97 = vld [vmem:[#allocation3 + $0x78] sm:$0xff]
    %v98 = vld [vmem:[#allocation3 + $0x80] sm:$0xff]
    %v99 = vld [vmem:[#allocation3 + $0x88] sm:$0xff]
    %v100 = vpack.c.bf16 %v83, %v82
    %v101 = vpack.c.bf16 %v85, %v84
    %v102 = vpack.c.bf16 %v87, %v86
    %v103 = vpack.c.bf16 %v89, %v88
    %v104 = vpack.c.bf16 %v91, %v90
    %v105 = vpack.c.bf16 %v93, %v92
    %v106 = vpack.c.bf16 %v95, %v94
    %v107 = vpack.c.bf16 %v97, %v96
    %v108 = vpack.c.bf16 %v99, %v98
    %v109 = vld [vmem:[#allocation6] sm:$0xff]
    %v110 = vld [vmem:[#allocation6 + $0x10] sm:$0xff]
    %v111 = vld [vmem:[#allocation6 + $0x20] sm:$0xff]
    %v112 = vld [vmem:[#allocation6 + $0x30] sm:$0xff]
    %v113 = vld [vmem:[#allocation6 + $0x40] sm:$0xff]
    %v114 = vld [vmem:[#allocation6 + $0x50] sm:$0xff]
    %v115 = vld [vmem:[#allocation6 + $0x60] sm:$0xff]
    %v116 = vld [vmem:[#allocation6 + $0x70] sm:$0xff]
    %v117 = vld [vmem:[#allocation6 + $0x80] sm:$0xff]
    %v118 = vld [vmem:[#allocation6 + $0x90] sm:$0xff]
    %v119 = vld [vmem:[#allocation6 + $0xa0] sm:$0xff]
    %v120 = vld [vmem:[#allocation6 + $0xb0] sm:$0xff]
    %v121 = vld [vmem:[#allocation6 + $0xc0] sm:$0xff]
    %v122 = vld [vmem:[#allocation6 + $0xd0] sm:$0xff]
    %v123 = vld [vmem:[#allocation6 + $0xe0] sm:$0xff]
    %v124 = vld [vmem:[#allocation6 + $0xf0] sm:$0xff]
    %v125 = vld [vmem:[#allocation8] sm:$0x3]
    %v127 = vperm.slane %v125, 0
    %v128 = vperm.slane %v125, 1
    %v147 = vunpack.c.l.b16 %v109
    %v148 = vunpack.c.h.b16 %v109
    %v149 = vunpack.c.l.b16 %v110
    %v150 = vunpack.c.h.b16 %v110
    %v151 = vunpack.c.l.b16 %v111
    %v152 = vunpack.c.h.b16 %v111
    %v153 = vunpack.c.l.b16 %v112
    %v154 = vunpack.c.h.b16 %v112
    %v155 = vunpack.c.l.b16 %v113
    %v156 = vunpack.c.h.b16 %v113
    %v157 = vunpack.c.l.b16 %v114
    %v158 = vunpack.c.h.b16 %v114
    %v159 = vunpack.c.l.b16 %v115
    %v160 = vunpack.c.h.b16 %v115
    %v161 = vunpack.c.l.b16 %v116
    %v162 = vunpack.c.h.b16 %v116
    %v163 = vunpack.c.l.b16 %v117
    %v164 = vunpack.c.h.b16 %v117
    %v165 = vunpack.c.l.b16 %v118
    %v166 = vunpack.c.h.b16 %v118
    %v167 = vunpack.c.l.b16 %v119
    %v168 = vunpack.c.h.b16 %v119
    %v169 = vunpack.c.l.b16 %v120
    %v170 = vunpack.c.h.b16 %v120
    %v171 = vunpack.c.l.b16 %v121
    %v172 = vunpack.c.h.b16 %v121
    %v173 = vunpack.c.l.b16 %v122
    %v174 = vunpack.c.h.b16 %v122
    %v175 = vunpack.c.l.b16 %v123
    %v176 = vunpack.c.h.b16 %v123
    %v177 = vunpack.c.l.b16 %v124
    %v178 = vunpack.c.h.b16 %v124
    %v179 = vpack.c.b16 %v149, %v147
    %v180 = vpack.c.b16 %v150, %v148
    %v181 = vpack.c.b16 %v153, %v151
    %v182 = vpack.c.b16 %v154, %v152
    %v183 = vpack.c.b16 %v157, %v155
    %v184 = vpack.c.b16 %v158, %v156
    %v185 = vpack.c.b16 %v161, %v159
    %v186 = vpack.c.b16 %v162, %v160
    %v187 = vpack.c.b16 %v165, %v163
    %v188 = vpack.c.b16 %v166, %v164
    %v189 = vpack.c.b16 %v169, %v167
    %v190 = vpack.c.b16 %v170, %v168
    %v191 = vpack.c.b16 %v173, %v171
    %v192 = vpack.c.b16 %v174, %v172
    %v193 = vpack.c.b16 %v177, %v175
    %v194 = vpack.c.b16 %v178, %v176
    %211 = vmatpush.bf16.msra.mxu0 %v193
    %212 = vmatpush.bf16.msra.mxu0 %v191
    %213 = vmatpush.bf16.msra.mxu0 %v189
    %214 = vmatpush.bf16.msra.mxu0 %v187
    %215 = vmatpush.bf16.msra.mxu0 %v185
    %216 = vmatpush.bf16.msra.mxu0 %v183
    %217 = vmatpush.bf16.msra.mxu0 %v181
    %218 = vmatpush.bf16.msra.mxu0 %v179
    %219 = vmatmul.bf16.gmra.mxu0 %v100
    %v220 = vpop.f32.mrf.mxu0
    %v221 = vadd.f32 %v127, %v220
    %v222 = vpop.f32.mrf.mxu0
    %v223 = vadd.f32 %v127, %v222
    %224 = vmatmul.bf16.gmra.mxu0 %v101
    %v225 = vpop.f32.mrf.mxu0
    %v226 = vadd.f32 %v127, %v225
    %v227 = vpop.f32.mrf.mxu0
    %v228 = vadd.f32 %v127, %v227
    %229 = vmatmul.bf16.gmra.mxu0 %v102
    %v230 = vpop.f32.mrf.mxu0
    %v231 = vadd.f32 %v127, %v230
    %v232 = vpop.f32.mrf.mxu0
    %v233 = vadd.f32 %v127, %v232
    %234 = vmatmul.bf16.gmra.mxu0 %v103
    %v235 = vpop.f32.mrf.mxu0
    %v236 = vadd.f32 %v127, %v235
    %v237 = vpop.f32.mrf.mxu0
    %v238 = vadd.f32 %v127, %v237
    %239 = vmatmul.bf16.gmra.mxu0 %v104
    %v240 = vpop.f32.mrf.mxu0
    %v241 = vadd.f32 %v127, %v240
    %v242 = vpop.f32.mrf.mxu0
    %v243 = vadd.f32 %v127, %v242
    %244 = vmatmul.bf16.gmra.mxu0 %v105
    %v245 = vpop.f32.mrf.mxu0
    %v246 = vadd.f32 %v127, %v245
    %v247 = vpop.f32.mrf.mxu0
    %v248 = vadd.f32 %v127, %v247
    %249 = vmatmul.bf16.gmra.mxu0 %v106
    %v250 = vpop.f32.mrf.mxu0
    %v251 = vadd.f32 %v127, %v250
    %v252 = vpop.f32.mrf.mxu0
    %v253 = vadd.f32 %v127, %v252
    %254 = vmatmul.bf16.gmra.mxu0 %v107
    %v255 = vpop.f32.mrf.mxu0
    %v256 = vadd.f32 %v127, %v255
    %v257 = vpop.f32.mrf.mxu0
    %v258 = vadd.f32 %v127, %v257
    %259 = vmatmul.bf16.gmra.mxu0 %v108
    %v260 = vpop.f32.mrf.mxu0
    %v261 = vadd.f32 %v127, %v260
    %v262 = vpop.f32.mrf.mxu0
    %v263 = vadd.f32 %v127, %v262
    %264 = vdwg.mxu0
    %265 = vmatpush.bf16.msra.mxu0 %v194
    %266 = vmatpush.bf16.msra.mxu0 %v192
    %267 = vmatpush.bf16.msra.mxu0 %v190
    %268 = vmatpush.bf16.msra.mxu0 %v188
    %269 = vmatpush.bf16.msra.mxu0 %v186
    %270 = vmatpush.bf16.msra.mxu0 %v184
    %271 = vmatpush.bf16.msra.mxu0 %v182
    %272 = vmatpush.bf16.msra.mxu0 %v180
    %273 = vmatmul.bf16.gmra.mxu0 %v100
    %v274 = vpop.f32.mrf.mxu0
    %v275 = vadd.f32 %v128, %v274
    %v276 = vpop.f32.mrf.mxu0
    %v277 = vadd.f32 %v128, %v276
    %278 = vmatmul.bf16.gmra.mxu0 %v101
    %v279 = vpop.f32.mrf.mxu0
    %v280 = vadd.f32 %v128, %v279
    %v281 = vpop.f32.mrf.mxu0
    %v282 = vadd.f32 %v128, %v281
    %283 = vmatmul.bf16.gmra.mxu0 %v102
    %v284 = vpop.f32.mrf.mxu0
    %v285 = vadd.f32 %v128, %v284
    %v286 = vpop.f32.mrf.mxu0
    %v287 = vadd.f32 %v128, %v286
    %288 = vmatmul.bf16.gmra.mxu0 %v103
    %v289 = vpop.f32.mrf.mxu0
    %v290 = vadd.f32 %v128, %v289
    %v291 = vpop.f32.mrf.mxu0
    %v292 = vadd.f32 %v128, %v291
    %293 = vmatmul.bf16.gmra.mxu0 %v104
    %v294 = vpop.f32.mrf.mxu0
    %v295 = vadd.f32 %v128, %v294
    %v296 = vpop.f32.mrf.mxu0
    %v297 = vadd.f32 %v128, %v296
    %298 = vmatmul.bf16.gmra.mxu0 %v105
    %v299 = vpop.f32.mrf.mxu0
    %v300 = vadd.f32 %v128, %v299
    %v301 = vpop.f32.mrf.mxu0
    %v302 = vadd.f32 %v128, %v301
    %303 = vmatmul.bf16.gmra.mxu0 %v106
    %v304 = vpop.f32.mrf.mxu0
    %v305 = vadd.f32 %v128, %v304
    %v306 = vpop.f32.mrf.mxu0
    %v307 = vadd.f32 %v128, %v306
    %308 = vmatmul.bf16.gmra.mxu0 %v107
    %v309 = vpop.f32.mrf.mxu0
    %v310 = vadd.f32 %v128, %v309
    %v311 = vpop.f32.mrf.mxu0
    %v312 = vadd.f32 %v128, %v311
    %313 = vmatmul.bf16.gmra.mxu0 %v108
    %v314 = vpop.f32.mrf.mxu0
    %v315 = vadd.f32 %v128, %v314
    %v316 = vpop.f32.mrf.mxu0
    %v317 = vadd.f32 %v128, %v316
    %318 = vdwg.mxu0
    %v319 = vmul.f32 %v221, 0.5
    %v320 = vmul.f32 %v275, 0.5
    %v321 = vmul.f32 %v223, 0.5
    %v322 = vmul.f32 %v277, 0.5
    %v323 = vmul.f32 %v226, 0.5
    %v324 = vmul.f32 %v280, 0.5
    %v325 = vmul.f32 %v228, 0.5
    %v326 = vmul.f32 %v282, 0.5
    %v327 = vmul.f32 %v231, 0.5
    %v328 = vmul.f32 %v285, 0.5
    %v329 = vmul.f32 %v233, 0.5
    %v330 = vmul.f32 %v287, 0.5
    %v331 = vmul.f32 %v236, 0.5
    %v332 = vmul.f32 %v290, 0.5
    %v333 = vmul.f32 %v238, 0.5
    %v334 = vmul.f32 %v292, 0.5
    %v335 = vmul.f32 %v241, 0.5
    %v336 = vmul.f32 %v295, 0.5
    %v337 = vmul.f32 %v243, 0.5
    %v338 = vmul.f32 %v297, 0.5
    %v339 = vmul.f32 %v246, 0.5
    %v340 = vmul.f32 %v300, 0.5
    %v341 = vmul.f32 %v248, 0.5
    %v342 = vmul.f32 %v302, 0.5
    %v343 = vmul.f32 %v251, 0.5
    %v344 = vmul.f32 %v305, 0.5
    %v345 = vmul.f32 %v253, 0.5
    %v346 = vmul.f32 %v307, 0.5
    %v347 = vmul.f32 %v256, 0.5
    %v348 = vmul.f32 %v310, 0.5
    %v349 = vmul.f32 %v258, 0.5
    %v350 = vmul.f32 %v312, 0.5
    %v351 = vmul.f32 %v261, 0.5
    %v352 = vmul.f32 %v315, 0.5
    %v353 = vmul.f32 %v263, 0.5
    %v354 = vmul.f32 %v317, 0.5
    %v355 = vmul.f32 %v221, 0.044715
    %v356 = vmul.f32 %v275, 0.044715
    %v357 = vmul.f32 %v223, 0.044715
    %v358 = vmul.f32 %v277, 0.044715
    %v359 = vmul.f32 %v226, 0.044715
    %v360 = vmul.f32 %v280, 0.044715
    %v361 = vmul.f32 %v228, 0.044715
    %v362 = vmul.f32 %v282, 0.044715
    %v363 = vmul.f32 %v231, 0.044715
    %v364 = vmul.f32 %v285, 0.044715
    %v365 = vmul.f32 %v233, 0.044715
    %v366 = vmul.f32 %v287, 0.044715
    %v367 = vmul.f32 %v236, 0.044715
    %v368 = vmul.f32 %v290, 0.044715
    %v369 = vmul.f32 %v238, 0.044715
    %v370 = vmul.f32 %v292, 0.044715
    %v371 = vmul.f32 %v241, 0.044715
    %v372 = vmul.f32 %v295, 0.044715
    %v373 = vmul.f32 %v243, 0.044715
    %v374 = vmul.f32 %v297, 0.044715
    %v375 = vmul.f32 %v246, 0.044715
    %v376 = vmul.f32 %v300, 0.044715
    %v377 = vmul.f32 %v248, 0.044715
    %v378 = vmul.f32 %v302, 0.044715
    %v379 = vmul.f32 %v251, 0.044715
    %v380 = vmul.f32 %v305, 0.044715
    %v381 = vmul.f32 %v253, 0.044715
    %v382 = vmul.f32 %v307, 0.044715
    %v383 = vmul.f32 %v256, 0.044715
    %v384 = vmul.f32 %v310, 0.044715
    %v385 = vmul.f32 %v258, 0.044715
    %v386 = vmul.f32 %v312, 0.044715
    %v387 = vmul.f32 %v261, 0.044715
    %v388 = vmul.f32 %v315, 0.044715
    %v389 = vmul.f32 %v263, 0.044715
    %v390 = vmul.f32 %v317, 0.044715
    %v391 = vmul.f32 %v355, %v221
    %v392 = vmul.f32 %v356, %v275
    %v393 = vmul.f32 %v357, %v223
    %v394 = vmul.f32 %v358, %v277
    %v395 = vmul.f32 %v359, %v226
    %v396 = vmul.f32 %v360, %v280
    %v397 = vmul.f32 %v361, %v228
    %v398 = vmul.f32 %v362, %v282
    %v399 = vmul.f32 %v363, %v231
    %v400 = vmul.f32 %v364, %v285
    %v401 = vmul.f32 %v365, %v233
    %v402 = vmul.f32 %v366, %v287
    %v403 = vmul.f32 %v367, %v236
    %v404 = vmul.f32 %v368, %v290
    %v405 = vmul.f32 %v369, %v238
    %v406 = vmul.f32 %v370, %v292
    %v407 = vmul.f32 %v371, %v241
    %v408 = vmul.f32 %v372, %v295
    %v409 = vmul.f32 %v373, %v243
    %v410 = vmul.f32 %v374, %v297
    %v411 = vmul.f32 %v375, %v246
    %v412 = vmul.f32 %v376, %v300
    %v413 = vmul.f32 %v377, %v248
    %v414 = vmul.f32 %v378, %v302
    %v415 = vmul.f32 %v379, %v251
    %v416 = vmul.f32 %v380, %v305
    %v417 = vmul.f32 %v381, %v253
    %v418 = vmul.f32 %v382, %v307
    %v419 = vmul.f32 %v383, %v256
    %v420 = vmul.f32 %v384, %v310
    %v421 = vmul.f32 %v385, %v258
    %v422 = vmul.f32 %v386, %v312
    %v423 = vmul.f32 %v387, %v261
    %v424 = vmul.f32 %v388, %v315
    %v425 = vmul.f32 %v389, %v263
    %v426 = vmul.f32 %v390, %v317
    %v427 = vmul.f32 %v391, %v221
    %v428 = vmul.f32 %v392, %v275
    %v429 = vmul.f32 %v393, %v223
    %v430 = vmul.f32 %v394, %v277
    %v431 = vmul.f32 %v395, %v226
    %v432 = vmul.f32 %v396, %v280
    %v433 = vmul.f32 %v397, %v228
    %v434 = vmul.f32 %v398, %v282
    %v435 = vmul.f32 %v399, %v231
    %v436 = vmul.f32 %v400, %v285
    %v437 = vmul.f32 %v401, %v233
    %v438 = vmul.f32 %v402, %v287
    %v439 = vmul.f32 %v403, %v236
    %v440 = vmul.f32 %v404, %v290
    %v441 = vmul.f32 %v405, %v238
    %v442 = vmul.f32 %v406, %v292
    %v443 = vmul.f32 %v407, %v241
    %v444 = vmul.f32 %v408, %v295
    %v445 = vmul.f32 %v409, %v243
    %v446 = vmul.f32 %v410, %v297
    %v447 = vmul.f32 %v411, %v246
    %v448 = vmul.f32 %v412, %v300
    %v449 = vmul.f32 %v413, %v248
    %v450 = vmul.f32 %v414, %v302
    %v451 = vmul.f32 %v415, %v251
    %v452 = vmul.f32 %v416, %v305
    %v453 = vmul.f32 %v417, %v253
    %v454 = vmul.f32 %v418, %v307
    %v455 = vmul.f32 %v419, %v256
    %v456 = vmul.f32 %v420, %v310
    %v457 = vmul.f32 %v421, %v258
    %v458 = vmul.f32 %v422, %v312
    %v459 = vmul.f32 %v423, %v261
    %v460 = vmul.f32 %v424, %v315
    %v461 = vmul.f32 %v425, %v263
    %v462 = vmul.f32 %v426, %v317
    %v463 = vadd.f32 %v221, %v427
    %v464 = vadd.f32 %v275, %v428
    %v465 = vadd.f32 %v223, %v429
    %v466 = vadd.f32 %v277, %v430
    %v467 = vadd.f32 %v226, %v431
    %v468 = vadd.f32 %v280, %v432
    %v469 = vadd.f32 %v228, %v433
    %v470 = vadd.f32 %v282, %v434
    %v471 = vadd.f32 %v231, %v435
    %v472 = vadd.f32 %v285, %v436
    %v473 = vadd.f32 %v233, %v437
    %v474 = vadd.f32 %v287, %v438
    %v475 = vadd.f32 %v236, %v439
    %v476 = vadd.f32 %v290, %v440
    %v477 = vadd.f32 %v238, %v441
    %v478 = vadd.f32 %v292, %v442
    %v479 = vadd.f32 %v241, %v443
    %v480 = vadd.f32 %v295, %v444
    %v481 = vadd.f32 %v243, %v445
    %v482 = vadd.f32 %v297, %v446
    %v483 = vadd.f32 %v246, %v447
    %v484 = vadd.f32 %v300, %v448
    %v485 = vadd.f32 %v248, %v449
    %v486 = vadd.f32 %v302, %v450
    %v487 = vadd.f32 %v251, %v451
    %v488 = vadd.f32 %v305, %v452
    %v489 = vadd.f32 %v253, %v453
    %v490 = vadd.f32 %v307, %v454
    %v491 = vadd.f32 %v256, %v455
    %v492 = vadd.f32 %v310, %v456
    %v493 = vadd.f32 %v258, %v457
    %v494 = vadd.f32 %v312, %v458
    %v495 = vadd.f32 %v261, %v459
    %v496 = vadd.f32 %v315, %v460
    %v497 = vadd.f32 %v263, %v461
    %v498 = vadd.f32 %v317, %v462
    %v499 = vmul.f32 %v463, 0.7978846
    %v500 = vmul.f32 %v464, 0.7978846
    %v501 = vmul.f32 %v465, 0.7978846
    %v502 = vmul.f32 %v466, 0.7978846
    %v503 = vmul.f32 %v467, 0.7978846
    %v504 = vmul.f32 %v468, 0.7978846
    %v505 = vmul.f32 %v469, 0.7978846
    %v506 = vmul.f32 %v470, 0.7978846
    %v507 = vmul.f32 %v471, 0.7978846
    %v508 = vmul.f32 %v472, 0.7978846
    %v509 = vmul.f32 %v473, 0.7978846
    %v510 = vmul.f32 %v474, 0.7978846
    %v511 = vmul.f32 %v475, 0.7978846
    %v512 = vmul.f32 %v476, 0.7978846
    %v513 = vmul.f32 %v477, 0.7978846
    %v514 = vmul.f32 %v478, 0.7978846
    %v515 = vmul.f32 %v479, 0.7978846
    %v516 = vmul.f32 %v480, 0.7978846
    %v517 = vmul.f32 %v481, 0.7978846
    %v518 = vmul.f32 %v482, 0.7978846
    %v519 = vmul.f32 %v483, 0.7978846
    %v520 = vmul.f32 %v484, 0.7978846
    %v521 = vmul.f32 %v485, 0.7978846
    %v522 = vmul.f32 %v486, 0.7978846
    %v523 = vmul.f32 %v487, 0.7978846
    %v524 = vmul.f32 %v488, 0.7978846
    %v525 = vmul.f32 %v489, 0.7978846
    %v526 = vmul.f32 %v490, 0.7978846
    %v527 = vmul.f32 %v491, 0.7978846
    %v528 = vmul.f32 %v492, 0.7978846
    %v529 = vmul.f32 %v493, 0.7978846
    %v530 = vmul.f32 %v494, 0.7978846
    %v531 = vmul.f32 %v495, 0.7978846
    %v532 = vmul.f32 %v496, 0.7978846
    %v533 = vmul.f32 %v497, 0.7978846
    %v534 = vmul.f32 %v498, 0.7978846
    %v535 = vtanh.pop %v499
    %v536 = vtanh.pop %v500
    %v537 = vtanh.pop %v501
    %v538 = vtanh.pop %v502
    %v539 = vtanh.pop %v503
    %v540 = vtanh.pop %v504
    %v541 = vtanh.pop %v505
    %v542 = vtanh.pop %v506
    %v543 = vtanh.pop %v507
    %v544 = vtanh.pop %v508
    %v545 = vtanh.pop %v509
    %v546 = vtanh.pop %v510
    %v547 = vtanh.pop %v511
    %v548 = vtanh.pop %v512
    %v549 = vtanh.pop %v513
    %v550 = vtanh.pop %v514
    %v551 = vtanh.pop %v515
    %v552 = vtanh.pop %v516
    %v553 = vtanh.pop %v517
    %v554 = vtanh.pop %v518
    %v555 = vtanh.pop %v519
    %v556 = vtanh.pop %v520
    %v557 = vtanh.pop %v521
    %v558 = vtanh.pop %v522
    %v559 = vtanh.pop %v523
    %v560 = vtanh.pop %v524
    %v561 = vtanh.pop %v525
    %v562 = vtanh.pop %v526
    %v563 = vtanh.pop %v527
    %v564 = vtanh.pop %v528
    %v565 = vtanh.pop %v529
    %v566 = vtanh.pop %v530
    %v567 = vtanh.pop %v531
    %v568 = vtanh.pop %v532
    %v569 = vtanh.pop %v533
    %v570 = vtanh.pop %v534
    %v571 = vadd.f32 %v535, 1.0
    %v572 = vadd.f32 %v536, 1.0
    %v573 = vadd.f32 %v537, 1.0
    %v574 = vadd.f32 %v538, 1.0
    %v575 = vadd.f32 %v539, 1.0
    %v576 = vadd.f32 %v540, 1.0
    %v577 = vadd.f32 %v541, 1.0
    %v578 = vadd.f32 %v542, 1.0
    %v579 = vadd.f32 %v543, 1.0
    %v580 = vadd.f32 %v544, 1.0
    %v581 = vadd.f32 %v545, 1.0
    %v582 = vadd.f32 %v546, 1.0
    %v583 = vadd.f32 %v547, 1.0
    %v584 = vadd.f32 %v548, 1.0
    %v585 = vadd.f32 %v549, 1.0
    %v586 = vadd.f32 %v550, 1.0
    %v587 = vadd.f32 %v551, 1.0
    %v588 = vadd.f32 %v552, 1.0
    %v589 = vadd.f32 %v553, 1.0
    %v590 = vadd.f32 %v554, 1.0
    %v591 = vadd.f32 %v555, 1.0
    %v592 = vadd.f32 %v556, 1.0
    %v593 = vadd.f32 %v557, 1.0
    %v594 = vadd.f32 %v558, 1.0
    %v595 = vadd.f32 %v559, 1.0
    %v596 = vadd.f32 %v560, 1.0
    %v597 = vadd.f32 %v561, 1.0
    %v598 = vadd.f32 %v562, 1.0
    %v599 = vadd.f32 %v563, 1.0
    %v600 = vadd.f32 %v564, 1.0
    %v601 = vadd.f32 %v565, 1.0
    %v602 = vadd.f32 %v566, 1.0
    %v603 = vadd.f32 %v567, 1.0
    %v604 = vadd.f32 %v568, 1.0
    %v605 = vadd.f32 %v569, 1.0
    %v606 = vadd.f32 %v570, 1.0
    %v607 = vmul.f32 %v319, %v571
    %v608 = vmul.f32 %v320, %v572
    %v609 = vmul.f32 %v321, %v573
    %v610 = vmul.f32 %v322, %v574
    %v611 = vmul.f32 %v323, %v575
    %v612 = vmul.f32 %v324, %v576
    %v613 = vmul.f32 %v325, %v577
    %v614 = vmul.f32 %v326, %v578
    %v615 = vmul.f32 %v327, %v579
    %v616 = vmul.f32 %v328, %v580
    %v617 = vmul.f32 %v329, %v581
    %v618 = vmul.f32 %v330, %v582
    %v619 = vmul.f32 %v331, %v583
    %v620 = vmul.f32 %v332, %v584
    %v621 = vmul.f32 %v333, %v585
    %v622 = vmul.f32 %v334, %v586
    %v623 = vmul.f32 %v335, %v587
    %v624 = vmul.f32 %v336, %v588
    %v625 = vmul.f32 %v337, %v589
    %v626 = vmul.f32 %v338, %v590
    %v627 = vmul.f32 %v339, %v591
    %v628 = vmul.f32 %v340, %v592
    %v629 = vmul.f32 %v341, %v593
    %v630 = vmul.f32 %v342, %v594
    %v631 = vmul.f32 %v343, %v595
    %v632 = vmul.f32 %v344, %v596
    %v633 = vmul.f32 %v345, %v597
    %v634 = vmul.f32 %v346, %v598
    %v635 = vmul.f32 %v347, %v599
    %v636 = vmul.f32 %v348, %v600
    %v637 = vmul.f32 %v349, %v601
    %v638 = vmul.f32 %v350, %v602
    %v639 = vmul.f32 %v351, %v603
    %v640 = vmul.f32 %v352, %v604
    %v641 = vmul.f32 %v353, %v605
    %v642 = vmul.f32 %v354, %v606
    %v643 = vpack.c.bf16 %v609, %v607
    %v644 = vpack.c.bf16 %v610, %v608
    %v645 = vpack.c.bf16 %v613, %v611
    %v646 = vpack.c.bf16 %v614, %v612
    %v647 = vpack.c.bf16 %v617, %v615
    %v648 = vpack.c.bf16 %v618, %v616
    %v649 = vpack.c.bf16 %v621, %v619
    %v650 = vpack.c.bf16 %v622, %v620
    %v651 = vpack.c.bf16 %v625, %v623
    %v652 = vpack.c.bf16 %v626, %v624
    %v653 = vpack.c.bf16 %v629, %v627
    %v654 = vpack.c.bf16 %v630, %v628
    %v655 = vpack.c.bf16 %v633, %v631
    %v656 = vpack.c.bf16 %v634, %v632
    %v657 = vpack.c.bf16 %v637, %v635
    %v658 = vpack.c.bf16 %v638, %v636
    %v659 = vpack.c.bf16 %v641, %v639
    %v660 = vpack.c.bf16 %v642, %v640
    %v661 = vld [vmem:[#allocation9] sm:$0xf]
    %v662 = vld [vmem:[#allocation9 + $0x4] sm:$0xf]
    %v663 = vld [vmem:[#allocation9 + $0x8] sm:$0xf]
    %v664 = vld [vmem:[#allocation9 + $0xc] sm:$0xf]
    %v665 = vld [vmem:[#allocation9 + $0x10] sm:$0xf]
    %v666 = vld [vmem:[#allocation9 + $0x14] sm:$0xf]
    %v667 = vld [vmem:[#allocation9 + $0x18] sm:$0xf]
    %v668 = vld [vmem:[#allocation9 + $0x1c] sm:$0xf]
    %v669 = vld [vmem:[#allocation9 + $0x20] sm:$0xf]
    %v670 = vld [vmem:[#allocation9 + $0x24] sm:$0xf]
    %v671 = vld [vmem:[#allocation9 + $0x28] sm:$0xf]
    %v672 = vld [vmem:[#allocation9 + $0x2c] sm:$0xf]
    %v673 = vld [vmem:[#allocation9 + $0x30] sm:$0xf]
    %v674 = vld [vmem:[#allocation9 + $0x34] sm:$0xf]
    %v675 = vld [vmem:[#allocation9 + $0x38] sm:$0xf]
    %v676 = vld [vmem:[#allocation9 + $0x3c] sm:$0xf]
    %v677 = vld [vmem:[#allocation9 + $0x40] sm:$0xf]
    %v678 = vld [vmem:[#allocation9 + $0x44] sm:$0xf]
    %v679 = vld [vmem:[#allocation9 + $0x48] sm:$0xf]
    %v680 = vld [vmem:[#allocation9 + $0x4c] sm:$0xf]
    %v681 = vld [vmem:[#allocation9 + $0x50] sm:$0xf]
    %v682 = vld [vmem:[#allocation9 + $0x54] sm:$0xf]
    %v683 = vld [vmem:[#allocation9 + $0x58] sm:$0xf]
    %v684 = vld [vmem:[#allocation9 + $0x5c] sm:$0xf]
    %v685 = vld [vmem:[#allocation9 + $0x60] sm:$0xf]
    %v686 = vld [vmem:[#allocation9 + $0x64] sm:$0xf]
    %v687 = vld [vmem:[#allocation9 + $0x68] sm:$0xf]
    %v688 = vld [vmem:[#allocation9 + $0x6c] sm:$0xf]
    %v689 = vld [vmem:[#allocation9 + $0x70] sm:$0xf]
    %v690 = vld [vmem:[#allocation9 + $0x74] sm:$0xf]
    %v691 = vld [vmem:[#allocation9 + $0x78] sm:$0xf]
    %v692 = vld [vmem:[#allocation9 + $0x7c] sm:$0xf]
    %v725 = vunpack.c.l.b16 %v661
    %v726 = vunpack.c.l.b16 %v662
    %v727 = vunpack.c.l.b16 %v663
    %v728 = vunpack.c.l.b16 %v664
    %v729 = vunpack.c.l.b16 %v665
    %v730 = vunpack.c.l.b16 %v666
    %v731 = vunpack.c.l.b16 %v667
    %v732 = vunpack.c.l.b16 %v668
    %v733 = vunpack.c.l.b16 %v669
    %v734 = vunpack.c.l.b16 %v670
    %v735 = vunpack.c.l.b16 %v671
    %v736 = vunpack.c.l.b16 %v672
    %v737 = vunpack.c.l.b16 %v673
    %v738 = vunpack.c.l.b16 %v674
    %v739 = vunpack.c.l.b16 %v675
    %v740 = vunpack.c.l.b16 %v676
    %v741 = vunpack.c.l.b16 %v677
    %v742 = vunpack.c.l.b16 %v678
    %v743 = vunpack.c.l.b16 %v679
    %v744 = vunpack.c.l.b16 %v680
    %v745 = vunpack.c.l.b16 %v681
    %v746 = vunpack.c.l.b16 %v682
    %v747 = vunpack.c.l.b16 %v683
    %v748 = vunpack.c.l.b16 %v684
    %v749 = vunpack.c.l.b16 %v685
    %v750 = vunpack.c.l.b16 %v686
    %v751 = vunpack.c.l.b16 %v687
    %v752 = vunpack.c.l.b16 %v688
    %v753 = vunpack.c.l.b16 %v689
    %v754 = vunpack.c.l.b16 %v690
    %v755 = vunpack.c.l.b16 %v691
    %v756 = vunpack.c.l.b16 %v692
    %v757 = vpack.c.b16 %v726, %v725
    %v758 = vpack.c.b16 %v728, %v727
    %v759 = vpack.c.b16 %v730, %v729
    %v760 = vpack.c.b16 %v732, %v731
    %v761 = vpack.c.b16 %v734, %v733
    %v762 = vpack.c.b16 %v736, %v735
    %v763 = vpack.c.b16 %v738, %v737
    %v764 = vpack.c.b16 %v740, %v739
    %v765 = vpack.c.b16 %v742, %v741
    %v766 = vpack.c.b16 %v744, %v743
    %v767 = vpack.c.b16 %v746, %v745
    %v768 = vpack.c.b16 %v748, %v747
    %v769 = vpack.c.b16 %v750, %v749
    %v770 = vpack.c.b16 %v752, %v751
    %v771 = vpack.c.b16 %v754, %v753
    %v772 = vpack.c.b16 %v756, %v755
    %789 = vmatpush.bf16.msra.mxu0 %v764
    %790 = vmatpush.bf16.msra.mxu0 %v763
    %791 = vmatpush.bf16.msra.mxu0 %v762
    %792 = vmatpush.bf16.msra.mxu0 %v761
    %793 = vmatpush.bf16.msra.mxu0 %v760
    %794 = vmatpush.bf16.msra.mxu0 %v759
    %795 = vmatpush.bf16.msra.mxu0 %v758
    %796 = vmatpush.bf16.msra.mxu0 %v757
    %797 = vmatmul.bf16.gmra.mxu0 %v643
    %v798 = vpop.f32.mrf.mxu0
    %v799 = vadd.f32 0.0, %v798
    %v800 = vpop.f32.mrf.mxu0
    %v801 = vadd.f32 0.0, %v800
    %802 = vmatmul.bf16.gmra.mxu0 %v645
    %v803 = vpop.f32.mrf.mxu0
    %v804 = vadd.f32 0.0, %v803
    %v805 = vpop.f32.mrf.mxu0
    %v806 = vadd.f32 0.0, %v805
    %807 = vmatmul.bf16.gmra.mxu0 %v647
    %v808 = vpop.f32.mrf.mxu0
    %v809 = vadd.f32 0.0, %v808
    %v810 = vpop.f32.mrf.mxu0
    %v811 = vadd.f32 0.0, %v810
    %812 = vmatmul.bf16.gmra.mxu0 %v649
    %v813 = vpop.f32.mrf.mxu0
    %v814 = vadd.f32 0.0, %v813
    %v815 = vpop.f32.mrf.mxu0
    %v816 = vadd.f32 0.0, %v815
    %817 = vmatmul.bf16.gmra.mxu0 %v651
    %v818 = vpop.f32.mrf.mxu0
    %v819 = vadd.f32 0.0, %v818
    %v820 = vpop.f32.mrf.mxu0
    %v821 = vadd.f32 0.0, %v820
    %822 = vmatmul.bf16.gmra.mxu0 %v653
    %v823 = vpop.f32.mrf.mxu0
    %v824 = vadd.f32 0.0, %v823
    %v825 = vpop.f32.mrf.mxu0
    %v826 = vadd.f32 0.0, %v825
    %827 = vmatmul.bf16.gmra.mxu0 %v655
    %v828 = vpop.f32.mrf.mxu0
    %v829 = vadd.f32 0.0, %v828
    %v830 = vpop.f32.mrf.mxu0
    %v831 = vadd.f32 0.0, %v830
    %832 = vmatmul.bf16.gmra.mxu0 %v657
    %v833 = vpop.f32.mrf.mxu0
    %v834 = vadd.f32 0.0, %v833
    %v835 = vpop.f32.mrf.mxu0
    %v836 = vadd.f32 0.0, %v835
    %837 = vmatmul.bf16.gmra.mxu0 %v659
    %v838 = vpop.f32.mrf.mxu0
    %v839 = vadd.f32 0.0, %v838
    %v840 = vpop.f32.mrf.mxu0
    %v841 = vadd.f32 0.0, %v840
    %842 = vdwg.mxu0
    %843 = vmatpush.bf16.msra.mxu0 %v772
    %844 = vmatpush.bf16.msra.mxu0 %v771
    %845 = vmatpush.bf16.msra.mxu0 %v770
    %846 = vmatpush.bf16.msra.mxu0 %v769
    %847 = vmatpush.bf16.msra.mxu0 %v768
    %848 = vmatpush.bf16.msra.mxu0 %v767
    %849 = vmatpush.bf16.msra.mxu0 %v766
    %850 = vmatpush.bf16.msra.mxu0 %v765
    %851 = vmatmul.bf16.gmra.mxu0 %v644
    %v852 = vpop.f32.mrf.mxu0
    %v853 = vadd.f32 %v799, %v852
    %v854 = vpop.f32.mrf.mxu0
    %v855 = vadd.f32 %v801, %v854
    %856 = vmatmul.bf16.gmra.mxu0 %v646
    %v857 = vpop.f32.mrf.mxu0
    %v858 = vadd.f32 %v804, %v857
    %v859 = vpop.f32.mrf.mxu0
    %v860 = vadd.f32 %v806, %v859
    %861 = vmatmul.bf16.gmra.mxu0 %v648
    %v862 = vpop.f32.mrf.mxu0
    %v863 = vadd.f32 %v809, %v862
    %v864 = vpop.f32.mrf.mxu0
    %v865 = vadd.f32 %v811, %v864
    %866 = vmatmul.bf16.gmra.mxu0 %v650
    %v867 = vpop.f32.mrf.mxu0
    %v868 = vadd.f32 %v814, %v867
    %v869 = vpop.f32.mrf.mxu0
    %v870 = vadd.f32 %v816, %v869
    %871 = vmatmul.bf16.gmra.mxu0 %v652
    %v872 = vpop.f32.mrf.mxu0
    %v873 = vadd.f32 %v819, %v872
    %v874 = vpop.f32.mrf.mxu0
    %v875 = vadd.f32 %v821, %v874
    %876 = vmatmul.bf16.gmra.mxu0 %v654
    %v877 = vpop.f32.mrf.mxu0
    %v878 = vadd.f32 %v824, %v877
    %v879 = vpop.f32.mrf.mxu0
    %v880 = vadd.f32 %v826, %v879
    %881 = vmatmul.bf16.gmra.mxu0 %v656
    %v882 = vpop.f32.mrf.mxu0
    %v883 = vadd.f32 %v829, %v882
    %v884 = vpop.f32.mrf.mxu0
    %v885 = vadd.f32 %v831, %v884
    %886 = vmatmul.bf16.gmra.mxu0 %v658
    %v887 = vpop.f32.mrf.mxu0
    %v888 = vadd.f32 %v834, %v887
    %v889 = vpop.f32.mrf.mxu0
    %v890 = vadd.f32 %v836, %v889
    %891 = vmatmul.bf16.gmra.mxu0 %v660
    %v892 = vpop.f32.mrf.mxu0
    %v893 = vadd.f32 %v839, %v892
    %v894 = vpop.f32.mrf.mxu0
    %v895 = vadd.f32 %v841, %v894
    %896 = vdwg.mxu0
    %897 = vst [vmem:[#allocation2] sm:$0xff] %v853
    %898 = vst [vmem:[#allocation2 + $0x8] sm:$0xff] %v855
    %899 = vst [vmem:[#allocation2 + $0x10] sm:$0xff] %v858
    %900 = vst [vmem:[#allocation2 + $0x18] sm:$0xff] %v860
    %901 = vst [vmem:[#allocation2 + $0x20] sm:$0xff] %v863
    %902 = vst [vmem:[#allocation2 + $0x28] sm:$0xff] %v865
    %903 = vst [vmem:[#allocation2 + $0x30] sm:$0xff] %v868
    %904 = vst [vmem:[#allocation2 + $0x38] sm:$0xff] %v870
    %905 = vst [vmem:[#allocation2 + $0x40] sm:$0xff] %v873
    %906 = vst [vmem:[#allocation2 + $0x48] sm:$0xff] %v875
    %907 = vst [vmem:[#allocation2 + $0x50] sm:$0xff] %v878
    %908 = vst [vmem:[#allocation2 + $0x58] sm:$0xff] %v880
    %909 = vst [vmem:[#allocation2 + $0x60] sm:$0xff] %v883
    %910 = vst [vmem:[#allocation2 + $0x68] sm:$0xff] %v885
    %911 = vst [vmem:[#allocation2 + $0x70] sm:$0xff] %v888
    %912 = vst [vmem:[#allocation2 + $0x78] sm:$0xff] %v890
    %913 = vst [vmem:[#allocation2 + $0x80] sm:$0xff] %v893
    %914 = vst [vmem:[#allocation2 + $0x88] sm:$0xff] %v895
    %v915 = vld [vmem:[#allocation6 + $0x8] sm:$0xff]
    %v916 = vld [vmem:[#allocation6 + $0x18] sm:$0xff]
    %v917 = vld [vmem:[#allocation6 + $0x28] sm:$0xff]
    %v918 = vld [vmem:[#allocation6 + $0x38] sm:$0xff]
    %v919 = vld [vmem:[#allocation6 + $0x48] sm:$0xff]
    %v920 = vld [vmem:[#allocation6 + $0x58] sm:$0xff]
    %v921 = vld [vmem:[#allocation6 + $0x68] sm:$0xff]
    %v922 = vld [vmem:[#allocation6 + $0x78] sm:$0xff]
    %v923 = vld [vmem:[#allocation6 + $0x88] sm:$0xff]
    %v924 = vld [vmem:[#allocation6 + $0x98] sm:$0xff]
    %v925 = vld [vmem:[#allocation6 + $0xa8] sm:$0xff]
    %v926 = vld [vmem:[#allocation6 + $0xb8] sm:$0xff]
    %v927 = vld [vmem:[#allocation6 + $0xc8] sm:$0xff]
    %v928 = vld [vmem:[#allocation6 + $0xd8] sm:$0xff]
    %v929 = vld [vmem:[#allocation6 + $0xe8] sm:$0xff]
    %v930 = vld [vmem:[#allocation6 + $0xf8] sm:$0xff]
    %v931 = vld [vmem:[#allocation8 + $0x2] sm:$0x3]
    %v933 = vperm.slane %v931, 0
    %v934 = vperm.slane %v931, 1
    %v953 = vunpack.c.l.b16 %v915
    %v954 = vunpack.c.h.b16 %v915
    %v955 = vunpack.c.l.b16 %v916
    %v956 = vunpack.c.h.b16 %v916
    %v957 = vunpack.c.l.b16 %v917
    %v958 = vunpack.c.h.b16 %v917
    %v959 = vunpack.c.l.b16 %v918
    %v960 = vunpack.c.h.b16 %v918
    %v961 = vunpack.c.l.b16 %v919
    %v962 = vunpack.c.h.b16 %v919
    %v963 = vunpack.c.l.b16 %v920
    %v964 = vunpack.c.h.b16 %v920
    %v965 = vunpack.c.l.b16 %v921
    %v966 = vunpack.c.h.b16 %v921
    %v967 = vunpack.c.l.b16 %v922
    %v968 = vunpack.c.h.b16 %v922
    %v969 = vunpack.c.l.b16 %v923
    %v970 = vunpack.c.h.b16 %v923
    %v971 = vunpack.c.l.b16 %v924
    %v972 = vunpack.c.h.b16 %v924
    %v973 = vunpack.c.l.b16 %v925
    %v974 = vunpack.c.h.b16 %v925
    %v975 = vunpack.c.l.b16 %v926
    %v976 = vunpack.c.h.b16 %v926
    %v977 = vunpack.c.l.b16 %v927
    %v978 = vunpack.c.h.b16 %v927
    %v979 = vunpack.c.l.b16 %v928
    %v980 = vunpack.c.h.b16 %v928
    %v981 = vunpack.c.l.b16 %v929
    %v982 = vunpack.c.h.b16 %v929
    %v983 = vunpack.c.l.b16 %v930
    %v984 = vunpack.c.h.b16 %v930
    %v985 = vpack.c.b16 %v955, %v953
    %v986 = vpack.c.b16 %v956, %v954
    %v987 = vpack.c.b16 %v959, %v957
    %v988 = vpack.c.b16 %v960, %v958
    %v989 = vpack.c.b16 %v963, %v961
    %v990 = vpack.c.b16 %v964, %v962
    %v991 = vpack.c.b16 %v967, %v965
    %v992 = vpack.c.b16 %v968, %v966
    %v993 = vpack.c.b16 %v971, %v969
    %v994 = vpack.c.b16 %v972, %v970
    %v995 = vpack.c.b16 %v975, %v973
    %v996 = vpack.c.b16 %v976, %v974
    %v997 = vpack.c.b16 %v979, %v977
    %v998 = vpack.c.b16 %v980, %v978
    %v999 = vpack.c.b16 %v983, %v981
    %v1000 = vpack.c.b16 %v984, %v982
    %1017 = vmatpush.bf16.msra.mxu0 %v999
    %1018 = vmatpush.bf16.msra.mxu0 %v997
    %1019 = vmatpush.bf16.msra.mxu0 %v995
    %1020 = vmatpush.bf16.msra.mxu0 %v993
    %1021 = vmatpush.bf16.msra.mxu0 %v991
    %1022 = vmatpush.bf16.msra.mxu0 %v989
    %1023 = vmatpush.bf16.msra.mxu0 %v987
    %1024 = vmatpush.bf16.msra.mxu0 %v985
    %1025 = vmatmul.bf16.gmra.mxu0 %v100
    %v1026 = vpop.f32.mrf.mxu0
    %v1027 = vadd.f32 %v933, %v1026
    %v1028 = vpop.f32.mrf.mxu0
    %v1029 = vadd.f32 %v933, %v1028
    %1030 = vmatmul.bf16.gmra.mxu0 %v101
    %v1031 = vpop.f32.mrf.mxu0
    %v1032 = vadd.f32 %v933, %v1031
    %v1033 = vpop.f32.mrf.mxu0
    %v1034 = vadd.f32 %v933, %v1033
    %1035 = vmatmul.bf16.gmra.mxu0 %v102
    %v1036 = vpop.f32.mrf.mxu0
    %v1037 = vadd.f32 %v933, %v1036
    %v1038 = vpop.f32.mrf.mxu0
    %v1039 = vadd.f32 %v933, %v1038
    %1040 = vmatmul.bf16.gmra.mxu0 %v103
    %v1041 = vpop.f32.mrf.mxu0
    %v1042 = vadd.f32 %v933, %v1041
    %v1043 = vpop.f32.mrf.mxu0
    %v1044 = vadd.f32 %v933, %v1043
    %1045 = vmatmul.bf16.gmra.mxu0 %v104
    %v1046 = vpop.f32.mrf.mxu0
    %v1047 = vadd.f32 %v933, %v1046
    %v1048 = vpop.f32.mrf.mxu0
    %v1049 = vadd.f32 %v933, %v1048
    %1050 = vmatmul.bf16.gmra.mxu0 %v105
    %v1051 = vpop.f32.mrf.mxu0
    %v1052 = vadd.f32 %v933, %v1051
    %v1053 = vpop.f32.mrf.mxu0
    %v1054 = vadd.f32 %v933, %v1053
    %1055 = vmatmul.bf16.gmra.mxu0 %v106
    %v1056 = vpop.f32.mrf.mxu0
    %v1057 = vadd.f32 %v933, %v1056
    %v1058 = vpop.f32.mrf.mxu0
    %v1059 = vadd.f32 %v933, %v1058
    %1060 = vmatmul.bf16.gmra.mxu0 %v107
    %v1061 = vpop.f32.mrf.mxu0
    %v1062 = vadd.f32 %v933, %v1061
    %v1063 = vpop.f32.mrf.mxu0
    %v1064 = vadd.f32 %v933, %v1063
    %1065 = vmatmul.bf16.gmra.mxu0 %v108
    %v1066 = vpop.f32.mrf.mxu0
    %v1067 = vadd.f32 %v933, %v1066
    %v1068 = vpop.f32.mrf.mxu0
    %v1069 = vadd.f32 %v933, %v1068
    %1070 = vdwg.mxu0
    %1071 = vmatpush.bf16.msra.mxu0 %v1000
    %1072 = vmatpush.bf16.msra.mxu0 %v998
    %1073 = vmatpush.bf16.msra.mxu0 %v996
    %1074 = vmatpush.bf16.msra.mxu0 %v994
    %1075 = vmatpush.bf16.msra.mxu0 %v992
    %1076 = vmatpush.bf16.msra.mxu0 %v990
    %1077 = vmatpush.bf16.msra.mxu0 %v988
    %1078 = vmatpush.bf16.msra.mxu0 %v986
    %1079 = vmatmul.bf16.gmra.mxu0 %v100
    %v1080 = vpop.f32.mrf.mxu0
    %v1081 = vadd.f32 %v934, %v1080
    %v1082 = vpop.f32.mrf.mxu0
    %v1083 = vadd.f32 %v934, %v1082
    %1084 = vmatmul.bf16.gmra.mxu0 %v101
    %v1085 = vpop.f32.mrf.mxu0
    %v1086 = vadd.f32 %v934, %v1085
    %v1087 = vpop.f32.mrf.mxu0
    %v1088 = vadd.f32 %v934, %v1087
    %1089 = vmatmul.bf16.gmra.mxu0 %v102
    %v1090 = vpop.f32.mrf.mxu0
    %v1091 = vadd.f32 %v934, %v1090
    %v1092 = vpop.f32.mrf.mxu0
    %v1093 = vadd.f32 %v934, %v1092
    %1094 = vmatmul.bf16.gmra.mxu0 %v103
    %v1095 = vpop.f32.mrf.mxu0
    %v1096 = vadd.f32 %v934, %v1095
    %v1097 = vpop.f32.mrf.mxu0
    %v1098 = vadd.f32 %v934, %v1097
    %1099 = vmatmul.bf16.gmra.mxu0 %v104
    %v1100 = vpop.f32.mrf.mxu0
    %v1101 = vadd.f32 %v934, %v1100
    %v1102 = vpop.f32.mrf.mxu0
    %v1103 = vadd.f32 %v934, %v1102
    %1104 = vmatmul.bf16.gmra.mxu0 %v105
    %v1105 = vpop.f32.mrf.mxu0
    %v1106 = vadd.f32 %v934, %v1105
    %v1107 = vpop.f32.mrf.mxu0
    %v1108 = vadd.f32 %v934, %v1107
    %1109 = vmatmul.bf16.gmra.mxu0 %v106
    %v1110 = vpop.f32.mrf.mxu0
    %v1111 = vadd.f32 %v934, %v1110
    %v1112 = vpop.f32.mrf.mxu0
    %v1113 = vadd.f32 %v934, %v1112
    %1114 = vmatmul.bf16.gmra.mxu0 %v107
    %v1115 = vpop.f32.mrf.mxu0
    %v1116 = vadd.f32 %v934, %v1115
    %v1117 = vpop.f32.mrf.mxu0
    %v1118 = vadd.f32 %v934, %v1117
    %1119 = vmatmul.bf16.gmra.mxu0 %v108
    %v1120 = vpop.f32.mrf.mxu0
    %v1121 = vadd.f32 %v934, %v1120
    %v1122 = vpop.f32.mrf.mxu0
    %v1123 = vadd.f32 %v934, %v1122
    %1124 = vdwg.mxu0
    %v1125 = vmul.f32 %v1027, 0.5
    %v1126 = vmul.f32 %v1081, 0.5
    %v1127 = vmul.f32 %v1029, 0.5
    %v1128 = vmul.f32 %v1083, 0.5
    %v1129 = vmul.f32 %v1032, 0.5
    %v1130 = vmul.f32 %v1086, 0.5
    %v1131 = vmul.f32 %v1034, 0.5
    %v1132 = vmul.f32 %v1088, 0.5
    %v1133 = vmul.f32 %v1037, 0.5
    %v1134 = vmul.f32 %v1091, 0.5
    %v1135 = vmul.f32 %v1039, 0.5
    %v1136 = vmul.f32 %v1093, 0.5
    %v1137 = vmul.f32 %v1042, 0.5
    %v1138 = vmul.f32 %v1096, 0.5
    %v1139 = vmul.f32 %v1044, 0.5
    %v1140 = vmul.f32 %v1098, 0.5
    %v1141 = vmul.f32 %v1047, 0.5
    %v1142 = vmul.f32 %v1101, 0.5
    %v1143 = vmul.f32 %v1049, 0.5
    %v1144 = vmul.f32 %v1103, 0.5
    %v1145 = vmul.f32 %v1052, 0.5
    %v1146 = vmul.f32 %v1106, 0.5
    %v1147 = vmul.f32 %v1054, 0.5
    %v1148 = vmul.f32 %v1108, 0.5
    %v1149 = vmul.f32 %v1057, 0.5
    %v1150 = vmul.f32 %v1111, 0.5
    %v1151 = vmul.f32 %v1059, 0.5
    %v1152 = vmul.f32 %v1113, 0.5
    %v1153 = vmul.f32 %v1062, 0.5
    %v1154 = vmul.f32 %v1116, 0.5
    %v1155 = vmul.f32 %v1064, 0.5
    %v1156 = vmul.f32 %v1118, 0.5
    %v1157 = vmul.f32 %v1067, 0.5
    %v1158 = vmul.f32 %v1121, 0.5
    %v1159 = vmul.f32 %v1069, 0.5
    %v1160 = vmul.f32 %v1123, 0.5
    %v1161 = vmul.f32 %v1027, 0.044715
    %v1162 = vmul.f32 %v1081, 0.044715
    %v1163 = vmul.f32 %v1029, 0.044715
    %v1164 = vmul.f32 %v1083, 0.044715
    %v1165 = vmul.f32 %v1032, 0.044715
    %v1166 = vmul.f32 %v1086, 0.044715
    %v1167 = vmul.f32 %v1034, 0.044715
    %v1168 = vmul.f32 %v1088, 0.044715
    %v1169 = vmul.f32 %v1037, 0.044715
    %v1170 = vmul.f32 %v1091, 0.044715
    %v1171 = vmul.f32 %v1039, 0.044715
    %v1172 = vmul.f32 %v1093, 0.044715
    %v1173 = vmul.f32 %v1042, 0.044715
    %v1174 = vmul.f32 %v1096, 0.044715
    %v1175 = vmul.f32 %v1044, 0.044715
    %v1176 = vmul.f32 %v1098, 0.044715
    %v1177 = vmul.f32 %v1047, 0.044715
    %v1178 = vmul.f32 %v1101, 0.044715
    %v1179 = vmul.f32 %v1049, 0.044715
    %v1180 = vmul.f32 %v1103, 0.044715
    %v1181 = vmul.f32 %v1052, 0.044715
    %v1182 = vmul.f32 %v1106, 0.044715
    %v1183 = vmul.f32 %v1054, 0.044715
    %v1184 = vmul.f32 %v1108, 0.044715
    %v1185 = vmul.f32 %v1057, 0.044715
    %v1186 = vmul.f32 %v1111, 0.044715
    %v1187 = vmul.f32 %v1059, 0.044715
    %v1188 = vmul.f32 %v1113, 0.044715
    %v1189 = vmul.f32 %v1062, 0.044715
    %v1190 = vmul.f32 %v1116, 0.044715
    %v1191 = vmul.f32 %v1064, 0.044715
    %v1192 = vmul.f32 %v1118, 0.044715
    %v1193 = vmul.f32 %v1067, 0.044715
    %v1194 = vmul.f32 %v1121, 0.044715
    %v1195 = vmul.f32 %v1069, 0.044715
    %v1196 = vmul.f32 %v1123, 0.044715
    %v1197 = vmul.f32 %v1161, %v1027
    %v1198 = vmul.f32 %v1162, %v1081
    %v1199 = vmul.f32 %v1163, %v1029
    %v1200 = vmul.f32 %v1164, %v1083
    %v1201 = vmul.f32 %v1165, %v1032
    %v1202 = vmul.f32 %v1166, %v1086
    %v1203 = vmul.f32 %v1167, %v1034
    %v1204 = vmul.f32 %v1168, %v1088
    %v1205 = vmul.f32 %v1169, %v1037
    %v1206 = vmul.f32 %v1170, %v1091
    %v1207 = vmul.f32 %v1171, %v1039
    %v1208 = vmul.f32 %v1172, %v1093
    %v1209 = vmul.f32 %v1173, %v1042
    %v1210 = vmul.f32 %v1174, %v1096
    %v1211 = vmul.f32 %v1175, %v1044
    %v1212 = vmul.f32 %v1176, %v1098
    %v1213 = vmul.f32 %v1177, %v1047
    %v1214 = vmul.f32 %v1178, %v1101
    %v1215 = vmul.f32 %v1179, %v1049
    %v1216 = vmul.f32 %v1180, %v1103
    %v1217 = vmul.f32 %v1181, %v1052
    %v1218 = vmul.f32 %v1182, %v1106
    %v1219 = vmul.f32 %v1183, %v1054
    %v1220 = vmul.f32 %v1184, %v1108
    %v1221 = vmul.f32 %v1185, %v1057
    %v1222 = vmul.f32 %v1186, %v1111
    %v1223 = vmul.f32 %v1187, %v1059
    %v1224 = vmul.f32 %v1188, %v1113
    %v1225 = vmul.f32 %v1189, %v1062
    %v1226 = vmul.f32 %v1190, %v1116
    %v1227 = vmul.f32 %v1191, %v1064
    %v1228 = vmul.f32 %v1192, %v1118
    %v1229 = vmul.f32 %v1193, %v1067
    %v1230 = vmul.f32 %v1194, %v1121
    %v1231 = vmul.f32 %v1195, %v1069
    %v1232 = vmul.f32 %v1196, %v1123
    %v1233 = vmul.f32 %v1197, %v1027
    %v1234 = vmul.f32 %v1198, %v1081
    %v1235 = vmul.f32 %v1199, %v1029
    %v1236 = vmul.f32 %v1200, %v1083
    %v1237 = vmul.f32 %v1201, %v1032
    %v1238 = vmul.f32 %v1202, %v1086
    %v1239 = vmul.f32 %v1203, %v1034
    %v1240 = vmul.f32 %v1204, %v1088
    %v1241 = vmul.f32 %v1205, %v1037
    %v1242 = vmul.f32 %v1206, %v1091
    %v1243 = vmul.f32 %v1207, %v1039
    %v1244 = vmul.f32 %v1208, %v1093
    %v1245 = vmul.f32 %v1209, %v1042
    %v1246 = vmul.f32 %v1210, %v1096
    %v1247 = vmul.f32 %v1211, %v1044
    %v1248 = vmul.f32 %v1212, %v1098
    %v1249 = vmul.f32 %v1213, %v1047
    %v1250 = vmul.f32 %v1214, %v1101
    %v1251 = vmul.f32 %v1215, %v1049
    %v1252 = vmul.f32 %v1216, %v1103
    %v1253 = vmul.f32 %v1217, %v1052
    %v1254 = vmul.f32 %v1218, %v1106
    %v1255 = vmul.f32 %v1219, %v1054
    %v1256 = vmul.f32 %v1220, %v1108
    %v1257 = vmul.f32 %v1221, %v1057
    %v1258 = vmul.f32 %v1222, %v1111
    %v1259 = vmul.f32 %v1223, %v1059
    %v1260 = vmul.f32 %v1224, %v1113
    %v1261 = vmul.f32 %v1225, %v1062
    %v1262 = vmul.f32 %v1226, %v1116
    %v1263 = vmul.f32 %v1227, %v1064
    %v1264 = vmul.f32 %v1228, %v1118
    %v1265 = vmul.f32 %v1229, %v1067
    %v1266 = vmul.f32 %v1230, %v1121
    %v1267 = vmul.f32 %v1231, %v1069
    %v1268 = vmul.f32 %v1232, %v1123
    %v1269 = vadd.f32 %v1027, %v1233
    %v1270 = vadd.f32 %v1081, %v1234
    %v1271 = vadd.f32 %v1029, %v1235
    %v1272 = vadd.f32 %v1083, %v1236
    %v1273 = vadd.f32 %v1032, %v1237
    %v1274 = vadd.f32 %v1086, %v1238
    %v1275 = vadd.f32 %v1034, %v1239
    %v1276 = vadd.f32 %v1088, %v1240
    %v1277 = vadd.f32 %v1037, %v1241
    %v1278 = vadd.f32 %v1091, %v1242
    %v1279 = vadd.f32 %v1039, %v1243
    %v1280 = vadd.f32 %v1093, %v1244
    %v1281 = vadd.f32 %v1042, %v1245
    %v1282 = vadd.f32 %v1096, %v1246
    %v1283 = vadd.f32 %v1044, %v1247
    %v1284 = vadd.f32 %v1098, %v1248
    %v1285 = vadd.f32 %v1047, %v1249
    %v1286 = vadd.f32 %v1101, %v1250
    %v1287 = vadd.f32 %v1049, %v1251
    %v1288 = vadd.f32 %v1103, %v1252
    %v1289 = vadd.f32 %v1052, %v1253
    %v1290 = vadd.f32 %v1106, %v1254
    %v1291 = vadd.f32 %v1054, %v1255
    %v1292 = vadd.f32 %v1108, %v1256
    %v1293 = vadd.f32 %v1057, %v1257
    %v1294 = vadd.f32 %v1111, %v1258
    %v1295 = vadd.f32 %v1059, %v1259
    %v1296 = vadd.f32 %v1113, %v1260
    %v1297 = vadd.f32 %v1062, %v1261
    %v1298 = vadd.f32 %v1116, %v1262
    %v1299 = vadd.f32 %v1064, %v1263
    %v1300 = vadd.f32 %v1118, %v1264
    %v1301 = vadd.f32 %v1067, %v1265
    %v1302 = vadd.f32 %v1121, %v1266
    %v1303 = vadd.f32 %v1069, %v1267
    %v1304 = vadd.f32 %v1123, %v1268
    %v1305 = vmul.f32 %v1269, 0.7978846
    %v1306 = vmul.f32 %v1270, 0.7978846
    %v1307 = vmul.f32 %v1271, 0.7978846
    %v1308 = vmul.f32 %v1272, 0.7978846
    %v1309 = vmul.f32 %v1273, 0.7978846
    %v1310 = vmul.f32 %v1274, 0.7978846
    %v1311 = vmul.f32 %v1275, 0.7978846
    %v1312 = vmul.f32 %v1276, 0.7978846
    %v1313 = vmul.f32 %v1277, 0.7978846
    %v1314 = vmul.f32 %v1278, 0.7978846
    %v1315 = vmul.f32 %v1279, 0.7978846
    %v1316 = vmul.f32 %v1280, 0.7978846
    %v1317 = vmul.f32 %v1281, 0.7978846
    %v1318 = vmul.f32 %v1282, 0.7978846
    %v1319 = vmul.f32 %v1283, 0.7978846
    %v1320 = vmul.f32 %v1284, 0.7978846
    %v1321 = vmul.f32 %v1285, 0.7978846
    %v1322 = vmul.f32 %v1286, 0.7978846
    %v1323 = vmul.f32 %v1287, 0.7978846
    %v1324 = vmul.f32 %v1288, 0.7978846
    %v1325 = vmul.f32 %v1289, 0.7978846
    %v1326 = vmul.f32 %v1290, 0.7978846
    %v1327 = vmul.f32 %v1291, 0.7978846
    %v1328 = vmul.f32 %v1292, 0.7978846
    %v1329 = vmul.f32 %v1293, 0.7978846
    %v1330 = vmul.f32 %v1294, 0.7978846
    %v1331 = vmul.f32 %v1295, 0.7978846
    %v1332 = vmul.f32 %v1296, 0.7978846
    %v1333 = vmul.f32 %v1297, 0.7978846
    %v1334 = vmul.f32 %v1298, 0.7978846
    %v1335 = vmul.f32 %v1299, 0.7978846
    %v1336 = vmul.f32 %v1300, 0.7978846
    %v1337 = vmul.f32 %v1301, 0.7978846
    %v1338 = vmul.f32 %v1302, 0.7978846
    %v1339 = vmul.f32 %v1303, 0.7978846
    %v1340 = vmul.f32 %v1304, 0.7978846
    %v1341 = vtanh.pop %v1305
    %v1342 = vtanh.pop %v1306
    %v1343 = vtanh.pop %v1307
    %v1344 = vtanh.pop %v1308
    %v1345 = vtanh.pop %v1309
    %v1346 = vtanh.pop %v1310
    %v1347 = vtanh.pop %v1311
    %v1348 = vtanh.pop %v1312
    %v1349 = vtanh.pop %v1313
    %v1350 = vtanh.pop %v1314
    %v1351 = vtanh.pop %v1315
    %v1352 = vtanh.pop %v1316
    %v1353 = vtanh.pop %v1317
    %v1354 = vtanh.pop %v1318
    %v1355 = vtanh.pop %v1319
    %v1356 = vtanh.pop %v1320
    %v1357 = vtanh.pop %v1321
    %v1358 = vtanh.pop %v1322
    %v1359 = vtanh.pop %v1323
    %v1360 = vtanh.pop %v1324
    %v1361 = vtanh.pop %v1325
    %v1362 = vtanh.pop %v1326
    %v1363 = vtanh.pop %v1327
    %v1364 = vtanh.pop %v1328
    %v1365 = vtanh.pop %v1329
    %v1366 = vtanh.pop %v1330
    %v1367 = vtanh.pop %v1331
    %v1368 = vtanh.pop %v1332
    %v1369 = vtanh.pop %v1333
    %v1370 = vtanh.pop %v1334
    %v1371 = vtanh.pop %v1335
    %v1372 = vtanh.pop %v1336
    %v1373 = vtanh.pop %v1337
    %v1374 = vtanh.pop %v1338
    %v1375 = vtanh.pop %v1339
    %v1376 = vtanh.pop %v1340
    %v1377 = vadd.f32 %v1341, 1.0
    %v1378 = vadd.f32 %v1342, 1.0
    %v1379 = vadd.f32 %v1343, 1.0
    %v1380 = vadd.f32 %v1344, 1.0
    %v1381 = vadd.f32 %v1345, 1.0
    %v1382 = vadd.f32 %v1346, 1.0
    %v1383 = vadd.f32 %v1347, 1.0
    %v1384 = vadd.f32 %v1348, 1.0
    %v1385 = vadd.f32 %v1349, 1.0
    %v1386 = vadd.f32 %v1350, 1.0
    %v1387 = vadd.f32 %v1351, 1.0
    %v1388 = vadd.f32 %v1352, 1.0
    %v1389 = vadd.f32 %v1353, 1.0
    %v1390 = vadd.f32 %v1354, 1.0
    %v1391 = vadd.f32 %v1355, 1.0
    %v1392 = vadd.f32 %v1356, 1.0
    %v1393 = vadd.f32 %v1357, 1.0
    %v1394 = vadd.f32 %v1358, 1.0
    %v1395 = vadd.f32 %v1359, 1.0
    %v1396 = vadd.f32 %v1360, 1.0
    %v1397 = vadd.f32 %v1361, 1.0
    %v1398 = vadd.f32 %v1362, 1.0
    %v1399 = vadd.f32 %v1363, 1.0
    %v1400 = vadd.f32 %v1364, 1.0
    %v1401 = vadd.f32 %v1365, 1.0
    %v1402 = vadd.f32 %v1366, 1.0
    %v1403 = vadd.f32 %v1367, 1.0
    %v1404 = vadd.f32 %v1368, 1.0
    %v1405 = vadd.f32 %v1369, 1.0
    %v1406 = vadd.f32 %v1370, 1.0
    %v1407 = vadd.f32 %v1371, 1.0
    %v1408 = vadd.f32 %v1372, 1.0
    %v1409 = vadd.f32 %v1373, 1.0
    %v1410 = vadd.f32 %v1374, 1.0
    %v1411 = vadd.f32 %v1375, 1.0
    %v1412 = vadd.f32 %v1376, 1.0
    %v1413 = vmul.f32 %v1125, %v1377
    %v1414 = vmul.f32 %v1126, %v1378
    %v1415 = vmul.f32 %v1127, %v1379
    %v1416 = vmul.f32 %v1128, %v1380
    %v1417 = vmul.f32 %v1129, %v1381
    %v1418 = vmul.f32 %v1130, %v1382
    %v1419 = vmul.f32 %v1131, %v1383
    %v1420 = vmul.f32 %v1132, %v1384
    %v1421 = vmul.f32 %v1133, %v1385
    %v1422 = vmul.f32 %v1134, %v1386
    %v1423 = vmul.f32 %v1135, %v1387
    %v1424 = vmul.f32 %v1136, %v1388
    %v1425 = vmul.f32 %v1137, %v1389
    %v1426 = vmul.f32 %v1138, %v1390
    %v1427 = vmul.f32 %v1139, %v1391
    %v1428 = vmul.f32 %v1140, %v1392
    %v1429 = vmul.f32 %v1141, %v1393
    %v1430 = vmul.f32 %v1142, %v1394
    %v1431 = vmul.f32 %v1143, %v1395
    %v1432 = vmul.f32 %v1144, %v1396
    %v1433 = vmul.f32 %v1145, %v1397
    %v1434 = vmul.f32 %v1146, %v1398
    %v1435 = vmul.f32 %v1147, %v1399
    %v1436 = vmul.f32 %v1148, %v1400
    %v1437 = vmul.f32 %v1149, %v1401
    %v1438 = vmul.f32 %v1150, %v1402
    %v1439 = vmul.f32 %v1151, %v1403
    %v1440 = vmul.f32 %v1152, %v1404
    %v1441 = vmul.f32 %v1153, %v1405
    %v1442 = vmul.f32 %v1154, %v1406
    %v1443 = vmul.f32 %v1155, %v1407
    %v1444 = vmul.f32 %v1156, %v1408
    %v1445 = vmul.f32 %v1157, %v1409
    %v1446 = vmul.f32 %v1158, %v1410
    %v1447 = vmul.f32 %v1159, %v1411
    %v1448 = vmul.f32 %v1160, %v1412
    %v1449 = vpack.c.bf16 %v1415, %v1413
    %v1450 = vpack.c.bf16 %v1416, %v1414
    %v1451 = vpack.c.bf16 %v1419, %v1417
    %v1452 = vpack.c.bf16 %v1420, %v1418
    %v1453 = vpack.c.bf16 %v1423, %v1421
    %v1454 = vpack.c.bf16 %v1424, %v1422
    %v1455 = vpack.c.bf16 %v1427, %v1425
    %v1456 = vpack.c.bf16 %v1428, %v1426
    %v1457 = vpack.c.bf16 %v1431, %v1429
    %v1458 = vpack.c.bf16 %v1432, %v1430
    %v1459 = vpack.c.bf16 %v1435, %v1433
    %v1460 = vpack.c.bf16 %v1436, %v1434
    %v1461 = vpack.c.bf16 %v1439, %v1437
    %v1462 = vpack.c.bf16 %v1440, %v1438
    %v1463 = vpack.c.bf16 %v1443, %v1441
    %v1464 = vpack.c.bf16 %v1444, %v1442
    %v1465 = vpack.c.bf16 %v1447, %v1445
    %v1466 = vpack.c.bf16 %v1448, %v1446
    %v1467 = vld [vmem:[#allocation9 + $0x80] sm:$0xf]
    %v1468 = vld [vmem:[#allocation9 + $0x84] sm:$0xf]
    %v1469 = vld [vmem:[#allocation9 + $0x88] sm:$0xf]
    %v1470 = vld [vmem:[#allocation9 + $0x8c] sm:$0xf]
    %v1471 = vld [vmem:[#allocation9 + $0x90] sm:$0xf]
    %v1472 = vld [vmem:[#allocation9 + $0x94] sm:$0xf]
    %v1473 = vld [vmem:[#allocation9 + $0x98] sm:$0xf]
    %v1474 = vld [vmem:[#allocation9 + $0x9c] sm:$0xf]
    %v1475 = vld [vmem:[#allocation9 + $0xa0] sm:$0xf]
    %v1476 = vld [vmem:[#allocation9 + $0xa4] sm:$0xf]
    %v1477 = vld [vmem:[#allocation9 + $0xa8] sm:$0xf]
    %v1478 = vld [vmem:[#allocation9 + $0xac] sm:$0xf]
    %v1479 = vld [vmem:[#allocation9 + $0xb0] sm:$0xf]
    %v1480 = vld [vmem:[#allocation9 + $0xb4] sm:$0xf]
    %v1481 = vld [vmem:[#allocation9 + $0xb8] sm:$0xf]
    %v1482 = vld [vmem:[#allocation9 + $0xbc] sm:$0xf]
    %v1483 = vld [vmem:[#allocation9 + $0xc0] sm:$0xf]
    %v1484 = vld [vmem:[#allocation9 + $0xc4] sm:$0xf]
    %v1485 = vld [vmem:[#allocation9 + $0xc8] sm:$0xf]
    %v1486 = vld [vmem:[#allocation9 + $0xcc] sm:$0xf]
    %v1487 = vld [vmem:[#allocation9 + $0xd0] sm:$0xf]
    %v1488 = vld [vmem:[#allocation9 + $0xd4] sm:$0xf]
    %v1489 = vld [vmem:[#allocation9 + $0xd8] sm:$0xf]
    %v1490 = vld [vmem:[#allocation9 + $0xdc] sm:$0xf]
    %v1491 = vld [vmem:[#allocation9 + $0xe0] sm:$0xf]
    %v1492 = vld [vmem:[#allocation9 + $0xe4] sm:$0xf]
    %v1493 = vld [vmem:[#allocation9 + $0xe8] sm:$0xf]
    %v1494 = vld [vmem:[#allocation9 + $0xec] sm:$0xf]
    %v1495 = vld [vmem:[#allocation9 + $0xf0] sm:$0xf]
    %v1496 = vld [vmem:[#allocation9 + $0xf4] sm:$0xf]
    %v1497 = vld [vmem:[#allocation9 + $0xf8] sm:$0xf]
    %v1498 = vld [vmem:[#allocation9 + $0xfc] sm:$0xf]
    %v1531 = vunpack.c.l.b16 %v1467
    %v1532 = vunpack.c.l.b16 %v1468
    %v1533 = vunpack.c.l.b16 %v1469
    %v1534 = vunpack.c.l.b16 %v1470
    %v1535 = vunpack.c.l.b16 %v1471
    %v1536 = vunpack.c.l.b16 %v1472
    %v1537 = vunpack.c.l.b16 %v1473
    %v1538 = vunpack.c.l.b16 %v1474
    %v1539 = vunpack.c.l.b16 %v1475
    %v1540 = vunpack.c.l.b16 %v1476
    %v1541 = vunpack.c.l.b16 %v1477
    %v1542 = vunpack.c.l.b16 %v1478
    %v1543 = vunpack.c.l.b16 %v1479
    %v1544 = vunpack.c.l.b16 %v1480
    %v1545 = vunpack.c.l.b16 %v1481
    %v1546 = vunpack.c.l.b16 %v1482
    %v1547 = vunpack.c.l.b16 %v1483
    %v1548 = vunpack.c.l.b16 %v1484
    %v1549 = vunpack.c.l.b16 %v1485
    %v1550 = vunpack.c.l.b16 %v1486
    %v1551 = vunpack.c.l.b16 %v1487
    %v1552 = vunpack.c.l.b16 %v1488
    %v1553 = vunpack.c.l.b16 %v1489
    %v1554 = vunpack.c.l.b16 %v1490
    %v1555 = vunpack.c.l.b16 %v1491
    %v1556 = vunpack.c.l.b16 %v1492
    %v1557 = vunpack.c.l.b16 %v1493
    %v1558 = vunpack.c.l.b16 %v1494
    %v1559 = vunpack.c.l.b16 %v1495
    %v1560 = vunpack.c.l.b16 %v1496
    %v1561 = vunpack.c.l.b16 %v1497
    %v1562 = vunpack.c.l.b16 %v1498
    %v1563 = vpack.c.b16 %v1532, %v1531
    %v1564 = vpack.c.b16 %v1534, %v1533
    %v1565 = vpack.c.b16 %v1536, %v1535
    %v1566 = vpack.c.b16 %v1538, %v1537
    %v1567 = vpack.c.b16 %v1540, %v1539
    %v1568 = vpack.c.b16 %v1542, %v1541
    %v1569 = vpack.c.b16 %v1544, %v1543
    %v1570 = vpack.c.b16 %v1546, %v1545
    %v1571 = vpack.c.b16 %v1548, %v1547
    %v1572 = vpack.c.b16 %v1550, %v1549
    %v1573 = vpack.c.b16 %v1552, %v1551
    %v1574 = vpack.c.b16 %v1554, %v1553
    %v1575 = vpack.c.b16 %v1556, %v1555
    %v1576 = vpack.c.b16 %v1558, %v1557
    %v1577 = vpack.c.b16 %v1560, %v1559
    %v1578 = vpack.c.b16 %v1562, %v1561
    %1595 = vmatpush.bf16.msra.mxu0 %v1570
    %1596 = vmatpush.bf16.msra.mxu0 %v1569
    %1597 = vmatpush.bf16.msra.mxu0 %v1568
    %1598 = vmatpush.bf16.msra.mxu0 %v1567
    %1599 = vmatpush.bf16.msra.mxu0 %v1566
    %1600 = vmatpush.bf16.msra.mxu0 %v1565
    %1601 = vmatpush.bf16.msra.mxu0 %v1564
    %1602 = vmatpush.bf16.msra.mxu0 %v1563
    %1603 = vmatmul.bf16.gmra.mxu0 %v1449
    %v1604 = vpop.f32.mrf.mxu0
    %v1605 = vadd.f32 0.0, %v1604
    %v1606 = vpop.f32.mrf.mxu0
    %v1607 = vadd.f32 0.0, %v1606
    %1608 = vmatmul.bf16.gmra.mxu0 %v1451
    %v1609 = vpop.f32.mrf.mxu0
    %v1610 = vadd.f32 0.0, %v1609
    %v1611 = vpop.f32.mrf.mxu0
    %v1612 = vadd.f32 0.0, %v1611
    %1613 = vmatmul.bf16.gmra.mxu0 %v1453
    %v1614 = vpop.f32.mrf.mxu0
    %v1615 = vadd.f32 0.0, %v1614
    %v1616 = vpop.f32.mrf.mxu0
    %v1617 = vadd.f32 0.0, %v1616
    %1618 = vmatmul.bf16.gmra.mxu0 %v1455
    %v1619 = vpop.f32.mrf.mxu0
    %v1620 = vadd.f32 0.0, %v1619
    %v1621 = vpop.f32.mrf.mxu0
    %v1622 = vadd.f32 0.0, %v1621
    %1623 = vmatmul.bf16.gmra.mxu0 %v1457
    %v1624 = vpop.f32.mrf.mxu0
    %v1625 = vadd.f32 0.0, %v1624
    %v1626 = vpop.f32.mrf.mxu0
    %v1627 = vadd.f32 0.0, %v1626
    %1628 = vmatmul.bf16.gmra.mxu0 %v1459
    %v1629 = vpop.f32.mrf.mxu0
    %v1630 = vadd.f32 0.0, %v1629
    %v1631 = vpop.f32.mrf.mxu0
    %v1632 = vadd.f32 0.0, %v1631
    %1633 = vmatmul.bf16.gmra.mxu0 %v1461
    %v1634 = vpop.f32.mrf.mxu0
    %v1635 = vadd.f32 0.0, %v1634
    %v1636 = vpop.f32.mrf.mxu0
    %v1637 = vadd.f32 0.0, %v1636
    %1638 = vmatmul.bf16.gmra.mxu0 %v1463
    %v1639 = vpop.f32.mrf.mxu0
    %v1640 = vadd.f32 0.0, %v1639
    %v1641 = vpop.f32.mrf.mxu0
    %v1642 = vadd.f32 0.0, %v1641
    %1643 = vmatmul.bf16.gmra.mxu0 %v1465
    %v1644 = vpop.f32.mrf.mxu0
    %v1645 = vadd.f32 0.0, %v1644
    %v1646 = vpop.f32.mrf.mxu0
    %v1647 = vadd.f32 0.0, %v1646
    %1648 = vdwg.mxu0
    %1649 = vmatpush.bf16.msra.mxu0 %v1578
    %1650 = vmatpush.bf16.msra.mxu0 %v1577
    %1651 = vmatpush.bf16.msra.mxu0 %v1576
    %1652 = vmatpush.bf16.msra.mxu0 %v1575
    %1653 = vmatpush.bf16.msra.mxu0 %v1574
    %1654 = vmatpush.bf16.msra.mxu0 %v1573
    %1655 = vmatpush.bf16.msra.mxu0 %v1572
    %1656 = vmatpush.bf16.msra.mxu0 %v1571
    %1657 = vmatmul.bf16.gmra.mxu0 %v1450
    %v1658 = vpop.f32.mrf.mxu0
    %v1659 = vadd.f32 %v1605, %v1658
    %v1660 = vpop.f32.mrf.mxu0
    %v1661 = vadd.f32 %v1607, %v1660
    %1662 = vmatmul.bf16.gmra.mxu0 %v1452
    %v1663 = vpop.f32.mrf.mxu0
    %v1664 = vadd.f32 %v1610, %v1663
    %v1665 = vpop.f32.mrf.mxu0
    %v1666 = vadd.f32 %v1612, %v1665
    %1667 = vmatmul.bf16.gmra.mxu0 %v1454
    %v1668 = vpop.f32.mrf.mxu0
    %v1669 = vadd.f32 %v1615, %v1668
    %v1670 = vpop.f32.mrf.mxu0
    %v1671 = vadd.f32 %v1617, %v1670
    %1672 = vmatmul.bf16.gmra.mxu0 %v1456
    %v1673 = vpop.f32.mrf.mxu0
    %v1674 = vadd.f32 %v1620, %v1673
    %v1675 = vpop.f32.mrf.mxu0
    %v1676 = vadd.f32 %v1622, %v1675
    %1677 = vmatmul.bf16.gmra.mxu0 %v1458
    %v1678 = vpop.f32.mrf.mxu0
    %v1679 = vadd.f32 %v1625, %v1678
    %v1680 = vpop.f32.mrf.mxu0
    %v1681 = vadd.f32 %v1627, %v1680
    %1682 = vmatmul.bf16.gmra.mxu0 %v1460
    %v1683 = vpop.f32.mrf.mxu0
    %v1684 = vadd.f32 %v1630, %v1683
    %v1685 = vpop.f32.mrf.mxu0
    %v1686 = vadd.f32 %v1632, %v1685
    %1687 = vmatmul.bf16.gmra.mxu0 %v1462
    %v1688 = vpop.f32.mrf.mxu0
    %v1689 = vadd.f32 %v1635, %v1688
    %v1690 = vpop.f32.mrf.mxu0
    %v1691 = vadd.f32 %v1637, %v1690
    %1692 = vmatmul.bf16.gmra.mxu0 %v1464
    %v1693 = vpop.f32.mrf.mxu0
    %v1694 = vadd.f32 %v1640, %v1693
    %v1695 = vpop.f32.mrf.mxu0
    %v1696 = vadd.f32 %v1642, %v1695
    %1697 = vmatmul.bf16.gmra.mxu0 %v1466
    %v1698 = vpop.f32.mrf.mxu0
    %v1699 = vadd.f32 %v1645, %v1698
    %v1700 = vpop.f32.mrf.mxu0
    %v1701 = vadd.f32 %v1647, %v1700
    %1702 = vdwg.mxu0
    %v1703 = vld [vmem:[#allocation2] sm:$0xff]
    %v1704 = vld [vmem:[#allocation2 + $0x8] sm:$0xff]
    %v1705 = vld [vmem:[#allocation2 + $0x10] sm:$0xff]
    %v1706 = vld [vmem:[#allocation2 + $0x18] sm:$0xff]
    %v1707 = vld [vmem:[#allocation2 + $0x20] sm:$0xff]
    %v1708 = vld [vmem:[#allocation2 + $0x28] sm:$0xff]
    %v1709 = vld [vmem:[#allocation2 + $0x30] sm:$0xff]
    %v1710 = vld [vmem:[#allocation2 + $0x38] sm:$0xff]
    %v1711 = vld [vmem:[#allocation2 + $0x40] sm:$0xff]
    %v1712 = vld [vmem:[#allocation2 + $0x48] sm:$0xff]
    %v1713 = vld [vmem:[#allocation2 + $0x50] sm:$0xff]
    %v1714 = vld [vmem:[#allocation2 + $0x58] sm:$0xff]
    %v1715 = vld [vmem:[#allocation2 + $0x60] sm:$0xff]
    %v1716 = vld [vmem:[#allocation2 + $0x68] sm:$0xff]
    %v1717 = vld [vmem:[#allocation2 + $0x70] sm:$0xff]
    %v1718 = vld [vmem:[#allocation2 + $0x78] sm:$0xff]
    %v1719 = vld [vmem:[#allocation2 + $0x80] sm:$0xff]
    %v1720 = vld [vmem:[#allocation2 + $0x88] sm:$0xff]
    %v1721 = vadd.f32 %v1703, %v1659
    %v1722 = vadd.f32 %v1704, %v1661
    %v1723 = vadd.f32 %v1705, %v1664
    %v1724 = vadd.f32 %v1706, %v1666
    %v1725 = vadd.f32 %v1707, %v1669
    %v1726 = vadd.f32 %v1708, %v1671
    %v1727 = vadd.f32 %v1709, %v1674
    %v1728 = vadd.f32 %v1710, %v1676
    %v1729 = vadd.f32 %v1711, %v1679
    %v1730 = vadd.f32 %v1712, %v1681
    %v1731 = vadd.f32 %v1713, %v1684
    %v1732 = vadd.f32 %v1714, %v1686
    %v1733 = vadd.f32 %v1715, %v1689
    %v1734 = vadd.f32 %v1716, %v1691
    %v1735 = vadd.f32 %v1717, %v1694
    %v1736 = vadd.f32 %v1718, %v1696
    %v1737 = vadd.f32 %v1719, %v1699
    %v1738 = vadd.f32 %v1720, %v1701
    %1739 = vst [vmem:[#allocation2] sm:$0xff] %v1721
    %1740 = vst [vmem:[#allocation2 + $0x8] sm:$0xff] %v1722
    %1741 = vst [vmem:[#allocation2 + $0x10] sm:$0xff] %v1723
    %1742 = vst [vmem:[#allocation2 + $0x18] sm:$0xff] %v1724
    %1743 = vst [vmem:[#allocation2 + $0x20] sm:$0xff] %v1725
    %1744 = vst [vmem:[#allocation2 + $0x28] sm:$0xff] %v1726
    %1745 = vst [vmem:[#allocation2 + $0x30] sm:$0xff] %v1727
    %1746 = vst [vmem:[#allocation2 + $0x38] sm:$0xff] %v1728
    %1747 = vst [vmem:[#allocation2 + $0x40] sm:$0xff] %v1729
    %1748 = vst [vmem:[#allocation2 + $0x48] sm:$0xff] %v1730
    %1749 = vst [vmem:[#allocation2 + $0x50] sm:$0xff] %v1731
    %1750 = vst [vmem:[#allocation2 + $0x58] sm:$0xff] %v1732
    %1751 = vst [vmem:[#allocation2 + $0x60] sm:$0xff] %v1733
    %1752 = vst [vmem:[#allocation2 + $0x68] sm:$0xff] %v1734
    %1753 = vst [vmem:[#allocation2 + $0x70] sm:$0xff] %v1735
    %1754 = vst [vmem:[#allocation2 + $0x78] sm:$0xff] %v1736
    %1755 = vst [vmem:[#allocation2 + $0x80] sm:$0xff] %v1737
    %1756 = vst [vmem:[#allocation2 + $0x88] sm:$0xff] %v1738
    %v1757 = vld [vmem:[#allocation2] sm:$0xff]
    %v1758 = vld [vmem:[#allocation2 + $0x8] sm:$0xff]
    %v1759 = vld [vmem:[#allocation2 + $0x10] sm:$0xff]
    %v1760 = vld [vmem:[#allocation2 + $0x18] sm:$0xff]
    %v1761 = vld [vmem:[#allocation2 + $0x20] sm:$0xff]
    %v1762 = vld [vmem:[#allocation2 + $0x28] sm:$0xff]
    %v1763 = vld [vmem:[#allocation2 + $0x30] sm:$0xff]
    %v1764 = vld [vmem:[#allocation2 + $0x38] sm:$0xff]
    %v1765 = vld [vmem:[#allocation2 + $0x40] sm:$0xff]
    %v1766 = vld [vmem:[#allocation2 + $0x48] sm:$0xff]
    %v1767 = vld [vmem:[#allocation2 + $0x50] sm:$0xff]
    %v1768 = vld [vmem:[#allocation2 + $0x58] sm:$0xff]
    %v1769 = vld [vmem:[#allocation2 + $0x60] sm:$0xff]
    %v1770 = vld [vmem:[#allocation2 + $0x68] sm:$0xff]
    %v1771 = vld [vmem:[#allocation2 + $0x70] sm:$0xff]
    %v1772 = vld [vmem:[#allocation2 + $0x78] sm:$0xff]
    %v1773 = vld [vmem:[#allocation2 + $0x80] sm:$0xff]
    %v1774 = vld [vmem:[#allocation2 + $0x88] sm:$0xff]
    %v1775 = vld [vmem:[%s4] sm:$0x1]
    %v1777 = vperm.slane %v1775, 0
    %v1779 = vadd.f32 %v1757, %v1777
    %v1780 = vadd.f32 %v1758, %v1777
    %v1781 = vadd.f32 %v1759, %v1777
    %v1782 = vadd.f32 %v1760, %v1777
    %v1783 = vadd.f32 %v1761, %v1777
    %v1784 = vadd.f32 %v1762, %v1777
    %v1785 = vadd.f32 %v1763, %v1777
    %v1786 = vadd.f32 %v1764, %v1777
    %v1787 = vadd.f32 %v1765, %v1777
    %v1788 = vadd.f32 %v1766, %v1777
    %v1789 = vadd.f32 %v1767, %v1777
    %v1790 = vadd.f32 %v1768, %v1777
    %v1791 = vadd.f32 %v1769, %v1777
    %v1792 = vadd.f32 %v1770, %v1777
    %v1793 = vadd.f32 %v1771, %v1777
    %v1794 = vadd.f32 %v1772, %v1777
    %v1795 = vadd.f32 %v1773, %v1777
    %v1796 = vadd.f32 %v1774, %v1777
    %1797 = vst [vmem:[#allocation11] sm:$0xff] %v1779
    %1798 = vst [vmem:[#allocation11 + $0x8] sm:$0xff] %v1780
    %1799 = vst [vmem:[#allocation11 + $0x10] sm:$0xff] %v1781
    %1800 = vst [vmem:[#allocation11 + $0x18] sm:$0xff] %v1782
    %1801 = vst [vmem:[#allocation11 + $0x20] sm:$0xff] %v1783
    %1802 = vst [vmem:[#allocation11 + $0x28] sm:$0xff] %v1784
    %1803 = vst [vmem:[#allocation11 + $0x30] sm:$0xff] %v1785
    %1804 = vst [vmem:[#allocation11 + $0x38] sm:$0xff] %v1786
    %1805 = vst [vmem:[#allocation11 + $0x40] sm:$0xff] %v1787
    %1806 = vst [vmem:[#allocation11 + $0x48] sm:$0xff] %v1788
    %1807 = vst [vmem:[#allocation11 + $0x50] sm:$0xff] %v1789
    %1808 = vst [vmem:[#allocation11 + $0x58] sm:$0xff] %v1790
    %1809 = vst [vmem:[#allocation11 + $0x60] sm:$0xff] %v1791
    %1810 = vst [vmem:[#allocation11 + $0x68] sm:$0xff] %v1792
    %1811 = vst [vmem:[#allocation11 + $0x70] sm:$0xff] %v1793
    %1812 = vst [vmem:[#allocation11 + $0x78] sm:$0xff] %v1794
    %1813 = vst [vmem:[#allocation11 + $0x80] sm:$0xff] %v1795
    %1814 = vst [vmem:[#allocation11 + $0x88] sm:$0xff] %v1796
    // Predicated region
    $region38: #{tpu_custom_call.1} parent=1 // pred_check
      _
    $region39: #{tpu_custom_call.1} parent=1 // pred_check_branch
      %1816 = sbr.rel (0) target = $region41
    $region40: #{tpu_custom_call.1} parent=1 // pred_region
      %1818 = vsyncadd [#allocation5], 0
      %s1819 = sshll.u32 [#allocation11], 4
      %s1820 = int_to_ptr.vmem [resolvable:$true] %s1819
      %s1821 = sshll.u32 %s5, 4
      %s1822 = int_to_ptr.hbm [resolvable:$true] %s1821
      %1827 = dma.vmem_to_hbm [thread:$0]  %s1820, 2304, %s1822, [#allocation5], 128, 128, 8
    $region41: #{tpu_custom_call.1} parent=1 // pred_fallthru
      _
    // Predicated region
    $region42: #{tpu_custom_call.1} parent=1 // pred_check
      _
    $region43: #{tpu_custom_call.1} parent=1 // pred_check_branch
      %1829 = sbr.rel (0) target = $region45
    $region44: #{tpu_custom_call.1} parent=1 // pred_region
      %1831 = dma.done [#allocation5], 2304
    $region45: #{tpu_custom_call.1} parent=1 // pred_fallthru
      _
    %1832 = vsyncpa [#allocation4], 1
    %1833 = vsyncpa [#allocation7], 1
    %1834 = vsyncpa [#allocation10], 1
    %1835 = vsyncpa [#allocation5], 1

// kernel: tpu_custom_call.1
$region0: #{tpu_custom_call.1}
  #allocation0 [shape = 'u32[]', space=smem, size = 0x4, offset = 0x4, fixed_abs, tag = 'smem constant byte address 0x4 - core index']
  #allocation1 [shape = 'u32[72,128]{1,0:T(1,128)}', space=vmem, size = 0x9000, scoped, tag = 'internal scratch']
  #allocation2 [shape = 'f32[144,128]{1,0:T(8,128)}', space=vmem, size = 0x12000, scoped, tag = 'scratch operand']
  %s0 = inlined_call_operand.hbm [shape: f32[144,128], index: 0, kind: input, shape index: {}]
  %s1 = inlined_call_operand.hbm [shape: bf16[128,512], index: 1, kind: input, shape index: {}]
  %s2 = inlined_call_operand.hbm [shape: f32[1,512], index: 2, kind: input, shape index: {}]
  %s3 = inlined_call_operand.hbm [shape: bf16[512,128], index: 3, kind: input, shape index: {}]
  %s4 = inlined_call_operand.vmem [shape: f32[1,128], index: 4, kind: input, shape index: {}]
  %s5 = inlined_call_operand.hbm [shape: f32[144,128], index: 5, kind: output, shape index: {}]
  %s6 = sld [smem:[#allocation0]]
  $region81: #{tpu_custom_call.1} parent=0
    _
  %s8 = ssub.s32 1, %s6
  %s9 = scalar_select 0, %s8, %s6
  $region1: #{tpu_custom_call.1} parent=0
    #allocation3 [shape = 'u8[73728]{0}', space=vmem, size = 0x12000, scoped, tag = 'input window, operand 0, single buffered']
    #allocation4 [shape = 's32[2]{0}', space=sflag, size = 0x8, scoped, tag = 'scoped memory for tpu_custom_call.1']
    #allocation5 [shape = 's32[2]{0}', space=sflag, size = 0x8, scoped, tag = 'scoped memory for tpu_custom_call.1']
    #allocation6 [shape = 'u8[131072]{0}', space=vmem, size = 0x20000, scoped, tag = 'input window, operand 1']
    #allocation7 [shape = 's32[2]{0}', space=sflag, size = 0x8, scoped, tag = 'scoped memory for tpu_custom_call.1']
    #allocation8 [shape = 'u8[2048]{0}', space=vmem, size = 0x800, scoped, tag = 'input window, operand 2']
    #allocation9 [shape = 'u8[131072]{0}', space=vmem, size = 0x20000, scoped, tag = 'input window, operand 3']
    #allocation10 [shape = 's32[2]{0}', space=sflag, size = 0x8, scoped, tag = 'scoped memory for tpu_custom_call.1']
    #allocation11 [shape = 'u8[73728]{0}', space=vmem, size = 0x12000, scoped, tag = 'output window, operand 0, single buffered']
    %10 = vsyncpa [#allocation4], 0
    %11 = vsyncpa [#allocation7], 0
    %s12 = scalar_lea.sflag [#allocation7], 1
    %13 = vsyncpa %s12, 0
    %14 = vsyncpa [#allocation10], 0
    %s15 = scalar_lea.sflag [#allocation10], 1
    %16 = vsyncpa %s15, 0
    %17 = vsyncpa [#allocation5], 0
    loop: start=0, step=1, limit=4
    $region2: #{tpu_custom_call.1} parent=1 // loop_pre_header
      _
    $region3: #{tpu_custom_call.1} parent=1 // loop_header
      %s19 = sphi 0, %s23
      %p20 = scmp.ge.s32.totalorder %s19, 4
      %s26 = sphi 0, %s38
      %s27 = sphi 0, %s34
      %s28 = sphi 0, %s26
      %s29 = sphi 0, %s27
      %s30 = sphi 0, %s28
      %s31 = sphi 0, %s29
      %s41 = sphi 0, %s43
      %s44 = sphi 0, %s41
      %s45 = sphi 0, %s44
      %s61 = sphi 0, %s45
      %s97 = sphi 0, %s99
      %s100 = sphi 0, %s97
      %s101 = sphi 0, %s100
      %s117 = sphi 0, %s101
      %s153 = sphi 0, %s155
      %s156 = sphi 0, %s153
      %s157 = sphi 0, %s156
      %s173 = sphi 0, %s157
      %s209 = sphi 0, %s211
      %s212 = sphi 0, %s209
      %s213 = sphi 0, %s212
      %s229 = sphi 0, %s213
      %s233 = sphi 0, %s233
      %s235 = sphi 0, %s233
      %s236 = sphi 0, %s235
      %s250 = sphi 0, %s236
      %s256 = sphi 0, %s258
      %s259 = sphi 0, %s256
      %s260 = sphi 0, %s259
      %s276 = sphi 0, %s260
    $region4: #{tpu_custom_call.1} parent=1 // loop_header_branch
      %22 = sbr.rel (%p20) target = $region8
    $region5: #{tpu_custom_call.1} parent=1 // loop_body
      %s24 = ssub.s32 %s19, 1
      %s25 = ssub.s32 %s19, 2
      %s32 = sadd.s32 1, %s27
      %p33 = scmp.ge.s32.totalorder %s32, 2
      %s34 = scalar_select %p33, 0, %s32
      %s35 = sadd.s32 1, %s26
      %s36 = scalar_select %p33, %s35, %s26
      %p37 = scmp.ge.s32.totalorder %s36, 1
      %s38 = scalar_select %p37, 0, %s36
      %s39 = ssub.s32 %s26, %s38
      %p40 = scmp.eq.s32.totalorder %s39, 0
      %s42 = sadd.s32 %s41, 1
      %s43 = scalar_select %p40, %s41, %s42
      %p46 = pneg %p40
      %p47 = scmp.eq.s32.totalorder %s19, 1
      %p48 = por %p46, %p47
      %p49 = scmp.ne.s32.totalorder %s41, %s44
      %p50 = scmp.eq.s32.totalorder %s19, 0
      %p51 = por %p49, %p50
      %p52 = scmp.ne.s32.totalorder %s41, %s44
      %p53 = scmp.eq.s32.totalorder %s24, 1
      %p54 = por %p52, %p53
      %p55 = scmp.ne.s32.totalorder %s44, %s45
      %p56 = scmp.eq.s32.totalorder %s24, 0
      %p57 = por %p55, %p56
      %p58 = scmp.ne.s32.totalorder %s44, %s45
      %p59 = scmp.eq.s32.totalorder %s25, 1
      %p60 = por %p58, %p59
      %p62 = scmp.ne.s32.totalorder %s45, %s61
      %p63 = scmp.eq.s32.totalorder %s25, 0
      %p64 = por %p62, %p63
      %p65 = scmp.lt.s32.totalorder %s26, 0
      %s66 = ssub.s32 0, %s26
      %s67 = scalar_select %p65, %s66, %s26
      %s68 = sand.u32 %s67, 1
      %s69 = ssub.s32 0, %s68
      %s70 = scalar_select %p65, %s69, %s68
      %p71 = scmp.ne.s32.totalorder %s70, 0
      %p72 = scmp.lt.s32.totalorder %s70, 0
      %p73 = pnand %p72, %p71
      %p74 = pneg %p73
      %s75 = sadd.s32 %s70, 2
      %s76 = scalar_select %p74, %s75, %s70
      %p77 = scmp.eq.s32.totalorder %s76, 0
      %s78 = ssub.s32 1, %s27
      %s79 = scalar_select %p77, %s27, %s78
      %p80 = scmp.lt.s32.totalorder %s38, 0
      %s81 = ssub.s32 0, %s38
      %s82 = scalar_select %p80, %s81, %s38
      %s83 = sand.u32 %s82, 1
      %s84 = ssub.s32 0, %s83
      %s85 = scalar_select %p80, %s84, %s83
      %p86 = scmp.ne.s32.totalorder %s85, 0
      %p87 = scmp.lt.s32.totalorder %s85, 0
      %p88 = pnand %p87, %p86
      %p89 = pneg %p88
      %s90 = sadd.s32 %s85, 2
      %s91 = scalar_select %p89, %s90, %s85
      %p92 = scmp.eq.s32.totalorder %s91, 0
      %s93 = ssub.s32 1, %s34
      %s94 = scalar_select %p92, %s34, %s93
      %s95 = ssub.s32 %s79, %s94
      %p96 = scmp.eq.s32.totalorder %s95, 0
      %s98 = sadd.s32 %s97, 1
      %s99 = scalar_select %p96, %s97, %s98
      %p102 = pneg %p96
      %p103 = scmp.eq.s32.totalorder %s19, 1
      %p104 = por %p102, %p103
      %p105 = scmp.ne.s32.totalorder %s97, %s100
      %p106 = scmp.eq.s32.totalorder %s19, 0
      %p107 = por %p105, %p106
      %p108 = scmp.ne.s32.totalorder %s97, %s100
      %p109 = scmp.eq.s32.totalorder %s24, 1
      %p110 = por %p108, %p109
      %p111 = scmp.ne.s32.totalorder %s100, %s101
      %p112 = scmp.eq.s32.totalorder %s24, 0
      %p113 = por %p111, %p112
      %p114 = scmp.ne.s32.totalorder %s100, %s101
      %p115 = scmp.eq.s32.totalorder %s25, 1
      %p116 = por %p114, %p115
      %p118 = scmp.ne.s32.totalorder %s101, %s117
      %p119 = scmp.eq.s32.totalorder %s25, 0
      %p120 = por %p118, %p119
      %p121 = scmp.lt.s32.totalorder %s26, 0
      %s122 = ssub.s32 0, %s26
      %s123 = scalar_select %p121, %s122, %s26
      %s124 = sand.u32 %s123, 1
      %s125 = ssub.s32 0, %s124
      %s126 = scalar_select %p121, %s125, %s124
      %p127 = scmp.ne.s32.totalorder %s126, 0
      %p128 = scmp.lt.s32.totalorder %s126, 0
      %p129 = pnand %p128, %p127
      %p130 = pneg %p129
      %s131 = sadd.s32 %s126, 2
      %s132 = scalar_select %p130, %s131, %s126
      %p133 = scmp.eq.s32.totalorder %s132, 0
      %s134 = ssub.s32 1, %s27
      %s135 = scalar_select %p133, %s27, %s134
      %p136 = scmp.lt.s32.totalorder %s38, 0
      %s137 = ssub.s32 0, %s38
      %s138 = scalar_select %p136, %s137, %s38
      %s139 = sand.u32 %s138, 1
      %s140 = ssub.s32 0, %s139
      %s141 = scalar_select %p136, %s140, %s139
      %p142 = scmp.ne.s32.totalorder %s141, 0
      %p143 = scmp.lt.s32.totalorder %s141, 0
      %p144 = pnand %p143, %p142
      %p145 = pneg %p144
      %s146 = sadd.s32 %s141, 2
      %s147 = scalar_select %p145, %s146, %s141
      %p148 = scmp.eq.s32.totalorder %s147, 0
      %s149 = ssub.s32 1, %s34
      %s150 = scalar_select %p148, %s34, %s149
      %s151 = ssub.s32 %s135, %s150
      %p152 = scmp.eq.s32.totalorder %s151, 0
      %s154 = sadd.s32 %s153, 1
      %s155 = scalar_select %p152, %s153, %s154
      %p158 = pneg %p152
      %p159 = scmp.eq.s32.totalorder %s19, 1
      %p160 = por %p158, %p159
      %p161 = scmp.ne.s32.totalorder %s153, %s156
      %p162 = scmp.eq.s32.totalorder %s19, 0
      %p163 = por %p161, %p162
      %p164 = scmp.ne.s32.totalorder %s153, %s156
      %p165 = scmp.eq.s32.totalorder %s24, 1
      %p166 = por %p164, %p165
      %p167 = scmp.ne.s32.totalorder %s156, %s157
      %p168 = scmp.eq.s32.totalorder %s24, 0
      %p169 = por %p167, %p168
      %p170 = scmp.ne.s32.totalorder %s156, %s157
      %p171 = scmp.eq.s32.totalorder %s25, 1
      %p172 = por %p170, %p171
      %p174 = scmp.ne.s32.totalorder %s157, %s173
      %p175 = scmp.eq.s32.totalorder %s25, 0
      %p176 = por %p174, %p175
      %p177 = scmp.lt.s32.totalorder %s26, 0
      %s178 = ssub.s32 0, %s26
      %s179 = scalar_select %p177, %s178, %s26
      %s180 = sand.u32 %s179, 1
      %s181 = ssub.s32 0, %s180
      %s182 = scalar_select %p177, %s181, %s180
      %p183 = scmp.ne.s32.totalorder %s182, 0
      %p184 = scmp.lt.s32.totalorder %s182, 0
      %p185 = pnand %p184, %p183
      %p186 = pneg %p185
      %s187 = sadd.s32 %s182, 2
      %s188 = scalar_select %p186, %s187, %s182
      %p189 = scmp.eq.s32.totalorder %s188, 0
      %s190 = ssub.s32 1, %s27
      %s191 = scalar_select %p189, %s27, %s190
      %p192 = scmp.lt.s32.totalorder %s38, 0
      %s193 = ssub.s32 0, %s38
      %s194 = scalar_select %p192, %s193, %s38
      %s195 = sand.u32 %s194, 1
      %s196 = ssub.s32 0, %s195
      %s197 = scalar_select %p192, %s196, %s195
      %p198 = scmp.ne.s32.totalorder %s197, 0
      %p199 = scmp.lt.s32.totalorder %s197, 0
      %p200 = pnand %p199, %p198
      %p201 = pneg %p200
      %s202 = sadd.s32 %s197, 2
      %s203 = scalar_select %p201, %s202, %s197
      %p204 = scmp.eq.s32.totalorder %s203, 0
      %s205 = ssub.s32 1, %s34
      %s206 = scalar_select %p204, %s34, %s205
      %s207 = ssub.s32 %s191, %s206
      %p208 = scmp.eq.s32.totalorder %s207, 0
      %s210 = sadd.s32 %s209, 1
      %s211 = scalar_select %p208, %s209, %s210
      %p214 = pneg %p208
      %p215 = scmp.eq.s32.totalorder %s19, 1
      %p216 = por %p214, %p215
      %p217 = scmp.ne.s32.totalorder %s209, %s212
      %p218 = scmp.eq.s32.totalorder %s19, 0
      %p219 = por %p217, %p218
      %p220 = scmp.ne.s32.totalorder %s209, %s212
      %p221 = scmp.eq.s32.totalorder %s24, 1
      %p222 = por %p220, %p221
      %p223 = scmp.ne.s32.totalorder %s212, %s213
      %p224 = scmp.eq.s32.totalorder %s24, 0
      %p225 = por %p223, %p224
      %p226 = scmp.ne.s32.totalorder %s212, %s213
      %p227 = scmp.eq.s32.totalorder %s25, 1
      %p228 = por %p226, %p227
      %p230 = scmp.ne.s32.totalorder %s213, %s229
      %p231 = scmp.eq.s32.totalorder %s25, 0
      %p232 = por %p230, %p231
      %s234 = sadd.s32 %s233, 1
      %p237 = scmp.eq.s32.totalorder %s19, 1
      %p238 = scmp.ne.s32.totalorder %s233, %s235
      %p239 = scmp.eq.s32.totalorder %s19, 0
      %p240 = por %p238, %p239
      %p241 = scmp.ne.s32.totalorder %s233, %s235
      %p242 = scmp.eq.s32.totalorder %s24, 1
      %p243 = por %p241, %p242
      %p244 = scmp.ne.s32.totalorder %s235, %s236
      %p245 = scmp.eq.s32.totalorder %s24, 0
      %p246 = por %p244, %p245
      %p247 = scmp.ne.s32.totalorder %s235, %s236
      %p248 = scmp.eq.s32.totalorder %s25, 1
      %p249 = por %p247, %p248
      %p251 = scmp.ne.s32.totalorder %s236, %s250
      %p252 = scmp.eq.s32.totalorder %s25, 0
      %p253 = por %p251, %p252
      %s254 = ssub.s32 %s26, %s38
      %p255 = scmp.eq.s32.totalorder %s254, 0
      %s257 = sadd.s32 %s256, 1
      %s258 = scalar_select %p255, %s256, %s257
      %p261 = pneg %p255
      %p262 = scmp.eq.s32.totalorder %s19, 1
      %p263 = por %p261, %p262
      %p264 = scmp.ne.s32.totalorder %s256, %s259
      %p265 = scmp.eq.s32.totalorder %s19, 0
      %p266 = por %p264, %p265
      %p267 = scmp.ne.s32.totalorder %s256, %s259
      %p268 = scmp.eq.s32.totalorder %s24, 1
      %p269 = por %p267, %p268
      %p270 = scmp.ne.s32.totalorder %s259, %s260
      %p271 = scmp.eq.s32.totalorder %s24, 0
      %p272 = por %p270, %p271
      %p273 = scmp.ne.s32.totalorder %s259, %s260
      %p274 = scmp.eq.s32.totalorder %s25, 1
      %p275 = por %p273, %p274
      %p277 = scmp.ne.s32.totalorder %s260, %s276
      %p278 = scmp.eq.s32.totalorder %s25, 0
      %p279 = por %p277, %p278
      %p280 = scmp.le.s32.totalorder 1, %s19
      %p281 = scmp.lt.s32.totalorder %s19, 3
      %p282 = pnand %p280, %p281
      %p283 = pneg %p282
      // Predicated region
      $region9: #{tpu_custom_call.1} parent=5 // pred_check
        _
      $region10: #{tpu_custom_call.1} parent=5 // pred_check_branch
        %285 = sbr.rel (%p282) target = $region12
      $region11: #{tpu_custom_call.1} parent=5 // pred_region
        %s286 = ssub.s32 %s19, 1
        // Predicated region
        $region13: #{tpu_custom_call.1} parent=11 // pred_check
          %p287 = pneg %p57
        $region14: #{tpu_custom_call.1} parent=11 // pred_check_branch
          %289 = sbr.rel (%p287) target = $region16
        $region15: #{tpu_custom_call.1} parent=11 // pred_region
          %s290 = smul.u32 18, %s28
          %292 = vsyncadd [#allocation4], 0
          %s293 = smul.addr %s290, 8
          %s294 = scalar_lea.hbm %s0, %s293
          %s295 = sshll.u32 %s294, 4
          %s296 = int_to_ptr.hbm [resolvable:$true] %s295
          %s297 = sshll.u32 [#allocation3], 4
          %s298 = int_to_ptr.vmem [resolvable:$true] %s297
          %303 = dma.hbm_to_vmem [thread:$0]  %s296, 2304, %s298, [#allocation4], 128, 128, 8
        $region16: #{tpu_custom_call.1} parent=11 // pred_fallthru
          _
        // Predicated region
        $region17: #{tpu_custom_call.1} parent=11 // pred_check
          %p304 = pneg %p246
        $region18: #{tpu_custom_call.1} parent=11 // pred_check_branch
          %306 = sbr.rel (%p304) target = $region20
        $region19: #{tpu_custom_call.1} parent=11 // pred_region
          _
        $region20: #{tpu_custom_call.1} parent=11 // pred_fallthru
          _
      $region12: #{tpu_custom_call.1} parent=5 // pred_fallthru
        _
      %p307 = scmp.lt.s32.totalorder %s19, 2
      // Predicated region
      $region21: #{tpu_custom_call.1} parent=5 // pred_check
        %p308 = pneg %p307
      $region22: #{tpu_custom_call.1} parent=5 // pred_check_branch
        %310 = sbr.rel (%p308) target = $region24
      $region23: #{tpu_custom_call.1} parent=5 // pred_region
        // Predicated region
        $region25: #{tpu_custom_call.1} parent=23 // pred_check
          %p311 = pneg %p107
        $region26: #{tpu_custom_call.1} parent=23 // pred_check_branch
          %313 = sbr.rel (%p311) target = $region28
        $region27: #{tpu_custom_call.1} parent=23 // pred_region
          %s314 = sand.u32 %s19, 1
          %s315 = scalar_lea.sflag [#allocation7], %s314
          %s316 = sand.u32 %s97, 1
          %s317 = smul.addr %s316, 128
          %s318 = scalar_lea.vmem [#allocation6], %s317
          %p319 = scmp.lt.s32.totalorder %s26, 0
          %s320 = ssub.s32 0, %s26
          %s321 = scalar_select %p319, %s320, %s26
          %s322 = sand.u32 %s321, 1
          %s323 = ssub.s32 0, %s322
          %s324 = scalar_select %p319, %s323, %s322
          %p325 = scmp.ne.s32.totalorder %s324, 0
          %p326 = scmp.lt.s32.totalorder %s324, 0
          %p327 = pnand %p326, %p325
          %p328 = pneg %p327
          %s329 = sadd.s32 %s324, 2
          %s330 = scalar_select %p328, %s329, %s324
          %p331 = scmp.eq.s32.totalorder %s330, 0
          %s332 = ssub.s32 1, %s27
          %s333 = scalar_select %p331, %s27, %s332
          %s334 = smul.u32 2, %s333
          %336 = vsyncadd %s315, 0
          %s337 = smul.addr %s334, 4
          %s338 = scalar_lea.hbm %s1, %s337
          %s339 = sshll.u32 %s338, 4
          %s340 = int_to_ptr.hbm [resolvable:$true] %s339
          %s341 = sshll.u32 %s318, 4
          %s342 = int_to_ptr.vmem [resolvable:$true] %s341
          %347 = dma.hbm_to_vmem [thread:$0]  %s340, 2048, %s342, %s315, 256, 128, 8
        $region28: #{tpu_custom_call.1} parent=23 // pred_fallthru
          _
        // Predicated region
        $region29: #{tpu_custom_call.1} parent=23 // pred_check
          %p348 = pneg %p163
        $region30: #{tpu_custom_call.1} parent=23 // pred_check_branch
          %350 = sbr.rel (%p348) target = $region32
        $region31: #{tpu_custom_call.1} parent=23 // pred_region
          %s351 = sand.u32 %s19, 1
          %s352 = scalar_lea.sflag [#allocation7], %s351
          %s353 = sand.u32 %s153, 1
          %s354 = smul.addr %s353, 2
          %s355 = scalar_lea.vmem [#allocation8], %s354
          %p356 = scmp.lt.s32.totalorder %s26, 0
          %s357 = ssub.s32 0, %s26
          %s358 = scalar_select %p356, %s357, %s26
          %s359 = sand.u32 %s358, 1
          %s360 = ssub.s32 0, %s359
          %s361 = scalar_select %p356, %s360, %s359
          %p362 = scmp.ne.s32.totalorder %s361, 0
          %p363 = scmp.lt.s32.totalorder %s361, 0
          %p364 = pnand %p363, %p362
          %p365 = pneg %p364
          %s366 = sadd.s32 %s361, 2
          %s367 = scalar_select %p365, %s366, %s361
          %p368 = scmp.eq.s32.totalorder %s367, 0
          %s369 = ssub.s32 1, %s27
          %s370 = scalar_select %p368, %s27, %s369
          %s371 = smul.u32 2, %s370
          %373 = vsyncadd %s352, 0
          %s374 = scalar_lea.hbm %s2, %s371
          %s376 = sshll.u32 %s374, 4
          %s377 = int_to_ptr.hbm [resolvable:$true] %s376
          %s378 = sshll.u32 %s355, 4
          %s379 = int_to_ptr.vmem [resolvable:$true] %s378
          %381 = dma.hbm_to_vmem [thread:$0]  %s377, 32, %s379, %s352
        $region32: #{tpu_custom_call.1} parent=23 // pred_fallthru
          _
        // Predicated region
        $region33: #{tpu_custom_call.1} parent=23 // pred_check
          %p382 = pneg %p219
        $region34: #{tpu_custom_call.1} parent=23 // pred_check_branch
          %384 = sbr.rel (%p382) target = $region36
        $region35: #{tpu_custom_call.1} parent=23 // pred_region
          %s385 = sand.u32 %s209, 1
          %s386 = scalar_lea.sflag [#allocation10], %s385
          %s387 = sand.u32 %s209, 1
          %s388 = smul.addr %s387, 128
          %s389 = scalar_lea.vmem [#allocation9], %s388
          %p390 = scmp.lt.s32.totalorder %s26, 0
          %s391 = ssub.s32 0, %s26
          %s392 = scalar_select %p390, %s391, %s26
          %s393 = sand.u32 %s392, 1
          %s394 = ssub.s32 0, %s393
          %s395 = scalar_select %p390, %s394, %s393
          %p396 = scmp.ne.s32.totalorder %s395, 0
          %p397 = scmp.lt.s32.totalorder %s395, 0
          %p398 = pnand %p397, %p396
          %p399 = pneg %p398
          %s400 = sadd.s32 %s395, 2
          %s401 = scalar_select %p399, %s400, %s395
          %p402 = scmp.eq.s32.totalorder %s401, 0
          %s403 = ssub.s32 1, %s27
          %s404 = scalar_select %p402, %s27, %s403
          %s405 = smul.u32 32, %s404
          %407 = vsyncadd %s386, 0
          %s408 = smul.addr %s405, 4
          %s409 = scalar_lea.hbm %s3, %s408
          %s410 = sshll.u32 %s409, 4
          %s411 = int_to_ptr.hbm [resolvable:$true] %s410
          %s412 = sshll.u32 %s389, 4
          %s413 = int_to_ptr.vmem [resolvable:$true] %s412
          %418 = dma.hbm_to_vmem [thread:$0]  %s411, 2048, %s413, %s386, 64, 64, 4
        $region36: #{tpu_custom_call.1} parent=23 // pred_fallthru
          _
      $region24: #{tpu_custom_call.1} parent=5 // pred_fallthru
        _
      %p419 = scmp.le.s32.totalorder 1, %s19
      %p420 = scmp.lt.s32.totalorder %s19, 3
      %p421 = pnand %p419, %p420
      %p422 = pneg %p421
      // Predicated region
      $region37: #{tpu_custom_call.1} parent=5 // pred_check
        _
      $region38: #{tpu_custom_call.1} parent=5 // pred_check_branch
        %424 = sbr.rel (%p421) target = $region40
      $region39: #{tpu_custom_call.1} parent=5 // pred_region
        %s425 = ssub.s32 %s19, 1
        // Predicated region
        $region41: #{tpu_custom_call.1} parent=39 // pred_check
          %p426 = pneg %p57
        $region42: #{tpu_custom_call.1} parent=39 // pred_check_branch
          %428 = sbr.rel (%p426) target = $region44
        $region43: #{tpu_custom_call.1} parent=39 // pred_region
          %430 = dma.done [#allocation4], 2304
        $region44: #{tpu_custom_call.1} parent=39 // pred_fallthru
          _
        %s431 = sand.u32 %s24, 1
        %s432 = scalar_lea.sflag [#allocation7], %s431
        %s433 = sand.u32 %s100, 1
        %s434 = smul.addr %s433, 128
        %s435 = scalar_lea.vmem [#allocation6], %s434
        // Predicated region
        $region45: #{tpu_custom_call.1} parent=39 // pred_check
          %p436 = pneg %p113
        $region46: #{tpu_custom_call.1} parent=39 // pred_check_branch
          %438 = sbr.rel (%p436) target = $region48
        $region47: #{tpu_custom_call.1} parent=39 // pred_region
          %440 = dma.done %s432, 2048
        $region48: #{tpu_custom_call.1} parent=39 // pred_fallthru
          _
        %s441 = sand.u32 %s24, 1
        %s442 = scalar_lea.sflag [#allocation7], %s441
        %s443 = sand.u32 %s156, 1
        %s444 = smul.addr %s443, 2
        %s445 = scalar_lea.vmem [#allocation8], %s444
        // Predicated region
        $region49: #{tpu_custom_call.1} parent=39 // pred_check
          %p446 = pneg %p169
        $region50: #{tpu_custom_call.1} parent=39 // pred_check_branch
          %448 = sbr.rel (%p446) target = $region52
        $region51: #{tpu_custom_call.1} parent=39 // pred_region
          %450 = dma.done %s442, 32
        $region52: #{tpu_custom_call.1} parent=39 // pred_fallthru
          _
        %s451 = sand.u32 %s212, 1
        %s452 = scalar_lea.sflag [#allocation10], %s451
        %s453 = sand.u32 %s212, 1
        %s454 = smul.addr %s453, 128
        %s455 = scalar_lea.vmem [#allocation9], %s454
        // Predicated region
        $region53: #{tpu_custom_call.1} parent=39 // pred_check
          %p456 = pneg %p225
        $region54: #{tpu_custom_call.1} parent=39 // pred_check_branch
          %458 = sbr.rel (%p456) target = $region56
        $region55: #{tpu_custom_call.1} parent=39 // pred_region
          %460 = dma.done %s452, 2048
        $region56: #{tpu_custom_call.1} parent=39 // pred_fallthru
          _
        %p461 = pneg %p57
        %p462 = pneg %p54
        %s463 = sand.u32 %s24, 1
        %s464 = scalar_lea.sflag [#allocation7], %s463
        %s465 = sand.u32 %s100, 1
        %s466 = smul.addr %s465, 128
        %s467 = scalar_lea.vmem [#allocation6], %s466
        %p468 = pneg %p113
        %p469 = pneg %p110
        %s470 = sand.u32 %s24, 1
        %s471 = scalar_lea.sflag [#allocation7], %s470
        %s472 = sand.u32 %s156, 1
        %s473 = smul.addr %s472, 2
        %s474 = scalar_lea.vmem [#allocation8], %s473
        %p475 = pneg %p169
        %p476 = pneg %p166
        %s477 = sand.u32 %s212, 1
        %s478 = scalar_lea.sflag [#allocation10], %s477
        %s479 = sand.u32 %s212, 1
        %s480 = smul.addr %s479, 128
        %s481 = scalar_lea.vmem [#allocation9], %s480
        %p482 = pneg %p225
        %p483 = pneg %p222
        %p484 = pneg %p246
        %p485 = pneg %p243
        %p486 = pneg %p272
        %p487 = pneg %p269
        %s488 = smul.u32 18, %s28
        %p489 = scmp.lt.s32.totalorder %s28, 0
        %s490 = ssub.s32 0, %s28
        %s491 = scalar_select %p489, %s490, %s28
        %s492 = sand.u32 %s491, 1
        %s493 = ssub.s32 0, %s492
        %s494 = scalar_select %p489, %s493, %s492
        %p495 = scmp.ne.s32.totalorder %s494, 0
        %p496 = scmp.lt.s32.totalorder %s494, 0
        %p497 = pnand %p496, %p495
        %p498 = pneg %p497
        %s499 = sadd.s32 %s494, 2
        %s500 = scalar_select %p498, %s499, %s494
        %p501 = scmp.eq.s32.totalorder %s500, 0
        %s502 = ssub.s32 1, %s29
        %s503 = scalar_select %p501, %s29, %s502
        %s504 = smul.u32 2, %s503
        %p505 = scmp.lt.s32.totalorder %s28, 0
        %s506 = ssub.s32 0, %s28
        %s507 = scalar_select %p505, %s506, %s28
        %s508 = sand.u32 %s507, 1
        %s509 = ssub.s32 0, %s508
        %s510 = scalar_select %p505, %s509, %s508
        %p511 = scmp.ne.s32.totalorder %s510, 0
        %p512 = scmp.lt.s32.totalorder %s510, 0
        %p513 = pnand %p512, %p511
        %p514 = pneg %p513
        %s515 = sadd.s32 %s510, 2
        %s516 = scalar_select %p514, %s515, %s510
        %p517 = scmp.eq.s32.totalorder %s516, 0
        %s518 = ssub.s32 1, %s29
        %s519 = scalar_select %p517, %s29, %s518
        %s520 = smul.u32 2, %s519
        %p521 = scmp.lt.s32.totalorder %s28, 0
        %s522 = ssub.s32 0, %s28
        %s523 = scalar_select %p521, %s522, %s28
        %s524 = sand.u32 %s523, 1
        %s525 = ssub.s32 0, %s524
        %s526 = scalar_select %p521, %s525, %s524
        %p527 = scmp.ne.s32.totalorder %s526, 0
        %p528 = scmp.lt.s32.totalorder %s526, 0
        %p529 = pnand %p528, %p527
        %p530 = pneg %p529
        %s531 = sadd.s32 %s526, 2
        %s532 = scalar_select %p530, %s531, %s526
        %p533 = scmp.eq.s32.totalorder %s532, 0
        %s534 = ssub.s32 1, %s29
        %s535 = scalar_select %p533, %s29, %s534
        %s536 = smul.u32 32, %s535
        %s537 = smul.u32 18, %s28
        %v538 = vld [vmem:[#allocation3] sm:$0xff]
        %v539 = vld [vmem:[#allocation3 + $0x8] sm:$0xff]
        %v540 = vld [vmem:[#allocation3 + $0x10] sm:$0xff]
        %v541 = vld [vmem:[#allocation3 + $0x18] sm:$0xff]
        %v542 = vld [vmem:[#allocation3 + $0x20] sm:$0xff]
        %v543 = vld [vmem:[#allocation3 + $0x28] sm:$0xff]
        %v544 = vld [vmem:[#allocation3 + $0x30] sm:$0xff]
        %v545 = vld [vmem:[#allocation3 + $0x38] sm:$0xff]
        %v546 = vld [vmem:[#allocation3 + $0x40] sm:$0xff]
        %v547 = vld [vmem:[#allocation3 + $0x48] sm:$0xff]
        %v548 = vld [vmem:[#allocation3 + $0x50] sm:$0xff]
        %v549 = vld [vmem:[#allocation3 + $0x58] sm:$0xff]
        %v550 = vld [vmem:[#allocation3 + $0x60] sm:$0xff]
        %v551 = vld [vmem:[#allocation3 + $0x68] sm:$0xff]
        %v552 = vld [vmem:[#allocation3 + $0x70] sm:$0xff]
        %v553 = vld [vmem:[#allocation3 + $0x78] sm:$0xff]
        %v554 = vld [vmem:[#allocation3 + $0x80] sm:$0xff]
        %v555 = vld [vmem:[#allocation3 + $0x88] sm:$0xff]
        %v556 = vpack.c.bf16 %v539, %v538
        %v557 = vpack.c.bf16 %v541, %v540
        %v558 = vpack.c.bf16 %v543, %v542
        %v559 = vpack.c.bf16 %v545, %v544
        %v560 = vpack.c.bf16 %v547, %v546
        %v561 = vpack.c.bf16 %v549, %v548
        %v562 = vpack.c.bf16 %v551, %v550
        %v563 = vpack.c.bf16 %v553, %v552
        %v564 = vpack.c.bf16 %v555, %v554
        %v565 = vld [vmem:[%s435] sm:$0xff]
        %v566 = vld [vmem:[%s435 + $0x8] sm:$0xff]
        %v567 = vld [vmem:[%s435 + $0x10] sm:$0xff]
        %v568 = vld [vmem:[%s435 + $0x18] sm:$0xff]
        %v569 = vld [vmem:[%s435 + $0x20] sm:$0xff]
        %v570 = vld [vmem:[%s435 + $0x28] sm:$0xff]
        %v571 = vld [vmem:[%s435 + $0x30] sm:$0xff]
        %v572 = vld [vmem:[%s435 + $0x38] sm:$0xff]
        %v573 = vld [vmem:[%s435 + $0x40] sm:$0xff]
        %v574 = vld [vmem:[%s435 + $0x48] sm:$0xff]
        %v575 = vld [vmem:[%s435 + $0x50] sm:$0xff]
        %v576 = vld [vmem:[%s435 + $0x58] sm:$0xff]
        %v577 = vld [vmem:[%s435 + $0x60] sm:$0xff]
        %v578 = vld [vmem:[%s435 + $0x68] sm:$0xff]
        %v579 = vld [vmem:[%s435 + $0x70] sm:$0xff]
        %v580 = vld [vmem:[%s435 + $0x78] sm:$0xff]
        %v581 = vld [vmem:[%s445] sm:$0x3]
        %v583 = vperm.slane %v581, 0
        %v584 = vperm.slane %v581, 1
        %v603 = vunpack.c.l.b16 %v565
        %v604 = vunpack.c.h.b16 %v565
        %v605 = vunpack.c.l.b16 %v566
        %v606 = vunpack.c.h.b16 %v566
        %v607 = vunpack.c.l.b16 %v567
        %v608 = vunpack.c.h.b16 %v567
        %v609 = vunpack.c.l.b16 %v568
        %v610 = vunpack.c.h.b16 %v568
        %v611 = vunpack.c.l.b16 %v569
        %v612 = vunpack.c.h.b16 %v569
        %v613 = vunpack.c.l.b16 %v570
        %v614 = vunpack.c.h.b16 %v570
        %v615 = vunpack.c.l.b16 %v571
        %v616 = vunpack.c.h.b16 %v571
        %v617 = vunpack.c.l.b16 %v572
        %v618 = vunpack.c.h.b16 %v572
        %v619 = vunpack.c.l.b16 %v573
        %v620 = vunpack.c.h.b16 %v573
        %v621 = vunpack.c.l.b16 %v574
        %v622 = vunpack.c.h.b16 %v574
        %v623 = vunpack.c.l.b16 %v575
        %v624 = vunpack.c.h.b16 %v575
        %v625 = vunpack.c.l.b16 %v576
        %v626 = vunpack.c.h.b16 %v576
        %v627 = vunpack.c.l.b16 %v577
        %v628 = vunpack.c.h.b16 %v577
        %v629 = vunpack.c.l.b16 %v578
        %v630 = vunpack.c.h.b16 %v578
        %v631 = vunpack.c.l.b16 %v579
        %v632 = vunpack.c.h.b16 %v579
        %v633 = vunpack.c.l.b16 %v580
        %v634 = vunpack.c.h.b16 %v580
        %v635 = vpack.c.b16 %v605, %v603
        %v636 = vpack.c.b16 %v606, %v604
        %v637 = vpack.c.b16 %v609, %v607
        %v638 = vpack.c.b16 %v610, %v608
        %v639 = vpack.c.b16 %v613, %v611
        %v640 = vpack.c.b16 %v614, %v612
        %v641 = vpack.c.b16 %v617, %v615
        %v642 = vpack.c.b16 %v618, %v616
        %v643 = vpack.c.b16 %v621, %v619
        %v644 = vpack.c.b16 %v622, %v620
        %v645 = vpack.c.b16 %v625, %v623
        %v646 = vpack.c.b16 %v626, %v624
        %v647 = vpack.c.b16 %v629, %v627
        %v648 = vpack.c.b16 %v630, %v628
        %v649 = vpack.c.b16 %v633, %v631
        %v650 = vpack.c.b16 %v634, %v632
        %667 = vmatpush.bf16.msra.mxu0 %v649
        %668 = vmatpush.bf16.msra.mxu0 %v647
        %669 = vmatpush.bf16.msra.mxu0 %v645
        %670 = vmatpush.bf16.msra.mxu0 %v643
        %671 = vmatpush.bf16.msra.mxu0 %v641
        %672 = vmatpush.bf16.msra.mxu0 %v639
        %673 = vmatpush.bf16.msra.mxu0 %v637
        %674 = vmatpush.bf16.msra.mxu0 %v635
        %675 = vmatmul.bf16.gmra.mxu0 %v556
        %v676 = vpop.f32.mrf.mxu0
        %v677 = vadd.f32 %v583, %v676
        %v678 = vpop.f32.mrf.mxu0
        %v679 = vadd.f32 %v583, %v678
        %680 = vmatmul.bf16.gmra.mxu0 %v557
        %v681 = vpop.f32.mrf.mxu0
        %v682 = vadd.f32 %v583, %v681
        %v683 = vpop.f32.mrf.mxu0
        %v684 = vadd.f32 %v583, %v683
        %685 = vmatmul.bf16.gmra.mxu0 %v558
        %v686 = vpop.f32.mrf.mxu0
        %v687 = vadd.f32 %v583, %v686
        %v688 = vpop.f32.mrf.mxu0
        %v689 = vadd.f32 %v583, %v688
        %690 = vmatmul.bf16.gmra.mxu0 %v559
        %v691 = vpop.f32.mrf.mxu0
        %v692 = vadd.f32 %v583, %v691
        %v693 = vpop.f32.mrf.mxu0
        %v694 = vadd.f32 %v583, %v693
        %695 = vmatmul.bf16.gmra.mxu0 %v560
        %v696 = vpop.f32.mrf.mxu0
        %v697 = vadd.f32 %v583, %v696
        %v698 = vpop.f32.mrf.mxu0
        %v699 = vadd.f32 %v583, %v698
        %700 = vmatmul.bf16.gmra.mxu0 %v561
        %v701 = vpop.f32.mrf.mxu0
        %v702 = vadd.f32 %v583, %v701
        %v703 = vpop.f32.mrf.mxu0
        %v704 = vadd.f32 %v583, %v703
        %705 = vmatmul.bf16.gmra.mxu0 %v562
        %v706 = vpop.f32.mrf.mxu0
        %v707 = vadd.f32 %v583, %v706
        %v708 = vpop.f32.mrf.mxu0
        %v709 = vadd.f32 %v583, %v708
        %710 = vmatmul.bf16.gmra.mxu0 %v563
        %v711 = vpop.f32.mrf.mxu0
        %v712 = vadd.f32 %v583, %v711
        %v713 = vpop.f32.mrf.mxu0
        %v714 = vadd.f32 %v583, %v713
        %715 = vmatmul.bf16.gmra.mxu0 %v564
        %v716 = vpop.f32.mrf.mxu0
        %v717 = vadd.f32 %v583, %v716
        %v718 = vpop.f32.mrf.mxu0
        %v719 = vadd.f32 %v583, %v718
        %720 = vdwg.mxu0
        %721 = vmatpush.bf16.msra.mxu0 %v650
        %722 = vmatpush.bf16.msra.mxu0 %v648
        %723 = vmatpush.bf16.msra.mxu0 %v646
        %724 = vmatpush.bf16.msra.mxu0 %v644
        %725 = vmatpush.bf16.msra.mxu0 %v642
        %726 = vmatpush.bf16.msra.mxu0 %v640
        %727 = vmatpush.bf16.msra.mxu0 %v638
        %728 = vmatpush.bf16.msra.mxu0 %v636
        %729 = vmatmul.bf16.gmra.mxu0 %v556
        %v730 = vpop.f32.mrf.mxu0
        %v731 = vadd.f32 %v584, %v730
        %v732 = vpop.f32.mrf.mxu0
        %v733 = vadd.f32 %v584, %v732
        %734 = vmatmul.bf16.gmra.mxu0 %v557
        %v735 = vpop.f32.mrf.mxu0
        %v736 = vadd.f32 %v584, %v735
        %v737 = vpop.f32.mrf.mxu0
        %v738 = vadd.f32 %v584, %v737
        %739 = vmatmul.bf16.gmra.mxu0 %v558
        %v740 = vpop.f32.mrf.mxu0
        %v741 = vadd.f32 %v584, %v740
        %v742 = vpop.f32.mrf.mxu0
        %v743 = vadd.f32 %v584, %v742
        %744 = vmatmul.bf16.gmra.mxu0 %v559
        %v745 = vpop.f32.mrf.mxu0
        %v746 = vadd.f32 %v584, %v745
        %v747 = vpop.f32.mrf.mxu0
        %v748 = vadd.f32 %v584, %v747
        %749 = vmatmul.bf16.gmra.mxu0 %v560
        %v750 = vpop.f32.mrf.mxu0
        %v751 = vadd.f32 %v584, %v750
        %v752 = vpop.f32.mrf.mxu0
        %v753 = vadd.f32 %v584, %v752
        %754 = vmatmul.bf16.gmra.mxu0 %v561
        %v755 = vpop.f32.mrf.mxu0
        %v756 = vadd.f32 %v584, %v755
        %v757 = vpop.f32.mrf.mxu0
        %v758 = vadd.f32 %v584, %v757
        %759 = vmatmul.bf16.gmra.mxu0 %v562
        %v760 = vpop.f32.mrf.mxu0
        %v761 = vadd.f32 %v584, %v760
        %v762 = vpop.f32.mrf.mxu0
        %v763 = vadd.f32 %v584, %v762
        %764 = vmatmul.bf16.gmra.mxu0 %v563
        %v765 = vpop.f32.mrf.mxu0
        %v766 = vadd.f32 %v584, %v765
        %v767 = vpop.f32.mrf.mxu0
        %v768 = vadd.f32 %v584, %v767
        %769 = vmatmul.bf16.gmra.mxu0 %v564
        %v770 = vpop.f32.mrf.mxu0
        %v771 = vadd.f32 %v584, %v770
        %v772 = vpop.f32.mrf.mxu0
        %v773 = vadd.f32 %v584, %v772
        %774 = vdwg.mxu0
        %v775 = vmul.f32 %v677, 0.5
        %v776 = vmul.f32 %v731, 0.5
        %v777 = vmul.f32 %v679, 0.5
        %v778 = vmul.f32 %v733, 0.5
        %v779 = vmul.f32 %v682, 0.5
        %v780 = vmul.f32 %v736, 0.5
        %v781 = vmul.f32 %v684, 0.5
        %v782 = vmul.f32 %v738, 0.5
        %v783 = vmul.f32 %v687, 0.5
        %v784 = vmul.f32 %v741, 0.5
        %v785 = vmul.f32 %v689, 0.5
        %v786 = vmul.f32 %v743, 0.5
        %v787 = vmul.f32 %v692, 0.5
        %v788 = vmul.f32 %v746, 0.5
        %v789 = vmul.f32 %v694, 0.5
        %v790 = vmul.f32 %v748, 0.5
        %v791 = vmul.f32 %v697, 0.5
        %v792 = vmul.f32 %v751, 0.5
        %v793 = vmul.f32 %v699, 0.5
        %v794 = vmul.f32 %v753, 0.5
        %v795 = vmul.f32 %v702, 0.5
        %v796 = vmul.f32 %v756, 0.5
        %v797 = vmul.f32 %v704, 0.5
        %v798 = vmul.f32 %v758, 0.5
        %v799 = vmul.f32 %v707, 0.5
        %v800 = vmul.f32 %v761, 0.5
        %v801 = vmul.f32 %v709, 0.5
        %v802 = vmul.f32 %v763, 0.5
        %v803 = vmul.f32 %v712, 0.5
        %v804 = vmul.f32 %v766, 0.5
        %v805 = vmul.f32 %v714, 0.5
        %v806 = vmul.f32 %v768, 0.5
        %v807 = vmul.f32 %v717, 0.5
        %v808 = vmul.f32 %v771, 0.5
        %v809 = vmul.f32 %v719, 0.5
        %v810 = vmul.f32 %v773, 0.5
        %v811 = vmul.f32 %v677, 0.044715
        %v812 = vmul.f32 %v731, 0.044715
        %v813 = vmul.f32 %v679, 0.044715
        %v814 = vmul.f32 %v733, 0.044715
        %v815 = vmul.f32 %v682, 0.044715
        %v816 = vmul.f32 %v736, 0.044715
        %v817 = vmul.f32 %v684, 0.044715
        %v818 = vmul.f32 %v738, 0.044715
        %v819 = vmul.f32 %v687, 0.044715
        %v820 = vmul.f32 %v741, 0.044715
        %v821 = vmul.f32 %v689, 0.044715
        %v822 = vmul.f32 %v743, 0.044715
        %v823 = vmul.f32 %v692, 0.044715
        %v824 = vmul.f32 %v746, 0.044715
        %v825 = vmul.f32 %v694, 0.044715
        %v826 = vmul.f32 %v748, 0.044715
        %v827 = vmul.f32 %v697, 0.044715
        %v828 = vmul.f32 %v751, 0.044715
        %v829 = vmul.f32 %v699, 0.044715
        %v830 = vmul.f32 %v753, 0.044715
        %v831 = vmul.f32 %v702, 0.044715
        %v832 = vmul.f32 %v756, 0.044715
        %v833 = vmul.f32 %v704, 0.044715
        %v834 = vmul.f32 %v758, 0.044715
        %v835 = vmul.f32 %v707, 0.044715
        %v836 = vmul.f32 %v761, 0.044715
        %v837 = vmul.f32 %v709, 0.044715
        %v838 = vmul.f32 %v763, 0.044715
        %v839 = vmul.f32 %v712, 0.044715
        %v840 = vmul.f32 %v766, 0.044715
        %v841 = vmul.f32 %v714, 0.044715
        %v842 = vmul.f32 %v768, 0.044715
        %v843 = vmul.f32 %v717, 0.044715
        %v844 = vmul.f32 %v771, 0.044715
        %v845 = vmul.f32 %v719, 0.044715
        %v846 = vmul.f32 %v773, 0.044715
        %v847 = vmul.f32 %v811, %v677
        %v848 = vmul.f32 %v812, %v731
        %v849 = vmul.f32 %v813, %v679
        %v850 = vmul.f32 %v814, %v733
        %v851 = vmul.f32 %v815, %v682
        %v852 = vmul.f32 %v816, %v736
        %v853 = vmul.f32 %v817, %v684
        %v854 = vmul.f32 %v818, %v738
        %v855 = vmul.f32 %v819, %v687
        %v856 = vmul.f32 %v820, %v741
        %v857 = vmul.f32 %v821, %v689
        %v858 = vmul.f32 %v822, %v743
        %v859 = vmul.f32 %v823, %v692
        %v860 = vmul.f32 %v824, %v746
        %v861 = vmul.f32 %v825, %v694
        %v862 = vmul.f32 %v826, %v748
        %v863 = vmul.f32 %v827, %v697
        %v864 = vmul.f32 %v828, %v751
        %v865 = vmul.f32 %v829, %v699
        %v866 = vmul.f32 %v830, %v753
        %v867 = vmul.f32 %v831, %v702
        %v868 = vmul.f32 %v832, %v756
        %v869 = vmul.f32 %v833, %v704
        %v870 = vmul.f32 %v834, %v758
        %v871 = vmul.f32 %v835, %v707
        %v872 = vmul.f32 %v836, %v761
        %v873 = vmul.f32 %v837, %v709
        %v874 = vmul.f32 %v838, %v763
        %v875 = vmul.f32 %v839, %v712
        %v876 = vmul.f32 %v840, %v766
        %v877 = vmul.f32 %v841, %v714
        %v878 = vmul.f32 %v842, %v768
        %v879 = vmul.f32 %v843, %v717
        %v880 = vmul.f32 %v844, %v771
        %v881 = vmul.f32 %v845, %v719
        %v882 = vmul.f32 %v846, %v773
        %v883 = vmul.f32 %v847, %v677
        %v884 = vmul.f32 %v848, %v731
        %v885 = vmul.f32 %v849, %v679
        %v886 = vmul.f32 %v850, %v733
        %v887 = vmul.f32 %v851, %v682
        %v888 = vmul.f32 %v852, %v736
        %v889 = vmul.f32 %v853, %v684
        %v890 = vmul.f32 %v854, %v738
        %v891 = vmul.f32 %v855, %v687
        %v892 = vmul.f32 %v856, %v741
        %v893 = vmul.f32 %v857, %v689
        %v894 = vmul.f32 %v858, %v743
        %v895 = vmul.f32 %v859, %v692
        %v896 = vmul.f32 %v860, %v746
        %v897 = vmul.f32 %v861, %v694
        %v898 = vmul.f32 %v862, %v748
        %v899 = vmul.f32 %v863, %v697
        %v900 = vmul.f32 %v864, %v751
        %v901 = vmul.f32 %v865, %v699
        %v902 = vmul.f32 %v866, %v753
        %v903 = vmul.f32 %v867, %v702
        %v904 = vmul.f32 %v868, %v756
        %v905 = vmul.f32 %v869, %v704
        %v906 = vmul.f32 %v870, %v758
        %v907 = vmul.f32 %v871, %v707
        %v908 = vmul.f32 %v872, %v761
        %v909 = vmul.f32 %v873, %v709
        %v910 = vmul.f32 %v874, %v763
        %v911 = vmul.f32 %v875, %v712
        %v912 = vmul.f32 %v876, %v766
        %v913 = vmul.f32 %v877, %v714
        %v914 = vmul.f32 %v878, %v768
        %v915 = vmul.f32 %v879, %v717
        %v916 = vmul.f32 %v880, %v771
        %v917 = vmul.f32 %v881, %v719
        %v918 = vmul.f32 %v882, %v773
        %v919 = vadd.f32 %v677, %v883
        %v920 = vadd.f32 %v731, %v884
        %v921 = vadd.f32 %v679, %v885
        %v922 = vadd.f32 %v733, %v886
        %v923 = vadd.f32 %v682, %v887
        %v924 = vadd.f32 %v736, %v888
        %v925 = vadd.f32 %v684, %v889
        %v926 = vadd.f32 %v738, %v890
        %v927 = vadd.f32 %v687, %v891
        %v928 = vadd.f32 %v741, %v892
        %v929 = vadd.f32 %v689, %v893
        %v930 = vadd.f32 %v743, %v894
        %v931 = vadd.f32 %v692, %v895
        %v932 = vadd.f32 %v746, %v896
        %v933 = vadd.f32 %v694, %v897
        %v934 = vadd.f32 %v748, %v898
        %v935 = vadd.f32 %v697, %v899
        %v936 = vadd.f32 %v751, %v900
        %v937 = vadd.f32 %v699, %v901
        %v938 = vadd.f32 %v753, %v902
        %v939 = vadd.f32 %v702, %v903
        %v940 = vadd.f32 %v756, %v904
        %v941 = vadd.f32 %v704, %v905
        %v942 = vadd.f32 %v758, %v906
        %v943 = vadd.f32 %v707, %v907
        %v944 = vadd.f32 %v761, %v908
        %v945 = vadd.f32 %v709, %v909
        %v946 = vadd.f32 %v763, %v910
        %v947 = vadd.f32 %v712, %v911
        %v948 = vadd.f32 %v766, %v912
        %v949 = vadd.f32 %v714, %v913
        %v950 = vadd.f32 %v768, %v914
        %v951 = vadd.f32 %v717, %v915
        %v952 = vadd.f32 %v771, %v916
        %v953 = vadd.f32 %v719, %v917
        %v954 = vadd.f32 %v773, %v918
        %v955 = vmul.f32 %v919, 0.7978846
        %v956 = vmul.f32 %v920, 0.7978846
        %v957 = vmul.f32 %v921, 0.7978846
        %v958 = vmul.f32 %v922, 0.7978846
        %v959 = vmul.f32 %v923, 0.7978846
        %v960 = vmul.f32 %v924, 0.7978846
        %v961 = vmul.f32 %v925, 0.7978846
        %v962 = vmul.f32 %v926, 0.7978846
        %v963 = vmul.f32 %v927, 0.7978846
        %v964 = vmul.f32 %v928, 0.7978846
        %v965 = vmul.f32 %v929, 0.7978846
        %v966 = vmul.f32 %v930, 0.7978846
        %v967 = vmul.f32 %v931, 0.7978846
        %v968 = vmul.f32 %v932, 0.7978846
        %v969 = vmul.f32 %v933, 0.7978846
        %v970 = vmul.f32 %v934, 0.7978846
        %v971 = vmul.f32 %v935, 0.7978846
        %v972 = vmul.f32 %v936, 0.7978846
        %v973 = vmul.f32 %v937, 0.7978846
        %v974 = vmul.f32 %v938, 0.7978846
        %v975 = vmul.f32 %v939, 0.7978846
        %v976 = vmul.f32 %v940, 0.7978846
        %v977 = vmul.f32 %v941, 0.7978846
        %v978 = vmul.f32 %v942, 0.7978846
        %v979 = vmul.f32 %v943, 0.7978846
        %v980 = vmul.f32 %v944, 0.7978846
        %v981 = vmul.f32 %v945, 0.7978846
        %v982 = vmul.f32 %v946, 0.7978846
        %v983 = vmul.f32 %v947, 0.7978846
        %v984 = vmul.f32 %v948, 0.7978846
        %v985 = vmul.f32 %v949, 0.7978846
        %v986 = vmul.f32 %v950, 0.7978846
        %v987 = vmul.f32 %v951, 0.7978846
        %v988 = vmul.f32 %v952, 0.7978846
        %v989 = vmul.f32 %v953, 0.7978846
        %v990 = vmul.f32 %v954, 0.7978846
        %v991 = vtanh.pop %v955
        %v992 = vtanh.pop %v956
        %v993 = vtanh.pop %v957
        %v994 = vtanh.pop %v958
        %v995 = vtanh.pop %v959
        %v996 = vtanh.pop %v960
        %v997 = vtanh.pop %v961
        %v998 = vtanh.pop %v962
        %v999 = vtanh.pop %v963
        %v1000 = vtanh.pop %v964
        %v1001 = vtanh.pop %v965
        %v1002 = vtanh.pop %v966
        %v1003 = vtanh.pop %v967
        %v1004 = vtanh.pop %v968
        %v1005 = vtanh.pop %v969
        %v1006 = vtanh.pop %v970
        %v1007 = vtanh.pop %v971
        %v1008 = vtanh.pop %v972
        %v1009 = vtanh.pop %v973
        %v1010 = vtanh.pop %v974
        %v1011 = vtanh.pop %v975
        %v1012 = vtanh.pop %v976
        %v1013 = vtanh.pop %v977
        %v1014 = vtanh.pop %v978
        %v1015 = vtanh.pop %v979
        %v1016 = vtanh.pop %v980
        %v1017 = vtanh.pop %v981
        %v1018 = vtanh.pop %v982
        %v1019 = vtanh.pop %v983
        %v1020 = vtanh.pop %v984
        %v1021 = vtanh.pop %v985
        %v1022 = vtanh.pop %v986
        %v1023 = vtanh.pop %v987
        %v1024 = vtanh.pop %v988
        %v1025 = vtanh.pop %v989
        %v1026 = vtanh.pop %v990
        %v1027 = vadd.f32 %v991, 1.0
        %v1028 = vadd.f32 %v992, 1.0
        %v1029 = vadd.f32 %v993, 1.0
        %v1030 = vadd.f32 %v994, 1.0
        %v1031 = vadd.f32 %v995, 1.0
        %v1032 = vadd.f32 %v996, 1.0
        %v1033 = vadd.f32 %v997, 1.0
        %v1034 = vadd.f32 %v998, 1.0
        %v1035 = vadd.f32 %v999, 1.0
        %v1036 = vadd.f32 %v1000, 1.0
        %v1037 = vadd.f32 %v1001, 1.0
        %v1038 = vadd.f32 %v1002, 1.0
        %v1039 = vadd.f32 %v1003, 1.0
        %v1040 = vadd.f32 %v1004, 1.0
        %v1041 = vadd.f32 %v1005, 1.0
        %v1042 = vadd.f32 %v1006, 1.0
        %v1043 = vadd.f32 %v1007, 1.0
        %v1044 = vadd.f32 %v1008, 1.0
        %v1045 = vadd.f32 %v1009, 1.0
        %v1046 = vadd.f32 %v1010, 1.0
        %v1047 = vadd.f32 %v1011, 1.0
        %v1048 = vadd.f32 %v1012, 1.0
        %v1049 = vadd.f32 %v1013, 1.0
        %v1050 = vadd.f32 %v1014, 1.0
        %v1051 = vadd.f32 %v1015, 1.0
        %v1052 = vadd.f32 %v1016, 1.0
        %v1053 = vadd.f32 %v1017, 1.0
        %v1054 = vadd.f32 %v1018, 1.0
        %v1055 = vadd.f32 %v1019, 1.0
        %v1056 = vadd.f32 %v1020, 1.0
        %v1057 = vadd.f32 %v1021, 1.0
        %v1058 = vadd.f32 %v1022, 1.0
        %v1059 = vadd.f32 %v1023, 1.0
        %v1060 = vadd.f32 %v1024, 1.0
        %v1061 = vadd.f32 %v1025, 1.0
        %v1062 = vadd.f32 %v1026, 1.0
        %v1063 = vmul.f32 %v775, %v1027
        %v1064 = vmul.f32 %v776, %v1028
        %v1065 = vmul.f32 %v777, %v1029
        %v1066 = vmul.f32 %v778, %v1030
        %v1067 = vmul.f32 %v779, %v1031
        %v1068 = vmul.f32 %v780, %v1032
        %v1069 = vmul.f32 %v781, %v1033
        %v1070 = vmul.f32 %v782, %v1034
        %v1071 = vmul.f32 %v783, %v1035
        %v1072 = vmul.f32 %v784, %v1036
        %v1073 = vmul.f32 %v785, %v1037
        %v1074 = vmul.f32 %v786, %v1038
        %v1075 = vmul.f32 %v787, %v1039
        %v1076 = vmul.f32 %v788, %v1040
        %v1077 = vmul.f32 %v789, %v1041
        %v1078 = vmul.f32 %v790, %v1042
        %v1079 = vmul.f32 %v791, %v1043
        %v1080 = vmul.f32 %v792, %v1044
        %v1081 = vmul.f32 %v793, %v1045
        %v1082 = vmul.f32 %v794, %v1046
        %v1083 = vmul.f32 %v795, %v1047
        %v1084 = vmul.f32 %v796, %v1048
        %v1085 = vmul.f32 %v797, %v1049
        %v1086 = vmul.f32 %v798, %v1050
        %v1087 = vmul.f32 %v799, %v1051
        %v1088 = vmul.f32 %v800, %v1052
        %v1089 = vmul.f32 %v801, %v1053
        %v1090 = vmul.f32 %v802, %v1054
        %v1091 = vmul.f32 %v803, %v1055
        %v1092 = vmul.f32 %v804, %v1056
        %v1093 = vmul.f32 %v805, %v1057
        %v1094 = vmul.f32 %v806, %v1058
        %v1095 = vmul.f32 %v807, %v1059
        %v1096 = vmul.f32 %v808, %v1060
        %v1097 = vmul.f32 %v809, %v1061
        %v1098 = vmul.f32 %v810, %v1062
        %v1099 = vpack.c.bf16 %v1065, %v1063
        %v1100 = vpack.c.bf16 %v1066, %v1064
        %v1101 = vpack.c.bf16 %v1069, %v1067
        %v1102 = vpack.c.bf16 %v1070, %v1068
        %v1103 = vpack.c.bf16 %v1073, %v1071
        %v1104 = vpack.c.bf16 %v1074, %v1072
        %v1105 = vpack.c.bf16 %v1077, %v1075
        %v1106 = vpack.c.bf16 %v1078, %v1076
        %v1107 = vpack.c.bf16 %v1081, %v1079
        %v1108 = vpack.c.bf16 %v1082, %v1080
        %v1109 = vpack.c.bf16 %v1085, %v1083
        %v1110 = vpack.c.bf16 %v1086, %v1084
        %v1111 = vpack.c.bf16 %v1089, %v1087
        %v1112 = vpack.c.bf16 %v1090, %v1088
        %v1113 = vpack.c.bf16 %v1093, %v1091
        %v1114 = vpack.c.bf16 %v1094, %v1092
        %v1115 = vpack.c.bf16 %v1097, %v1095
        %v1116 = vpack.c.bf16 %v1098, %v1096
        %v1117 = vld [vmem:[%s455] sm:$0xf]
        %v1118 = vld [vmem:[%s455 + $0x4] sm:$0xf]
        %v1119 = vld [vmem:[%s455 + $0x8] sm:$0xf]
        %v1120 = vld [vmem:[%s455 + $0xc] sm:$0xf]
        %v1121 = vld [vmem:[%s455 + $0x10] sm:$0xf]
        %v1122 = vld [vmem:[%s455 + $0x14] sm:$0xf]
        %v1123 = vld [vmem:[%s455 + $0x18] sm:$0xf]
        %v1124 = vld [vmem:[%s455 + $0x1c] sm:$0xf]
        %v1125 = vld [vmem:[%s455 + $0x20] sm:$0xf]
        %v1126 = vld [vmem:[%s455 + $0x24] sm:$0xf]
        %v1127 = vld [vmem:[%s455 + $0x28] sm:$0xf]
        %v1128 = vld [vmem:[%s455 + $0x2c] sm:$0xf]
        %v1129 = vld [vmem:[%s455 + $0x30] sm:$0xf]
        %v1130 = vld [vmem:[%s455 + $0x34] sm:$0xf]
        %v1131 = vld [vmem:[%s455 + $0x38] sm:$0xf]
        %v1132 = vld [vmem:[%s455 + $0x3c] sm:$0xf]
        %v1133 = vld [vmem:[%s455 + $0x40] sm:$0xf]
        %v1134 = vld [vmem:[%s455 + $0x44] sm:$0xf]
        %v1135 = vld [vmem:[%s455 + $0x48] sm:$0xf]
        %v1136 = vld [vmem:[%s455 + $0x4c] sm:$0xf]
        %v1137 = vld [vmem:[%s455 + $0x50] sm:$0xf]
        %v1138 = vld [vmem:[%s455 + $0x54] sm:$0xf]
        %v1139 = vld [vmem:[%s455 + $0x58] sm:$0xf]
        %v1140 = vld [vmem:[%s455 + $0x5c] sm:$0xf]
        %v1141 = vld [vmem:[%s455 + $0x60] sm:$0xf]
        %v1142 = vld [vmem:[%s455 + $0x64] sm:$0xf]
        %v1143 = vld [vmem:[%s455 + $0x68] sm:$0xf]
        %v1144 = vld [vmem:[%s455 + $0x6c] sm:$0xf]
        %v1145 = vld [vmem:[%s455 + $0x70] sm:$0xf]
        %v1146 = vld [vmem:[%s455 + $0x74] sm:$0xf]
        %v1147 = vld [vmem:[%s455 + $0x78] sm:$0xf]
        %v1148 = vld [vmem:[%s455 + $0x7c] sm:$0xf]
        %v1181 = vunpack.c.l.b16 %v1117
        %v1182 = vunpack.c.l.b16 %v1118
        %v1183 = vunpack.c.l.b16 %v1119
        %v1184 = vunpack.c.l.b16 %v1120
        %v1185 = vunpack.c.l.b16 %v1121
        %v1186 = vunpack.c.l.b16 %v1122
        %v1187 = vunpack.c.l.b16 %v1123
        %v1188 = vunpack.c.l.b16 %v1124
        %v1189 = vunpack.c.l.b16 %v1125
        %v1190 = vunpack.c.l.b16 %v1126
        %v1191 = vunpack.c.l.b16 %v1127
        %v1192 = vunpack.c.l.b16 %v1128
        %v1193 = vunpack.c.l.b16 %v1129
        %v1194 = vunpack.c.l.b16 %v1130
        %v1195 = vunpack.c.l.b16 %v1131
        %v1196 = vunpack.c.l.b16 %v1132
        %v1197 = vunpack.c.l.b16 %v1133
        %v1198 = vunpack.c.l.b16 %v1134
        %v1199 = vunpack.c.l.b16 %v1135
        %v1200 = vunpack.c.l.b16 %v1136
        %v1201 = vunpack.c.l.b16 %v1137
        %v1202 = vunpack.c.l.b16 %v1138
        %v1203 = vunpack.c.l.b16 %v1139
        %v1204 = vunpack.c.l.b16 %v1140
        %v1205 = vunpack.c.l.b16 %v1141
        %v1206 = vunpack.c.l.b16 %v1142
        %v1207 = vunpack.c.l.b16 %v1143
        %v1208 = vunpack.c.l.b16 %v1144
        %v1209 = vunpack.c.l.b16 %v1145
        %v1210 = vunpack.c.l.b16 %v1146
        %v1211 = vunpack.c.l.b16 %v1147
        %v1212 = vunpack.c.l.b16 %v1148
        %v1213 = vpack.c.b16 %v1182, %v1181
        %v1214 = vpack.c.b16 %v1184, %v1183
        %v1215 = vpack.c.b16 %v1186, %v1185
        %v1216 = vpack.c.b16 %v1188, %v1187
        %v1217 = vpack.c.b16 %v1190, %v1189
        %v1218 = vpack.c.b16 %v1192, %v1191
        %v1219 = vpack.c.b16 %v1194, %v1193
        %v1220 = vpack.c.b16 %v1196, %v1195
        %v1221 = vpack.c.b16 %v1198, %v1197
        %v1222 = vpack.c.b16 %v1200, %v1199
        %v1223 = vpack.c.b16 %v1202, %v1201
        %v1224 = vpack.c.b16 %v1204, %v1203
        %v1225 = vpack.c.b16 %v1206, %v1205
        %v1226 = vpack.c.b16 %v1208, %v1207
        %v1227 = vpack.c.b16 %v1210, %v1209
        %v1228 = vpack.c.b16 %v1212, %v1211
        %1245 = vmatpush.bf16.msra.mxu0 %v1220
        %1246 = vmatpush.bf16.msra.mxu0 %v1219
        %1247 = vmatpush.bf16.msra.mxu0 %v1218
        %1248 = vmatpush.bf16.msra.mxu0 %v1217
        %1249 = vmatpush.bf16.msra.mxu0 %v1216
        %1250 = vmatpush.bf16.msra.mxu0 %v1215
        %1251 = vmatpush.bf16.msra.mxu0 %v1214
        %1252 = vmatpush.bf16.msra.mxu0 %v1213
        %1253 = vmatmul.bf16.gmra.mxu0 %v1099
        %v1254 = vpop.f32.mrf.mxu0
        %v1255 = vadd.f32 0.0, %v1254
        %v1256 = vpop.f32.mrf.mxu0
        %v1257 = vadd.f32 0.0, %v1256
        %1258 = vmatmul.bf16.gmra.mxu0 %v1101
        %v1259 = vpop.f32.mrf.mxu0
        %v1260 = vadd.f32 0.0, %v1259
        %v1261 = vpop.f32.mrf.mxu0
        %v1262 = vadd.f32 0.0, %v1261
        %1263 = vmatmul.bf16.gmra.mxu0 %v1103
        %v1264 = vpop.f32.mrf.mxu0
        %v1265 = vadd.f32 0.0, %v1264
        %v1266 = vpop.f32.mrf.mxu0
        %v1267 = vadd.f32 0.0, %v1266
        %1268 = vmatmul.bf16.gmra.mxu0 %v1105
        %v1269 = vpop.f32.mrf.mxu0
        %v1270 = vadd.f32 0.0, %v1269
        %v1271 = vpop.f32.mrf.mxu0
        %v1272 = vadd.f32 0.0, %v1271
        %1273 = vmatmul.bf16.gmra.mxu0 %v1107
        %v1274 = vpop.f32.mrf.mxu0
        %v1275 = vadd.f32 0.0, %v1274
        %v1276 = vpop.f32.mrf.mxu0
        %v1277 = vadd.f32 0.0, %v1276
        %1278 = vmatmul.bf16.gmra.mxu0 %v1109
        %v1279 = vpop.f32.mrf.mxu0
        %v1280 = vadd.f32 0.0, %v1279
        %v1281 = vpop.f32.mrf.mxu0
        %v1282 = vadd.f32 0.0, %v1281
        %1283 = vmatmul.bf16.gmra.mxu0 %v1111
        %v1284 = vpop.f32.mrf.mxu0
        %v1285 = vadd.f32 0.0, %v1284
        %v1286 = vpop.f32.mrf.mxu0
        %v1287 = vadd.f32 0.0, %v1286
        %1288 = vmatmul.bf16.gmra.mxu0 %v1113
        %v1289 = vpop.f32.mrf.mxu0
        %v1290 = vadd.f32 0.0, %v1289
        %v1291 = vpop.f32.mrf.mxu0
        %v1292 = vadd.f32 0.0, %v1291
        %1293 = vmatmul.bf16.gmra.mxu0 %v1115
        %v1294 = vpop.f32.mrf.mxu0
        %v1295 = vadd.f32 0.0, %v1294
        %v1296 = vpop.f32.mrf.mxu0
        %v1297 = vadd.f32 0.0, %v1296
        %1298 = vdwg.mxu0
        %1299 = vmatpush.bf16.msra.mxu0 %v1228
        %1300 = vmatpush.bf16.msra.mxu0 %v1227
        %1301 = vmatpush.bf16.msra.mxu0 %v1226
        %1302 = vmatpush.bf16.msra.mxu0 %v1225
        %1303 = vmatpush.bf16.msra.mxu0 %v1224
        %1304 = vmatpush.bf16.msra.mxu0 %v1223
        %1305 = vmatpush.bf16.msra.mxu0 %v1222
        %1306 = vmatpush.bf16.msra.mxu0 %v1221
        %1307 = vmatmul.bf16.gmra.mxu0 %v1100
        %v1308 = vpop.f32.mrf.mxu0
        %v1309 = vadd.f32 %v1255, %v1308
        %v1310 = vpop.f32.mrf.mxu0
        %v1311 = vadd.f32 %v1257, %v1310
        %1312 = vmatmul.bf16.gmra.mxu0 %v1102
        %v1313 = vpop.f32.mrf.mxu0
        %v1314 = vadd.f32 %v1260, %v1313
        %v1315 = vpop.f32.mrf.mxu0
        %v1316 = vadd.f32 %v1262, %v1315
        %1317 = vmatmul.bf16.gmra.mxu0 %v1104
        %v1318 = vpop.f32.mrf.mxu0
        %v1319 = vadd.f32 %v1265, %v1318
        %v1320 = vpop.f32.mrf.mxu0
        %v1321 = vadd.f32 %v1267, %v1320
        %1322 = vmatmul.bf16.gmra.mxu0 %v1106
        %v1323 = vpop.f32.mrf.mxu0
        %v1324 = vadd.f32 %v1270, %v1323
        %v1325 = vpop.f32.mrf.mxu0
        %v1326 = vadd.f32 %v1272, %v1325
        %1327 = vmatmul.bf16.gmra.mxu0 %v1108
        %v1328 = vpop.f32.mrf.mxu0
        %v1329 = vadd.f32 %v1275, %v1328
        %v1330 = vpop.f32.mrf.mxu0
        %v1331 = vadd.f32 %v1277, %v1330
        %1332 = vmatmul.bf16.gmra.mxu0 %v1110
        %v1333 = vpop.f32.mrf.mxu0
        %v1334 = vadd.f32 %v1280, %v1333
        %v1335 = vpop.f32.mrf.mxu0
        %v1336 = vadd.f32 %v1282, %v1335
        %1337 = vmatmul.bf16.gmra.mxu0 %v1112
        %v1338 = vpop.f32.mrf.mxu0
        %v1339 = vadd.f32 %v1285, %v1338
        %v1340 = vpop.f32.mrf.mxu0
        %v1341 = vadd.f32 %v1287, %v1340
        %1342 = vmatmul.bf16.gmra.mxu0 %v1114
        %v1343 = vpop.f32.mrf.mxu0
        %v1344 = vadd.f32 %v1290, %v1343
        %v1345 = vpop.f32.mrf.mxu0
        %v1346 = vadd.f32 %v1292, %v1345
        %1347 = vmatmul.bf16.gmra.mxu0 %v1116
        %v1348 = vpop.f32.mrf.mxu0
        %v1349 = vadd.f32 %v1295, %v1348
        %v1350 = vpop.f32.mrf.mxu0
        %v1351 = vadd.f32 %v1297, %v1350
        %1352 = vdwg.mxu0
        %p1353 = scmp.eq.s32.totalorder %s29, 0
        // Predicated region
        $region57: #{tpu_custom_call.1} parent=39 // pred_check
          %p1354 = pneg %p1353
        $region58: #{tpu_custom_call.1} parent=39 // pred_check_branch
          %1356 = sbr.rel (%p1354) target = $region60
        $region59: #{tpu_custom_call.1} parent=39 // pred_region
          %1357 = vst [vmem:[#allocation2] sm:$0xff] %v1309
          %1358 = vst [vmem:[#allocation2 + $0x8] sm:$0xff] %v1311
          %1359 = vst [vmem:[#allocation2 + $0x10] sm:$0xff] %v1314
          %1360 = vst [vmem:[#allocation2 + $0x18] sm:$0xff] %v1316
          %1361 = vst [vmem:[#allocation2 + $0x20] sm:$0xff] %v1319
          %1362 = vst [vmem:[#allocation2 + $0x28] sm:$0xff] %v1321
          %1363 = vst [vmem:[#allocation2 + $0x30] sm:$0xff] %v1324
          %1364 = vst [vmem:[#allocation2 + $0x38] sm:$0xff] %v1326
          %1365 = vst [vmem:[#allocation2 + $0x40] sm:$0xff] %v1329
          %1366 = vst [vmem:[#allocation2 + $0x48] sm:$0xff] %v1331
          %1367 = vst [vmem:[#allocation2 + $0x50] sm:$0xff] %v1334
          %1368 = vst [vmem:[#allocation2 + $0x58] sm:$0xff] %v1336
          %1369 = vst [vmem:[#allocation2 + $0x60] sm:$0xff] %v1339
          %1370 = vst [vmem:[#allocation2 + $0x68] sm:$0xff] %v1341
          %1371 = vst [vmem:[#allocation2 + $0x70] sm:$0xff] %v1344
          %1372 = vst [vmem:[#allocation2 + $0x78] sm:$0xff] %v1346
          %1373 = vst [vmem:[#allocation2 + $0x80] sm:$0xff] %v1349
          %1374 = vst [vmem:[#allocation2 + $0x88] sm:$0xff] %v1351
        $region60: #{tpu_custom_call.1} parent=39 // pred_fallthru
          _
        %p1375 = scmp.gt.s32.totalorder %s29, 0
        // Predicated region
        $region61: #{tpu_custom_call.1} parent=39 // pred_check
          %p1376 = pneg %p1375
        $region62: #{tpu_custom_call.1} parent=39 // pred_check_branch
          %1378 = sbr.rel (%p1376) target = $region64
        $region63: #{tpu_custom_call.1} parent=39 // pred_region
          %v1379 = vld [vmem:[#allocation2] sm:$0xff]
          %v1380 = vld [vmem:[#allocation2 + $0x8] sm:$0xff]
          %v1381 = vld [vmem:[#allocation2 + $0x10] sm:$0xff]
          %v1382 = vld [vmem:[#allocation2 + $0x18] sm:$0xff]
          %v1383 = vld [vmem:[#allocation2 + $0x20] sm:$0xff]
          %v1384 = vld [vmem:[#allocation2 + $0x28] sm:$0xff]
          %v1385 = vld [vmem:[#allocation2 + $0x30] sm:$0xff]
          %v1386 = vld [vmem:[#allocation2 + $0x38] sm:$0xff]
          %v1387 = vld [vmem:[#allocation2 + $0x40] sm:$0xff]
          %v1388 = vld [vmem:[#allocation2 + $0x48] sm:$0xff]
          %v1389 = vld [vmem:[#allocation2 + $0x50] sm:$0xff]
          %v1390 = vld [vmem:[#allocation2 + $0x58] sm:$0xff]
          %v1391 = vld [vmem:[#allocation2 + $0x60] sm:$0xff]
          %v1392 = vld [vmem:[#allocation2 + $0x68] sm:$0xff]
          %v1393 = vld [vmem:[#allocation2 + $0x70] sm:$0xff]
          %v1394 = vld [vmem:[#allocation2 + $0x78] sm:$0xff]
          %v1395 = vld [vmem:[#allocation2 + $0x80] sm:$0xff]
          %v1396 = vld [vmem:[#allocation2 + $0x88] sm:$0xff]
          %v1397 = vadd.f32 %v1379, %v1309
          %v1398 = vadd.f32 %v1380, %v1311
          %v1399 = vadd.f32 %v1381, %v1314
          %v1400 = vadd.f32 %v1382, %v1316
          %v1401 = vadd.f32 %v1383, %v1319
          %v1402 = vadd.f32 %v1384, %v1321
          %v1403 = vadd.f32 %v1385, %v1324
          %v1404 = vadd.f32 %v1386, %v1326
          %v1405 = vadd.f32 %v1387, %v1329
          %v1406 = vadd.f32 %v1388, %v1331
          %v1407 = vadd.f32 %v1389, %v1334
          %v1408 = vadd.f32 %v1390, %v1336
          %v1409 = vadd.f32 %v1391, %v1339
          %v1410 = vadd.f32 %v1392, %v1341
          %v1411 = vadd.f32 %v1393, %v1344
          %v1412 = vadd.f32 %v1394, %v1346
          %v1413 = vadd.f32 %v1395, %v1349
          %v1414 = vadd.f32 %v1396, %v1351
          %1415 = vst [vmem:[#allocation2] sm:$0xff] %v1397
          %1416 = vst [vmem:[#allocation2 + $0x8] sm:$0xff] %v1398
          %1417 = vst [vmem:[#allocation2 + $0x10] sm:$0xff] %v1399
          %1418 = vst [vmem:[#allocation2 + $0x18] sm:$0xff] %v1400
          %1419 = vst [vmem:[#allocation2 + $0x20] sm:$0xff] %v1401
          %1420 = vst [vmem:[#allocation2 + $0x28] sm:$0xff] %v1402
          %1421 = vst [vmem:[#allocation2 + $0x30] sm:$0xff] %v1403
          %1422 = vst [vmem:[#allocation2 + $0x38] sm:$0xff] %v1404
          %1423 = vst [vmem:[#allocation2 + $0x40] sm:$0xff] %v1405
          %1424 = vst [vmem:[#allocation2 + $0x48] sm:$0xff] %v1406
          %1425 = vst [vmem:[#allocation2 + $0x50] sm:$0xff] %v1407
          %1426 = vst [vmem:[#allocation2 + $0x58] sm:$0xff] %v1408
          %1427 = vst [vmem:[#allocation2 + $0x60] sm:$0xff] %v1409
          %1428 = vst [vmem:[#allocation2 + $0x68] sm:$0xff] %v1410
          %1429 = vst [vmem:[#allocation2 + $0x70] sm:$0xff] %v1411
          %1430 = vst [vmem:[#allocation2 + $0x78] sm:$0xff] %v1412
          %1431 = vst [vmem:[#allocation2 + $0x80] sm:$0xff] %v1413
          %1432 = vst [vmem:[#allocation2 + $0x88] sm:$0xff] %v1414
        $region64: #{tpu_custom_call.1} parent=39 // pred_fallthru
          _
        %p1433 = scmp.eq.s32.totalorder %s29, 1
        // Predicated region
        $region65: #{tpu_custom_call.1} parent=39 // pred_check
          %p1434 = pneg %p1433
        $region66: #{tpu_custom_call.1} parent=39 // pred_check_branch
          %1436 = sbr.rel (%p1434) target = $region68
        $region67: #{tpu_custom_call.1} parent=39 // pred_region
          %v1437 = vld [vmem:[#allocation2] sm:$0xff]
          %v1438 = vld [vmem:[#allocation2 + $0x8] sm:$0xff]
          %v1439 = vld [vmem:[#allocation2 + $0x10] sm:$0xff]
          %v1440 = vld [vmem:[#allocation2 + $0x18] sm:$0xff]
          %v1441 = vld [vmem:[#allocation2 + $0x20] sm:$0xff]
          %v1442 = vld [vmem:[#allocation2 + $0x28] sm:$0xff]
          %v1443 = vld [vmem:[#allocation2 + $0x30] sm:$0xff]
          %v1444 = vld [vmem:[#allocation2 + $0x38] sm:$0xff]
          %v1445 = vld [vmem:[#allocation2 + $0x40] sm:$0xff]
          %v1446 = vld [vmem:[#allocation2 + $0x48] sm:$0xff]
          %v1447 = vld [vmem:[#allocation2 + $0x50] sm:$0xff]
          %v1448 = vld [vmem:[#allocation2 + $0x58] sm:$0xff]
          %v1449 = vld [vmem:[#allocation2 + $0x60] sm:$0xff]
          %v1450 = vld [vmem:[#allocation2 + $0x68] sm:$0xff]
          %v1451 = vld [vmem:[#allocation2 + $0x70] sm:$0xff]
          %v1452 = vld [vmem:[#allocation2 + $0x78] sm:$0xff]
          %v1453 = vld [vmem:[#allocation2 + $0x80] sm:$0xff]
          %v1454 = vld [vmem:[#allocation2 + $0x88] sm:$0xff]
          %v1455 = vld [vmem:[%s4] sm:$0x1]
          %v1457 = vperm.slane %v1455, 0
          %v1459 = vadd.f32 %v1437, %v1457
          %v1460 = vadd.f32 %v1438, %v1457
          %v1461 = vadd.f32 %v1439, %v1457
          %v1462 = vadd.f32 %v1440, %v1457
          %v1463 = vadd.f32 %v1441, %v1457
          %v1464 = vadd.f32 %v1442, %v1457
          %v1465 = vadd.f32 %v1443, %v1457
          %v1466 = vadd.f32 %v1444, %v1457
          %v1467 = vadd.f32 %v1445, %v1457
          %v1468 = vadd.f32 %v1446, %v1457
          %v1469 = vadd.f32 %v1447, %v1457
          %v1470 = vadd.f32 %v1448, %v1457
          %v1471 = vadd.f32 %v1449, %v1457
          %v1472 = vadd.f32 %v1450, %v1457
          %v1473 = vadd.f32 %v1451, %v1457
          %v1474 = vadd.f32 %v1452, %v1457
          %v1475 = vadd.f32 %v1453, %v1457
          %v1476 = vadd.f32 %v1454, %v1457
          %1477 = vst [vmem:[#allocation11] sm:$0xff] %v1459
          %1478 = vst [vmem:[#allocation11 + $0x8] sm:$0xff] %v1460
          %1479 = vst [vmem:[#allocation11 + $0x10] sm:$0xff] %v1461
          %1480 = vst [vmem:[#allocation11 + $0x18] sm:$0xff] %v1462
          %1481 = vst [vmem:[#allocation11 + $0x20] sm:$0xff] %v1463
          %1482 = vst [vmem:[#allocation11 + $0x28] sm:$0xff] %v1464
          %1483 = vst [vmem:[#allocation11 + $0x30] sm:$0xff] %v1465
          %1484 = vst [vmem:[#allocation11 + $0x38] sm:$0xff] %v1466
          %1485 = vst [vmem:[#allocation11 + $0x40] sm:$0xff] %v1467
          %1486 = vst [vmem:[#allocation11 + $0x48] sm:$0xff] %v1468
          %1487 = vst [vmem:[#allocation11 + $0x50] sm:$0xff] %v1469
          %1488 = vst [vmem:[#allocation11 + $0x58] sm:$0xff] %v1470
          %1489 = vst [vmem:[#allocation11 + $0x60] sm:$0xff] %v1471
          %1490 = vst [vmem:[#allocation11 + $0x68] sm:$0xff] %v1472
          %1491 = vst [vmem:[#allocation11 + $0x70] sm:$0xff] %v1473
          %1492 = vst [vmem:[#allocation11 + $0x78] sm:$0xff] %v1474
          %1493 = vst [vmem:[#allocation11 + $0x80] sm:$0xff] %v1475
          %1494 = vst [vmem:[#allocation11 + $0x88] sm:$0xff] %v1476
        $region68: #{tpu_custom_call.1} parent=39 // pred_fallthru
          _
        // Predicated region
        $region69: #{tpu_custom_call.1} parent=39 // pred_check
          %p1495 = pneg %p269
        $region70: #{tpu_custom_call.1} parent=39 // pred_check_branch
          %1497 = sbr.rel (%p1495) target = $region72
        $region71: #{tpu_custom_call.1} parent=39 // pred_region
          %s1498 = smul.u32 18, %s28
          %1500 = vsyncadd [#allocation5], 0
          %s1501 = smul.addr %s1498, 8
          %s1502 = scalar_lea.hbm %s5, %s1501
          %s1503 = sshll.u32 [#allocation11], 4
          %s1504 = int_to_ptr.vmem [resolvable:$true] %s1503
          %s1505 = sshll.u32 %s1502, 4
          %s1506 = int_to_ptr.hbm [resolvable:$true] %s1505
          %1511 = dma.vmem_to_hbm [thread:$0]  %s1504, 2304, %s1506, [#allocation5], 128, 128, 8
        $region72: #{tpu_custom_call.1} parent=39 // pred_fallthru
          _
        // Predicated region
        $region73: #{tpu_custom_call.1} parent=39 // pred_check
          %p1512 = pneg %p269
        $region74: #{tpu_custom_call.1} parent=39 // pred_check_branch
          %1514 = sbr.rel (%p1512) target = $region76
        $region75: #{tpu_custom_call.1} parent=39 // pred_region
          %1516 = dma.done [#allocation5], 2304
        $region76: #{tpu_custom_call.1} parent=39 // pred_fallthru
          _
      $region40: #{tpu_custom_call.1} parent=5 // pred_fallthru
        _
      %p1517 = scmp.le.s32.totalorder 2, %s19
      // Predicated region
      $region77: #{tpu_custom_call.1} parent=5 // pred_check
        %p1518 = pneg %p1517
      $region78: #{tpu_custom_call.1} parent=5 // pred_check_branch
        %1520 = sbr.rel (%p1518) target = $region80
      $region79: #{tpu_custom_call.1} parent=5 // pred_region
        %s1521 = ssub.s32 %s19, 2
      $region80: #{tpu_custom_call.1} parent=5 // pred_fallthru
        _
    $region6: #{tpu_custom_call.1} parent=1 // loop_footer
      %s23 = sadd.s32 1, %s19
    $region7: #{tpu_custom_call.1} parent=1 // loop_footer_branch
      %18 = sbr.rel target = $region3
    $region8: #{tpu_custom_call.1} parent=1 // loop_exit
      _
    %1522 = vsyncpa [#allocation4], 1
    %s1523 = scalar_lea.sflag [#allocation4], 1
    %1524 = vsyncpa %s1523, 1
    %1525 = vsyncpa [#allocation7], 1
    %s1526 = scalar_lea.sflag [#allocation7], 1
    %1527 = vsyncpa %s1526, 1
    %1528 = vsyncpa [#allocation10], 1
    %s1529 = scalar_lea.sflag [#allocation10], 1
    %1530 = vsyncpa %s1529, 1
    %1531 = vsyncpa [#allocation5], 1
    %s1532 = scalar_lea.sflag [#allocation5], 1
    %1533 = vsyncpa %s1532, 1

</llo_original>
